<compile_context>
chip_gen: v5e
topology: v5e:2x2
jax: 0.10.0
libtpu: 0.0.40
codegen_flags: <defaults>
</compile_context>

<pallas_src>
import math
import functools

import jax
import jax.numpy as jnp
from jax.experimental import pallas as pl
from jax.experimental.pallas import tpu as pltpu


CFG = dict(vocab=50, max_pos=16, type_vocab=2, hidden=32, heads=4,
           intermediate=64, layers=2, main_classes=5, sub_classes=7)

HEAD_PAD = 128  # lane-dense padded width for the fused main/sub classification heads


# ----------------------------------------------------------------------------
# The fused Pallas kernel (embedding LN + full encoder + classification heads)
# ----------------------------------------------------------------------------

def _fused_bert_kernel(emb_ref, bias_ref, eg_ref, eb_ref,
                       wq_ref, bq_ref, wk_ref, bk_ref, wv_ref, bv_ref,
                       wo_ref, bo_ref, g1_ref, b1_ref,
                       wi_ref, bi_ref, wo2_ref, bo2_ref, g2_ref, b2_ref,
                       wh_ref, bh_ref, out_ref,
                       *, layers, heads, head_dim):
    f32 = jnp.float32
    bf16 = jnp.bfloat16
    scale = 1.0 / math.sqrt(head_dim)

    def layer_norm(h, g, b):
        # statistics in f32; BERT eps = 1e-12
        mean = jnp.mean(h, axis=-1, keepdims=True)
        var = jnp.mean(jnp.square(h - mean), axis=-1, keepdims=True)
        return (h - mean) * jax.lax.rsqrt(var + 1e-12) * g + b

    # Embedding LayerNorm (no fake zero residual).
    x = layer_norm(emb_ref[...], eg_ref[...], eb_ref[...])

    # Attention bias (block-diagonal batch mask + key padding), precomputed in
    # the wrapper and reused by every layer and head.
    att_bias = bias_ref[...]

    for l in range(layers):
        xb = x.astype(bf16)

        # ---- multi-head self-attention: heads looped in-kernel, rows (B*S)
        # ---- stay on the sublane axis, per-head result folded back into
        # ---- hidden through its slice of the output projection.
        attn = None
        for h in range(heads):
            idx = l * heads + h
            qh = jnp.dot(xb, wq_ref[idx], preferred_element_type=f32) + bq_ref[idx]
            kh = jnp.dot(xb, wk_ref[idx], preferred_element_type=f32) + bk_ref[idx]
            vh = jnp.dot(xb, wv_ref[idx], preferred_element_type=f32) + bv_ref[idx]

            s = jax.lax.dot_general(
                qh.astype(bf16), kh.astype(bf16),
                (((1,), (1,)), ((), ())),
                preferred_element_type=f32) * scale + att_bias
            s = s - jnp.max(s, axis=-1, keepdims=True)
            p = jnp.exp(s)
            p = p * pl.reciprocal(jnp.sum(p, axis=-1, keepdims=True), approx=True)

            ctx = jnp.dot(p.astype(bf16), vh.astype(bf16),
                          preferred_element_type=f32)
            part = jnp.dot(ctx.astype(bf16), wo_ref[idx],
                           preferred_element_type=f32)
            attn = part if attn is None else attn + part

        attn = attn + bo_ref[l]
        x = layer_norm(attn + x, g1_ref[l], b1_ref[l])

        # ---- feed-forward: the (M, intermediate) activation never leaves VMEM.
        # TODO(synk): HF BERT uses exact erf-GELU; tanh-approx GELU used for
        # guaranteed TPU lowering (difference ~1e-3).
        h1 = jnp.dot(x.astype(bf16), wi_ref[l], preferred_element_type=f32) + bi_ref[l]
        h1 = jax.nn.gelu(h1, approximate=True)
        h2 = jnp.dot(h1.astype(bf16), wo2_ref[l], preferred_element_type=f32) + bo2_ref[l]
        x = layer_norm(h2 + x, g2_ref[l], b2_ref[l])

    # ---- fused main/sub heads: one lane-dense (M, 128) padded matmul.
    # Computing logits for all tokens keeps the store unmasked & aligned; the
    # wrapper slices out the CLS rows / real class columns.
    out_ref[...] = (jnp.dot(x.astype(bf16), wh_ref[...],
                            preferred_element_type=f32) + bh_ref[...])


# ----------------------------------------------------------------------------
# Parameters (deterministic synthetic init — no checkpoint loading)
# ----------------------------------------------------------------------------

def _dense(key, din, dout):
    w = jax.random.normal(key, (din, dout), jnp.float32) * 0.02
    b = jnp.zeros((1, dout), jnp.float32)
    return w, b


def init_params(key, cfg):
    H, I = cfg["hidden"], cfg["intermediate"]
    keys = iter(jax.random.split(key, 64))
    p = {}
    p["word_emb"] = jax.random.normal(next(keys), (cfg["vocab"], H), jnp.float32) * 0.02
    p["pos_emb"] = jax.random.normal(next(keys), (cfg["max_pos"], H), jnp.float32) * 0.02
    p["type_emb"] = jax.random.normal(next(keys), (cfg["type_vocab"], H), jnp.float32) * 0.02
    p["emb_ln_g"] = jnp.ones((1, H), jnp.float32)
    p["emb_ln_b"] = jnp.zeros((1, H), jnp.float32)

    layers = []
    for _ in range(cfg["layers"]):
        lyr = {}
        lyr["wq"], lyr["bq"] = _dense(next(keys), H, H)
        lyr["wk"], lyr["bk"] = _dense(next(keys), H, H)
        lyr["wv"], lyr["bv"] = _dense(next(keys), H, H)
        lyr["wo"], lyr["bo"] = _dense(next(keys), H, H)
        lyr["ln1_g"] = jnp.ones((1, H), jnp.float32)
        lyr["ln1_b"] = jnp.zeros((1, H), jnp.float32)
        lyr["wi"], lyr["bi"] = _dense(next(keys), H, I)
        lyr["wo2"], lyr["bo2"] = _dense(next(keys), I, H)
        lyr["ln2_g"] = jnp.ones((1, H), jnp.float32)
        lyr["ln2_b"] = jnp.zeros((1, H), jnp.float32)
        layers.append(lyr)
    p["layers"] = layers

    p["main_w"], p["main_b"] = _dense(next(keys), H, cfg["main_classes"])
    p["sub_w"], p["sub_b"] = _dense(next(keys), H, cfg["sub_classes"])
    return p


# ----------------------------------------------------------------------------
# Re-layout params into stacked per-head bf16 operands for the fused kernel
# ----------------------------------------------------------------------------

def _pack_params(params, cfg):
    H, I = cfg["hidden"], cfg["intermediate"]
    nh = cfg["heads"]
    dh = H // nh
    bf16, f32 = jnp.bfloat16, jnp.float32
    L = params["layers"]

    def heads_cols(w):       # (H, H) -> (nh, H, dh): head h = output cols h*dh:(h+1)*dh
        return w.reshape(H, nh, dh).transpose(1, 0, 2)

    def heads_cols_b(b):     # (1, H) -> (nh, 1, dh)
        return b.reshape(1, nh, dh).transpose(1, 0, 2)

    def heads_rows(w):       # (H, H) -> (nh, dh, H): head h = input rows h*dh:(h+1)*dh
        return w.reshape(nh, dh, H)

    cat = lambda xs: jnp.concatenate(xs, axis=0)
    stk = lambda xs: jnp.stack(xs, axis=0)

    wq = cat([heads_cols(l["wq"]) for l in L]).astype(bf16)       # (L*nh, H, dh)
    bq = cat([heads_cols_b(l["bq"]) for l in L]).astype(f32)      # (L*nh, 1, dh)
    wk = cat([heads_cols(l["wk"]) for l in L]).astype(bf16)
    bk = cat([heads_cols_b(l["bk"]) for l in L]).astype(f32)
    wv = cat([heads_cols(l["wv"]) for l in L]).astype(bf16)
    bv = cat([heads_cols_b(l["bv"]) for l in L]).astype(f32)
    wo = cat([heads_rows(l["wo"]) for l in L]).astype(bf16)       # (L*nh, dh, H)
    bo = stk([l["bo"] for l in L]).astype(f32)                    # (Lyr, 1, H)
    g1 = stk([l["ln1_g"] for l in L]).astype(f32)
    b1 = stk([l["ln1_b"] for l in L]).astype(f32)
    wi = stk([l["wi"] for l in L]).astype(bf16)                   # (Lyr, H, I)
    bi = stk([l["bi"] for l in L]).astype(f32)
    wo2 = stk([l["wo2"] for l in L]).astype(bf16)                 # (Lyr, I, H)
    bo2 = stk([l["bo2"] for l in L]).astype(f32)
    g2 = stk([l["ln2_g"] for l in L]).astype(f32)
    b2 = stk([l["ln2_b"] for l in L]).astype(f32)

    mc, sc = cfg["main_classes"], cfg["sub_classes"]
    wh = jnp.zeros((H, HEAD_PAD), f32)
    wh = wh.at[:, :mc].set(params["main_w"]).at[:, mc:mc + sc].set(params["sub_w"])
    bh = jnp.zeros((1, HEAD_PAD), f32)
    bh = bh.at[:, :mc].set(params["main_b"]).at[:, mc:mc + sc].set(params["sub_b"])

    return (wq, bq, wk, bk, wv, bv, wo.astype(bf16), bo, g1, b1,
            wi, bi, wo2, bo2, g2, b2, wh.astype(bf16), bh)


# ----------------------------------------------------------------------------
# Forward pass (mirrors HierarchicalBERT.forward)
# ----------------------------------------------------------------------------

def hierarchical_bert_forward(params, input_ids, attention_mask, cfg=CFG):
    B, S = input_ids.shape
    H = cfg["hidden"]
    nh = cfg["heads"]
    dh = H // nh
    L = cfg["layers"]
    M = B * S
    mc, sc = cfg["main_classes"], cfg["sub_classes"]

    # --- embeddings (gather is plain-JAX glue; everything after is in-kernel).
    # token_type_ids implicitly all zeros (matches the PyTorch default).
    emb = (jnp.take(params["word_emb"], input_ids, axis=0)
           + params["pos_emb"][None, :S, :]
           + params["type_emb"][0][None, None, :]).reshape(M, H).astype(jnp.float32)

    # --- attention bias: block-diagonal batch mask + key padding, hoisted once.
    # NOTE: fully-padded query rows just get a uniform in-batch softmax (never
    # NaN); their context is discarded anyway since only CLS rows are consumed.
    row_batch = jnp.arange(M, dtype=jnp.int32) // S
    same_batch = row_batch[:, None] == row_batch[None, :]
    key_keep = attention_mask.reshape(M) > 0
    att_bias = jnp.where(same_batch & key_keep[None, :], 0.0, -1e9).astype(jnp.float32)

    ops = _pack_params(params, cfg)

    kern = functools.partial(_fused_bert_kernel, layers=L, heads=nh, head_dim=dh)
    n_in = 4 + len(ops)
    token_logits = pl.pallas_call(
        kern,
        out_shape=jax.ShapeDtypeStruct((M, HEAD_PAD), jnp.float32),
        in_specs=[pl.BlockSpec(memory_space=pltpu.MemorySpace.VMEM)] * n_in,
        out_specs=pl.BlockSpec(memory_space=pltpu.MemorySpace.VMEM),
        compiler_params=pltpu.CompilerParams(vmem_limit_bytes=32 * 1024 * 1024),
    )(emb, att_bias, params["emb_ln_g"], params["emb_ln_b"], *ops)

    cls_logits = token_logits.reshape(B, S, HEAD_PAD)[:, 0, :]
    return {"main_logits": cls_logits[:, :mc],
            "sub_logits": cls_logits[:, mc:mc + sc]}


# ----------------------------------------------------------------------------
# Pure-JAX reference (f32) for a correctness sanity check
# ----------------------------------------------------------------------------

def _reference_forward(params, input_ids, attention_mask, cfg=CFG):
    B, S = input_ids.shape
    H = cfg["hidden"]
    nh = cfg["heads"]
    dh = H // nh
    hi = jax.lax.Precision.HIGHEST
    mask_f = attention_mask.astype(jnp.float32)

    def ln(h, g, b):
        mean = jnp.mean(h, -1, keepdims=True)
        var = jnp.mean((h - mean) ** 2, -1, keepdims=True)
        return (h - mean) * jax.lax.rsqrt(var + 1e-12) * g + b

    emb = (jnp.take(params["word_emb"], input_ids, axis=0)
           + params["pos_emb"][None, :S, :]
           + params["type_emb"][0][None, None, :])
    x = ln(emb.reshape(B * S, H), params["emb_ln_g"], params["emb_ln_b"])
    bias = (1.0 - mask_f)[:, None, None, :] * -1e9

    for lyr in params["layers"]:
        def proj(w, b):
            return (jnp.dot(x, w, precision=hi) + b).reshape(B, S, nh, dh).transpose(0, 2, 1, 3)
        q, k, v = proj(lyr["wq"], lyr["bq"]), proj(lyr["wk"], lyr["bk"]), proj(lyr["wv"], lyr["bv"])
        s = jnp.einsum("bhqd,bhkd->bhqk", q, k, precision=hi) / math.sqrt(dh) + bias
        p = jax.nn.softmax(s, axis=-1)
        ctx = jnp.einsum("bhqk,bhkd->bhqd", p, v, precision=hi)
        ctx = ctx.transpose(0, 2, 1, 3).reshape(B * S, H)
        x = ln(jnp.dot(ctx, lyr["wo"], precision=hi) + lyr["bo"] + x, lyr["ln1_g"], lyr["ln1_b"])
        h1 = jax.nn.gelu(jnp.dot(x, lyr["wi"], precision=hi) + lyr["bi"], approximate=True)
        h2 = jnp.dot(h1, lyr["wo2"], precision=hi) + lyr["bo2"]
        x = ln(h2 + x, lyr["ln2_g"], lyr["ln2_b"])

    cls = x.reshape(B, S, H)[:, 0, :]
    return {"main_logits": jnp.dot(cls, params["main_w"], precision=hi) + params["main_b"],
            "sub_logits": jnp.dot(cls, params["sub_w"], precision=hi) + params["sub_b"]}


# ----------------------------------------------------------------------------
# Driver
# ----------------------------------------------------------------------------

if __name__ == "__main__":
    key = jax.random.PRNGKey(0)
    pkey, dkey = jax.random.split(key)

    params = init_params(pkey, CFG)

    B, S = 2, 8
    input_ids = jax.random.randint(dkey, (B, S), 0, CFG["vocab"], dtype=jnp.int32)
    attention_mask = jnp.ones((B, S), jnp.int32).at[1, 6:].set(0)

    out = jax.jit(hierarchical_bert_forward)(params, input_ids, attention_mask)
    jax.block_until_ready(out)

    assert out["main_logits"].shape == (B, CFG["main_classes"])
    assert out["sub_logits"].shape == (B, CFG["sub_classes"])
    assert bool(jnp.all(jnp.isfinite(out["main_logits"])))
    assert bool(jnp.all(jnp.isfinite(out["sub_logits"])))

    ref = _reference_forward(params, input_ids, attention_mask)
    assert bool(jnp.allclose(out["main_logits"], ref["main_logits"], atol=5e-2, rtol=5e-2))
    assert bool(jnp.allclose(out["sub_logits"], ref["sub_logits"], atol=5e-2, rtol=5e-2))

    print("KERNEL_OK")
</pallas_src>

<mosaic_0001>
module attributes {stable_mosaic.version = 11 : i64} {
  func.func @_fused_bert_kernel(%arg0: memref<16x32xf32, #tpu.memory_space<vmem>>, %arg1: memref<16x16xf32, #tpu.memory_space<vmem>>, %arg2: memref<1x32xf32, #tpu.memory_space<vmem>>, %arg3: memref<1x32xf32, #tpu.memory_space<vmem>>, %arg4: memref<8x32x8xbf16, #tpu.memory_space<vmem>>, %arg5: memref<8x1x8xf32, #tpu.memory_space<vmem>>, %arg6: memref<8x32x8xbf16, #tpu.memory_space<vmem>>, %arg7: memref<8x1x8xf32, #tpu.memory_space<vmem>>, %arg8: memref<8x32x8xbf16, #tpu.memory_space<vmem>>, %arg9: memref<8x1x8xf32, #tpu.memory_space<vmem>>, %arg10: memref<8x8x32xbf16, #tpu.memory_space<vmem>>, %arg11: memref<2x1x32xf32, #tpu.memory_space<vmem>>, %arg12: memref<2x1x32xf32, #tpu.memory_space<vmem>>, %arg13: memref<2x1x32xf32, #tpu.memory_space<vmem>>, %arg14: memref<2x32x64xbf16, #tpu.memory_space<vmem>>, %arg15: memref<2x1x64xf32, #tpu.memory_space<vmem>>, %arg16: memref<2x64x32xbf16, #tpu.memory_space<vmem>>, %arg17: memref<2x1x32xf32, #tpu.memory_space<vmem>>, %arg18: memref<2x1x32xf32, #tpu.memory_space<vmem>>, %arg19: memref<2x1x32xf32, #tpu.memory_space<vmem>>, %arg20: memref<32x128xbf16, #tpu.memory_space<vmem>>, %arg21: memref<1x128xf32, #tpu.memory_space<vmem>>, %arg22: memref<16x128xf32, #tpu.memory_space<vmem>>) attributes {dimension_semantics = [], scalar_prefetch = 0 : i64, scratch_operands = 0 : i64, tpu.core_type = #tpu.core_type<tc>} {
    %c0 = arith.constant 0 : index
    %c0_0 = arith.constant 0 : index
    %0 = vector.load %arg0[%c0, %c0_0] : memref<16x32xf32, #tpu.memory_space<vmem>>, vector<16x32xf32>
    %c0_1 = arith.constant 0 : index
    %c0_2 = arith.constant 0 : index
    %1 = vector.load %arg2[%c0_1, %c0_2] : memref<1x32xf32, #tpu.memory_space<vmem>>, vector<1x32xf32>
    %c0_3 = arith.constant 0 : index
    %c0_4 = arith.constant 0 : index
    %2 = vector.load %arg3[%c0_3, %c0_4] : memref<1x32xf32, #tpu.memory_space<vmem>>, vector<1x32xf32>
    %cst = arith.constant dense<0.000000e+00> : vector<16xf32>
    %3 = vector.multi_reduction <add>, %0, %cst [1] : vector<16x32xf32> to vector<16xf32>
    %4 = vector.shape_cast %3 : vector<16xf32> to vector<16x1xf32>
    %cst_5 = arith.constant 3.200000e+01 : f32
    %5 = vector.broadcast %cst_5 : f32 to vector<16x1xf32>
    %6 = arith.divf %4, %5 : vector<16x1xf32>
    %7 = vector.broadcast %6 : vector<16x1xf32> to vector<16x32xf32>
    %8 = arith.subf %0, %7 : vector<16x32xf32>
    %9 = arith.mulf %8, %8 : vector<16x32xf32>
    %cst_6 = arith.constant dense<0.000000e+00> : vector<16xf32>
    %10 = vector.multi_reduction <add>, %9, %cst_6 [1] : vector<16x32xf32> to vector<16xf32>
    %11 = vector.shape_cast %10 : vector<16xf32> to vector<16x1xf32>
    %cst_7 = arith.constant 3.200000e+01 : f32
    %12 = vector.broadcast %cst_7 : f32 to vector<16x1xf32>
    %13 = arith.divf %11, %12 : vector<16x1xf32>
    %14 = vector.broadcast %6 : vector<16x1xf32> to vector<16x32xf32>
    %15 = arith.subf %0, %14 : vector<16x32xf32>
    %cst_8 = arith.constant 9.99999996E-13 : f32
    %16 = vector.broadcast %cst_8 : f32 to vector<16x1xf32>
    %17 = arith.addf %13, %16 : vector<16x1xf32>
    %18 = math.rsqrt %17 : vector<16x1xf32>
    %19 = vector.broadcast %18 : vector<16x1xf32> to vector<16x32xf32>
    %20 = arith.mulf %15, %19 : vector<16x32xf32>
    %21 = vector.broadcast %1 : vector<1x32xf32> to vector<16x32xf32>
    %22 = arith.mulf %20, %21 : vector<16x32xf32>
    %23 = vector.broadcast %2 : vector<1x32xf32> to vector<16x32xf32>
    %24 = arith.addf %22, %23 : vector<16x32xf32>
    %c0_9 = arith.constant 0 : index
    %c0_10 = arith.constant 0 : index
    %25 = vector.load %arg1[%c0_9, %c0_10] : memref<16x16xf32, #tpu.memory_space<vmem>>, vector<16x16xf32>
    %26 = arith.truncf %24 : vector<16x32xf32> to vector<16x32xbf16>
    %c0_11 = arith.constant 0 : index
    %c0_12 = arith.constant 0 : index
    %c0_13 = arith.constant 0 : index
    %27 = vector.load %arg4[%c0_11, %c0_12, %c0_13] : memref<8x32x8xbf16, #tpu.memory_space<vmem>>, vector<1x32x8xbf16>
    %28 = vector.shape_cast %27 : vector<1x32x8xbf16> to vector<32x8xbf16>
    %cst_14 = arith.constant dense<0.000000e+00> : vector<16x8xf32>
    %29 = tpu.matmul %26, %28, %cst_14 {dimension_numbers = #tpu.dot_dimension_numbers<[1], [0], [0], [1], [0, 0, 1, 1], [], []>} : vector<16x32xbf16>, vector<32x8xbf16>, vector<16x8xf32> -> vector<16x8xf32>
    %c0_15 = arith.constant 0 : index
    %c0_16 = arith.constant 0 : index
    %c0_17 = arith.constant 0 : index
    %30 = vector.load %arg5[%c0_15, %c0_16, %c0_17] : memref<8x1x8xf32, #tpu.memory_space<vmem>>, vector<1x1x8xf32>
    %31 = vector.shape_cast %30 : vector<1x1x8xf32> to vector<1x8xf32>
    %32 = vector.broadcast %31 : vector<1x8xf32> to vector<16x8xf32>
    %33 = arith.addf %29, %32 : vector<16x8xf32>
    %c0_18 = arith.constant 0 : index
    %c0_19 = arith.constant 0 : index
    %c0_20 = arith.constant 0 : index
    %34 = vector.load %arg6[%c0_18, %c0_19, %c0_20] : memref<8x32x8xbf16, #tpu.memory_space<vmem>>, vector<1x32x8xbf16>
    %35 = vector.shape_cast %34 : vector<1x32x8xbf16> to vector<32x8xbf16>
    %cst_21 = arith.constant dense<0.000000e+00> : vector<16x8xf32>
    %36 = tpu.matmul %26, %35, %cst_21 {dimension_numbers = #tpu.dot_dimension_numbers<[1], [0], [0], [1], [0, 0, 1, 1], [], []>} : vector<16x32xbf16>, vector<32x8xbf16>, vector<16x8xf32> -> vector<16x8xf32>
    %c0_22 = arith.constant 0 : index
    %c0_23 = arith.constant 0 : index
    %c0_24 = arith.constant 0 : index
    %37 = vector.load %arg7[%c0_22, %c0_23, %c0_24] : memref<8x1x8xf32, #tpu.memory_space<vmem>>, vector<1x1x8xf32>
    %38 = vector.shape_cast %37 : vector<1x1x8xf32> to vector<1x8xf32>
    %39 = vector.broadcast %38 : vector<1x8xf32> to vector<16x8xf32>
    %40 = arith.addf %36, %39 : vector<16x8xf32>
    %c0_25 = arith.constant 0 : index
    %c0_26 = arith.constant 0 : index
    %c0_27 = arith.constant 0 : index
    %41 = vector.load %arg8[%c0_25, %c0_26, %c0_27] : memref<8x32x8xbf16, #tpu.memory_space<vmem>>, vector<1x32x8xbf16>
    %42 = vector.shape_cast %41 : vector<1x32x8xbf16> to vector<32x8xbf16>
    %cst_28 = arith.constant dense<0.000000e+00> : vector<16x8xf32>
    %43 = tpu.matmul %26, %42, %cst_28 {dimension_numbers = #tpu.dot_dimension_numbers<[1], [0], [0], [1], [0, 0, 1, 1], [], []>} : vector<16x32xbf16>, vector<32x8xbf16>, vector<16x8xf32> -> vector<16x8xf32>
    %c0_29 = arith.constant 0 : index
    %c0_30 = arith.constant 0 : index
    %c0_31 = arith.constant 0 : index
    %44 = vector.load %arg9[%c0_29, %c0_30, %c0_31] : memref<8x1x8xf32, #tpu.memory_space<vmem>>, vector<1x1x8xf32>
    %45 = vector.shape_cast %44 : vector<1x1x8xf32> to vector<1x8xf32>
    %46 = vector.broadcast %45 : vector<1x8xf32> to vector<16x8xf32>
    %47 = arith.addf %43, %46 : vector<16x8xf32>
    %48 = arith.truncf %33 : vector<16x8xf32> to vector<16x8xbf16>
    %49 = arith.truncf %40 : vector<16x8xf32> to vector<16x8xbf16>
    %cst_32 = arith.constant dense<0.000000e+00> : vector<16x16xf32>
    %50 = tpu.matmul %48, %49, %cst_32 {dimension_numbers = #tpu.dot_dimension_numbers<[1], [1], [0], [0], [0, 0, 1, 0], [], []>} : vector<16x8xbf16>, vector<16x8xbf16>, vector<16x16xf32> -> vector<16x16xf32>
    %cst_33 = arith.constant 0.353553385 : f32
    %51 = vector.broadcast %cst_33 : f32 to vector<16x16xf32>
    %52 = arith.mulf %50, %51 : vector<16x16xf32>
    %53 = arith.addf %52, %25 : vector<16x16xf32>
    %cst_34 = arith.constant dense<0xFF800000> : vector<16xf32>
    %54 = vector.multi_reduction <maximumf>, %53, %cst_34 [1] : vector<16x16xf32> to vector<16xf32>
    %55 = vector.shape_cast %54 : vector<16xf32> to vector<16x1xf32>
    %56 = vector.broadcast %55 : vector<16x1xf32> to vector<16x16xf32>
    %57 = arith.subf %53, %56 : vector<16x16xf32>
    %58 = math.exp %57 : vector<16x16xf32>
    %cst_35 = arith.constant dense<0.000000e+00> : vector<16xf32>
    %59 = vector.multi_reduction <add>, %58, %cst_35 [1] : vector<16x16xf32> to vector<16xf32>
    %60 = vector.shape_cast %59 : vector<16xf32> to vector<16x1xf32>
    %61 = tpu.reciprocal %60 {approx = true} : vector<16x1xf32> -> vector<16x1xf32>
    %62 = vector.broadcast %61 : vector<16x1xf32> to vector<16x16xf32>
    %63 = arith.mulf %58, %62 : vector<16x16xf32>
    %64 = arith.truncf %63 : vector<16x16xf32> to vector<16x16xbf16>
    %65 = arith.truncf %47 : vector<16x8xf32> to vector<16x8xbf16>
    %cst_36 = arith.constant dense<0.000000e+00> : vector<16x8xf32>
    %66 = tpu.matmul %64, %65, %cst_36 {dimension_numbers = #tpu.dot_dimension_numbers<[1], [0], [0], [1], [0, 0, 1, 1], [], []>} : vector<16x16xbf16>, vector<16x8xbf16>, vector<16x8xf32> -> vector<16x8xf32>
    %67 = arith.truncf %66 : vector<16x8xf32> to vector<16x8xbf16>
    %c0_37 = arith.constant 0 : index
    %c0_38 = arith.constant 0 : index
    %c0_39 = arith.constant 0 : index
    %68 = vector.load %arg10[%c0_37, %c0_38, %c0_39] : memref<8x8x32xbf16, #tpu.memory_space<vmem>>, vector<1x8x32xbf16>
    %69 = vector.shape_cast %68 : vector<1x8x32xbf16> to vector<8x32xbf16>
    %cst_40 = arith.constant dense<0.000000e+00> : vector<16x32xf32>
    %70 = tpu.matmul %67, %69, %cst_40 {dimension_numbers = #tpu.dot_dimension_numbers<[1], [0], [0], [1], [0, 0, 1, 1], [], []>} : vector<16x8xbf16>, vector<8x32xbf16>, vector<16x32xf32> -> vector<16x32xf32>
    %c1 = arith.constant 1 : index
    %c0_41 = arith.constant 0 : index
    %c0_42 = arith.constant 0 : index
    %71 = vector.load %arg4[%c1, %c0_41, %c0_42] : memref<8x32x8xbf16, #tpu.memory_space<vmem>>, vector<1x32x8xbf16>
    %72 = vector.shape_cast %71 : vector<1x32x8xbf16> to vector<32x8xbf16>
    %cst_43 = arith.constant dense<0.000000e+00> : vector<16x8xf32>
    %73 = tpu.matmul %26, %72, %cst_43 {dimension_numbers = #tpu.dot_dimension_numbers<[1], [0], [0], [1], [0, 0, 1, 1], [], []>} : vector<16x32xbf16>, vector<32x8xbf16>, vector<16x8xf32> -> vector<16x8xf32>
    %c1_44 = arith.constant 1 : index
    %c0_45 = arith.constant 0 : index
    %c0_46 = arith.constant 0 : index
    %74 = vector.load %arg5[%c1_44, %c0_45, %c0_46] : memref<8x1x8xf32, #tpu.memory_space<vmem>>, vector<1x1x8xf32>
    %75 = vector.shape_cast %74 : vector<1x1x8xf32> to vector<1x8xf32>
    %76 = vector.broadcast %75 : vector<1x8xf32> to vector<16x8xf32>
    %77 = arith.addf %73, %76 : vector<16x8xf32>
    %c1_47 = arith.constant 1 : index
    %c0_48 = arith.constant 0 : index
    %c0_49 = arith.constant 0 : index
    %78 = vector.load %arg6[%c1_47, %c0_48, %c0_49] : memref<8x32x8xbf16, #tpu.memory_space<vmem>>, vector<1x32x8xbf16>
    %79 = vector.shape_cast %78 : vector<1x32x8xbf16> to vector<32x8xbf16>
    %cst_50 = arith.constant dense<0.000000e+00> : vector<16x8xf32>
    %80 = tpu.matmul %26, %79, %cst_50 {dimension_numbers = #tpu.dot_dimension_numbers<[1], [0], [0], [1], [0, 0, 1, 1], [], []>} : vector<16x32xbf16>, vector<32x8xbf16>, vector<16x8xf32> -> vector<16x8xf32>
    %c1_51 = arith.constant 1 : index
    %c0_52 = arith.constant 0 : index
    %c0_53 = arith.constant 0 : index
    %81 = vector.load %arg7[%c1_51, %c0_52, %c0_53] : memref<8x1x8xf32, #tpu.memory_space<vmem>>, vector<1x1x8xf32>
    %82 = vector.shape_cast %81 : vector<1x1x8xf32> to vector<1x8xf32>
    %83 = vector.broadcast %82 : vector<1x8xf32> to vector<16x8xf32>
    %84 = arith.addf %80, %83 : vector<16x8xf32>
    %c1_54 = arith.constant 1 : index
    %c0_55 = arith.constant 0 : index
    %c0_56 = arith.constant 0 : index
    %85 = vector.load %arg8[%c1_54, %c0_55, %c0_56] : memref<8x32x8xbf16, #tpu.memory_space<vmem>>, vector<1x32x8xbf16>
    %86 = vector.shape_cast %85 : vector<1x32x8xbf16> to vector<32x8xbf16>
    %cst_57 = arith.constant dense<0.000000e+00> : vector<16x8xf32>
    %87 = tpu.matmul %26, %86, %cst_57 {dimension_numbers = #tpu.dot_dimension_numbers<[1], [0], [0], [1], [0, 0, 1, 1], [], []>} : vector<16x32xbf16>, vector<32x8xbf16>, vector<16x8xf32> -> vector<16x8xf32>
    %c1_58 = arith.constant 1 : index
    %c0_59 = arith.constant 0 : index
    %c0_60 = arith.constant 0 : index
    %88 = vector.load %arg9[%c1_58, %c0_59, %c0_60] : memref<8x1x8xf32, #tpu.memory_space<vmem>>, vector<1x1x8xf32>
    %89 = vector.shape_cast %88 : vector<1x1x8xf32> to vector<1x8xf32>
    %90 = vector.broadcast %89 : vector<1x8xf32> to vector<16x8xf32>
    %91 = arith.addf %87, %90 : vector<16x8xf32>
    %92 = arith.truncf %77 : vector<16x8xf32> to vector<16x8xbf16>
    %93 = arith.truncf %84 : vector<16x8xf32> to vector<16x8xbf16>
    %cst_61 = arith.constant dense<0.000000e+00> : vector<16x16xf32>
    %94 = tpu.matmul %92, %93, %cst_61 {dimension_numbers = #tpu.dot_dimension_numbers<[1], [1], [0], [0], [0, 0, 1, 0], [], []>} : vector<16x8xbf16>, vector<16x8xbf16>, vector<16x16xf32> -> vector<16x16xf32>
    %cst_62 = arith.constant 0.353553385 : f32
    %95 = vector.broadcast %cst_62 : f32 to vector<16x16xf32>
    %96 = arith.mulf %94, %95 : vector<16x16xf32>
    %97 = arith.addf %96, %25 : vector<16x16xf32>
    %cst_63 = arith.constant dense<0xFF800000> : vector<16xf32>
    %98 = vector.multi_reduction <maximumf>, %97, %cst_63 [1] : vector<16x16xf32> to vector<16xf32>
    %99 = vector.shape_cast %98 : vector<16xf32> to vector<16x1xf32>
    %100 = vector.broadcast %99 : vector<16x1xf32> to vector<16x16xf32>
    %101 = arith.subf %97, %100 : vector<16x16xf32>
    %102 = math.exp %101 : vector<16x16xf32>
    %cst_64 = arith.constant dense<0.000000e+00> : vector<16xf32>
    %103 = vector.multi_reduction <add>, %102, %cst_64 [1] : vector<16x16xf32> to vector<16xf32>
    %104 = vector.shape_cast %103 : vector<16xf32> to vector<16x1xf32>
    %105 = tpu.reciprocal %104 {approx = true} : vector<16x1xf32> -> vector<16x1xf32>
    %106 = vector.broadcast %105 : vector<16x1xf32> to vector<16x16xf32>
    %107 = arith.mulf %102, %106 : vector<16x16xf32>
    %108 = arith.truncf %107 : vector<16x16xf32> to vector<16x16xbf16>
    %109 = arith.truncf %91 : vector<16x8xf32> to vector<16x8xbf16>
    %cst_65 = arith.constant dense<0.000000e+00> : vector<16x8xf32>
    %110 = tpu.matmul %108, %109, %cst_65 {dimension_numbers = #tpu.dot_dimension_numbers<[1], [0], [0], [1], [0, 0, 1, 1], [], []>} : vector<16x16xbf16>, vector<16x8xbf16>, vector<16x8xf32> -> vector<16x8xf32>
    %111 = arith.truncf %110 : vector<16x8xf32> to vector<16x8xbf16>
    %c1_66 = arith.constant 1 : index
    %c0_67 = arith.constant 0 : index
    %c0_68 = arith.constant 0 : index
    %112 = vector.load %arg10[%c1_66, %c0_67, %c0_68] : memref<8x8x32xbf16, #tpu.memory_space<vmem>>, vector<1x8x32xbf16>
    %113 = vector.shape_cast %112 : vector<1x8x32xbf16> to vector<8x32xbf16>
    %cst_69 = arith.constant dense<0.000000e+00> : vector<16x32xf32>
    %114 = tpu.matmul %111, %113, %cst_69 {dimension_numbers = #tpu.dot_dimension_numbers<[1], [0], [0], [1], [0, 0, 1, 1], [], []>} : vector<16x8xbf16>, vector<8x32xbf16>, vector<16x32xf32> -> vector<16x32xf32>
    %115 = arith.addf %70, %114 : vector<16x32xf32>
    %c2 = arith.constant 2 : index
    %c0_70 = arith.constant 0 : index
    %c0_71 = arith.constant 0 : index
    %116 = vector.load %arg4[%c2, %c0_70, %c0_71] : memref<8x32x8xbf16, #tpu.memory_space<vmem>>, vector<1x32x8xbf16>
    %117 = vector.shape_cast %116 : vector<1x32x8xbf16> to vector<32x8xbf16>
    %cst_72 = arith.constant dense<0.000000e+00> : vector<16x8xf32>
    %118 = tpu.matmul %26, %117, %cst_72 {dimension_numbers = #tpu.dot_dimension_numbers<[1], [0], [0], [1], [0, 0, 1, 1], [], []>} : vector<16x32xbf16>, vector<32x8xbf16>, vector<16x8xf32> -> vector<16x8xf32>
    %c2_73 = arith.constant 2 : index
    %c0_74 = arith.constant 0 : index
    %c0_75 = arith.constant 0 : index
    %119 = vector.load %arg5[%c2_73, %c0_74, %c0_75] : memref<8x1x8xf32, #tpu.memory_space<vmem>>, vector<1x1x8xf32>
    %120 = vector.shape_cast %119 : vector<1x1x8xf32> to vector<1x8xf32>
    %121 = vector.broadcast %120 : vector<1x8xf32> to vector<16x8xf32>
    %122 = arith.addf %118, %121 : vector<16x8xf32>
    %c2_76 = arith.constant 2 : index
    %c0_77 = arith.constant 0 : index
    %c0_78 = arith.constant 0 : index
    %123 = vector.load %arg6[%c2_76, %c0_77, %c0_78] : memref<8x32x8xbf16, #tpu.memory_space<vmem>>, vector<1x32x8xbf16>
    %124 = vector.shape_cast %123 : vector<1x32x8xbf16> to vector<32x8xbf16>
    %cst_79 = arith.constant dense<0.000000e+00> : vector<16x8xf32>
    %125 = tpu.matmul %26, %124, %cst_79 {dimension_numbers = #tpu.dot_dimension_numbers<[1], [0], [0], [1], [0, 0, 1, 1], [], []>} : vector<16x32xbf16>, vector<32x8xbf16>, vector<16x8xf32> -> vector<16x8xf32>
    %c2_80 = arith.constant 2 : index
    %c0_81 = arith.constant 0 : index
    %c0_82 = arith.constant 0 : index
    %126 = vector.load %arg7[%c2_80, %c0_81, %c0_82] : memref<8x1x8xf32, #tpu.memory_space<vmem>>, vector<1x1x8xf32>
    %127 = vector.shape_cast %126 : vector<1x1x8xf32> to vector<1x8xf32>
    %128 = vector.broadcast %127 : vector<1x8xf32> to vector<16x8xf32>
    %129 = arith.addf %125, %128 : vector<16x8xf32>
    %c2_83 = arith.constant 2 : index
    %c0_84 = arith.constant 0 : index
    %c0_85 = arith.constant 0 : index
    %130 = vector.load %arg8[%c2_83, %c0_84, %c0_85] : memref<8x32x8xbf16, #tpu.memory_space<vmem>>, vector<1x32x8xbf16>
    %131 = vector.shape_cast %130 : vector<1x32x8xbf16> to vector<32x8xbf16>
    %cst_86 = arith.constant dense<0.000000e+00> : vector<16x8xf32>
    %132 = tpu.matmul %26, %131, %cst_86 {dimension_numbers = #tpu.dot_dimension_numbers<[1], [0], [0], [1], [0, 0, 1, 1], [], []>} : vector<16x32xbf16>, vector<32x8xbf16>, vector<16x8xf32> -> vector<16x8xf32>
    %c2_87 = arith.constant 2 : index
    %c0_88 = arith.constant 0 : index
    %c0_89 = arith.constant 0 : index
    %133 = vector.load %arg9[%c2_87, %c0_88, %c0_89] : memref<8x1x8xf32, #tpu.memory_space<vmem>>, vector<1x1x8xf32>
    %134 = vector.shape_cast %133 : vector<1x1x8xf32> to vector<1x8xf32>
    %135 = vector.broadcast %134 : vector<1x8xf32> to vector<16x8xf32>
    %136 = arith.addf %132, %135 : vector<16x8xf32>
    %137 = arith.truncf %122 : vector<16x8xf32> to vector<16x8xbf16>
    %138 = arith.truncf %129 : vector<16x8xf32> to vector<16x8xbf16>
    %cst_90 = arith.constant dense<0.000000e+00> : vector<16x16xf32>
    %139 = tpu.matmul %137, %138, %cst_90 {dimension_numbers = #tpu.dot_dimension_numbers<[1], [1], [0], [0], [0, 0, 1, 0], [], []>} : vector<16x8xbf16>, vector<16x8xbf16>, vector<16x16xf32> -> vector<16x16xf32>
    %cst_91 = arith.constant 0.353553385 : f32
    %140 = vector.broadcast %cst_91 : f32 to vector<16x16xf32>
    %141 = arith.mulf %139, %140 : vector<16x16xf32>
    %142 = arith.addf %141, %25 : vector<16x16xf32>
    %cst_92 = arith.constant dense<0xFF800000> : vector<16xf32>
    %143 = vector.multi_reduction <maximumf>, %142, %cst_92 [1] : vector<16x16xf32> to vector<16xf32>
    %144 = vector.shape_cast %143 : vector<16xf32> to vector<16x1xf32>
    %145 = vector.broadcast %144 : vector<16x1xf32> to vector<16x16xf32>
    %146 = arith.subf %142, %145 : vector<16x16xf32>
    %147 = math.exp %146 : vector<16x16xf32>
    %cst_93 = arith.constant dense<0.000000e+00> : vector<16xf32>
    %148 = vector.multi_reduction <add>, %147, %cst_93 [1] : vector<16x16xf32> to vector<16xf32>
    %149 = vector.shape_cast %148 : vector<16xf32> to vector<16x1xf32>
    %150 = tpu.reciprocal %149 {approx = true} : vector<16x1xf32> -> vector<16x1xf32>
    %151 = vector.broadcast %150 : vector<16x1xf32> to vector<16x16xf32>
    %152 = arith.mulf %147, %151 : vector<16x16xf32>
    %153 = arith.truncf %152 : vector<16x16xf32> to vector<16x16xbf16>
    %154 = arith.truncf %136 : vector<16x8xf32> to vector<16x8xbf16>
    %cst_94 = arith.constant dense<0.000000e+00> : vector<16x8xf32>
    %155 = tpu.matmul %153, %154, %cst_94 {dimension_numbers = #tpu.dot_dimension_numbers<[1], [0], [0], [1], [0, 0, 1, 1], [], []>} : vector<16x16xbf16>, vector<16x8xbf16>, vector<16x8xf32> -> vector<16x8xf32>
    %156 = arith.truncf %155 : vector<16x8xf32> to vector<16x8xbf16>
    %c2_95 = arith.constant 2 : index
    %c0_96 = arith.constant 0 : index
    %c0_97 = arith.constant 0 : index
    %157 = vector.load %arg10[%c2_95, %c0_96, %c0_97] : memref<8x8x32xbf16, #tpu.memory_space<vmem>>, vector<1x8x32xbf16>
    %158 = vector.shape_cast %157 : vector<1x8x32xbf16> to vector<8x32xbf16>
    %cst_98 = arith.constant dense<0.000000e+00> : vector<16x32xf32>
    %159 = tpu.matmul %156, %158, %cst_98 {dimension_numbers = #tpu.dot_dimension_numbers<[1], [0], [0], [1], [0, 0, 1, 1], [], []>} : vector<16x8xbf16>, vector<8x32xbf16>, vector<16x32xf32> -> vector<16x32xf32>
    %160 = arith.addf %115, %159 : vector<16x32xf32>
    %c3 = arith.constant 3 : index
    %c0_99 = arith.constant 0 : index
    %c0_100 = arith.constant 0 : index
    %161 = vector.load %arg4[%c3, %c0_99, %c0_100] : memref<8x32x8xbf16, #tpu.memory_space<vmem>>, vector<1x32x8xbf16>
    %162 = vector.shape_cast %161 : vector<1x32x8xbf16> to vector<32x8xbf16>
    %cst_101 = arith.constant dense<0.000000e+00> : vector<16x8xf32>
    %163 = tpu.matmul %26, %162, %cst_101 {dimension_numbers = #tpu.dot_dimension_numbers<[1], [0], [0], [1], [0, 0, 1, 1], [], []>} : vector<16x32xbf16>, vector<32x8xbf16>, vector<16x8xf32> -> vector<16x8xf32>
    %c3_102 = arith.constant 3 : index
    %c0_103 = arith.constant 0 : index
    %c0_104 = arith.constant 0 : index
    %164 = vector.load %arg5[%c3_102, %c0_103, %c0_104] : memref<8x1x8xf32, #tpu.memory_space<vmem>>, vector<1x1x8xf32>
    %165 = vector.shape_cast %164 : vector<1x1x8xf32> to vector<1x8xf32>
    %166 = vector.broadcast %165 : vector<1x8xf32> to vector<16x8xf32>
    %167 = arith.addf %163, %166 : vector<16x8xf32>
    %c3_105 = arith.constant 3 : index
    %c0_106 = arith.constant 0 : index
    %c0_107 = arith.constant 0 : index
    %168 = vector.load %arg6[%c3_105, %c0_106, %c0_107] : memref<8x32x8xbf16, #tpu.memory_space<vmem>>, vector<1x32x8xbf16>
    %169 = vector.shape_cast %168 : vector<1x32x8xbf16> to vector<32x8xbf16>
    %cst_108 = arith.constant dense<0.000000e+00> : vector<16x8xf32>
    %170 = tpu.matmul %26, %169, %cst_108 {dimension_numbers = #tpu.dot_dimension_numbers<[1], [0], [0], [1], [0, 0, 1, 1], [], []>} : vector<16x32xbf16>, vector<32x8xbf16>, vector<16x8xf32> -> vector<16x8xf32>
    %c3_109 = arith.constant 3 : index
    %c0_110 = arith.constant 0 : index
    %c0_111 = arith.constant 0 : index
    %171 = vector.load %arg7[%c3_109, %c0_110, %c0_111] : memref<8x1x8xf32, #tpu.memory_space<vmem>>, vector<1x1x8xf32>
    %172 = vector.shape_cast %171 : vector<1x1x8xf32> to vector<1x8xf32>
    %173 = vector.broadcast %172 : vector<1x8xf32> to vector<16x8xf32>
    %174 = arith.addf %170, %173 : vector<16x8xf32>
    %c3_112 = arith.constant 3 : index
    %c0_113 = arith.constant 0 : index
    %c0_114 = arith.constant 0 : index
    %175 = vector.load %arg8[%c3_112, %c0_113, %c0_114] : memref<8x32x8xbf16, #tpu.memory_space<vmem>>, vector<1x32x8xbf16>
    %176 = vector.shape_cast %175 : vector<1x32x8xbf16> to vector<32x8xbf16>
    %cst_115 = arith.constant dense<0.000000e+00> : vector<16x8xf32>
    %177 = tpu.matmul %26, %176, %cst_115 {dimension_numbers = #tpu.dot_dimension_numbers<[1], [0], [0], [1], [0, 0, 1, 1], [], []>} : vector<16x32xbf16>, vector<32x8xbf16>, vector<16x8xf32> -> vector<16x8xf32>
    %c3_116 = arith.constant 3 : index
    %c0_117 = arith.constant 0 : index
    %c0_118 = arith.constant 0 : index
    %178 = vector.load %arg9[%c3_116, %c0_117, %c0_118] : memref<8x1x8xf32, #tpu.memory_space<vmem>>, vector<1x1x8xf32>
    %179 = vector.shape_cast %178 : vector<1x1x8xf32> to vector<1x8xf32>
    %180 = vector.broadcast %179 : vector<1x8xf32> to vector<16x8xf32>
    %181 = arith.addf %177, %180 : vector<16x8xf32>
    %182 = arith.truncf %167 : vector<16x8xf32> to vector<16x8xbf16>
    %183 = arith.truncf %174 : vector<16x8xf32> to vector<16x8xbf16>
    %cst_119 = arith.constant dense<0.000000e+00> : vector<16x16xf32>
    %184 = tpu.matmul %182, %183, %cst_119 {dimension_numbers = #tpu.dot_dimension_numbers<[1], [1], [0], [0], [0, 0, 1, 0], [], []>} : vector<16x8xbf16>, vector<16x8xbf16>, vector<16x16xf32> -> vector<16x16xf32>
    %cst_120 = arith.constant 0.353553385 : f32
    %185 = vector.broadcast %cst_120 : f32 to vector<16x16xf32>
    %186 = arith.mulf %184, %185 : vector<16x16xf32>
    %187 = arith.addf %186, %25 : vector<16x16xf32>
    %cst_121 = arith.constant dense<0xFF800000> : vector<16xf32>
    %188 = vector.multi_reduction <maximumf>, %187, %cst_121 [1] : vector<16x16xf32> to vector<16xf32>
    %189 = vector.shape_cast %188 : vector<16xf32> to vector<16x1xf32>
    %190 = vector.broadcast %189 : vector<16x1xf32> to vector<16x16xf32>
    %191 = arith.subf %187, %190 : vector<16x16xf32>
    %192 = math.exp %191 : vector<16x16xf32>
    %cst_122 = arith.constant dense<0.000000e+00> : vector<16xf32>
    %193 = vector.multi_reduction <add>, %192, %cst_122 [1] : vector<16x16xf32> to vector<16xf32>
    %194 = vector.shape_cast %193 : vector<16xf32> to vector<16x1xf32>
    %195 = tpu.reciprocal %194 {approx = true} : vector<16x1xf32> -> vector<16x1xf32>
    %196 = vector.broadcast %195 : vector<16x1xf32> to vector<16x16xf32>
    %197 = arith.mulf %192, %196 : vector<16x16xf32>
    %198 = arith.truncf %197 : vector<16x16xf32> to vector<16x16xbf16>
    %199 = arith.truncf %181 : vector<16x8xf32> to vector<16x8xbf16>
    %cst_123 = arith.constant dense<0.000000e+00> : vector<16x8xf32>
    %200 = tpu.matmul %198, %199, %cst_123 {dimension_numbers = #tpu.dot_dimension_numbers<[1], [0], [0], [1], [0, 0, 1, 1], [], []>} : vector<16x16xbf16>, vector<16x8xbf16>, vector<16x8xf32> -> vector<16x8xf32>
    %201 = arith.truncf %200 : vector<16x8xf32> to vector<16x8xbf16>
    %c3_124 = arith.constant 3 : index
    %c0_125 = arith.constant 0 : index
    %c0_126 = arith.constant 0 : index
    %202 = vector.load %arg10[%c3_124, %c0_125, %c0_126] : memref<8x8x32xbf16, #tpu.memory_space<vmem>>, vector<1x8x32xbf16>
    %203 = vector.shape_cast %202 : vector<1x8x32xbf16> to vector<8x32xbf16>
    %cst_127 = arith.constant dense<0.000000e+00> : vector<16x32xf32>
    %204 = tpu.matmul %201, %203, %cst_127 {dimension_numbers = #tpu.dot_dimension_numbers<[1], [0], [0], [1], [0, 0, 1, 1], [], []>} : vector<16x8xbf16>, vector<8x32xbf16>, vector<16x32xf32> -> vector<16x32xf32>
    %205 = arith.addf %160, %204 : vector<16x32xf32>
    %c0_128 = arith.constant 0 : index
    %c0_129 = arith.constant 0 : index
    %c0_130 = arith.constant 0 : index
    %206 = vector.load %arg11[%c0_128, %c0_129, %c0_130] : memref<2x1x32xf32, #tpu.memory_space<vmem>>, vector<1x1x32xf32>
    %207 = vector.shape_cast %206 : vector<1x1x32xf32> to vector<1x32xf32>
    %208 = vector.broadcast %207 : vector<1x32xf32> to vector<16x32xf32>
    %209 = arith.addf %205, %208 : vector<16x32xf32>
    %210 = arith.addf %209, %24 : vector<16x32xf32>
    %c0_131 = arith.constant 0 : index
    %c0_132 = arith.constant 0 : index
    %c0_133 = arith.constant 0 : index
    %211 = vector.load %arg12[%c0_131, %c0_132, %c0_133] : memref<2x1x32xf32, #tpu.memory_space<vmem>>, vector<1x1x32xf32>
    %212 = vector.shape_cast %211 : vector<1x1x32xf32> to vector<1x32xf32>
    %c0_134 = arith.constant 0 : index
    %c0_135 = arith.constant 0 : index
    %c0_136 = arith.constant 0 : index
    %213 = vector.load %arg13[%c0_134, %c0_135, %c0_136] : memref<2x1x32xf32, #tpu.memory_space<vmem>>, vector<1x1x32xf32>
    %214 = vector.shape_cast %213 : vector<1x1x32xf32> to vector<1x32xf32>
    %cst_137 = arith.constant dense<0.000000e+00> : vector<16xf32>
    %215 = vector.multi_reduction <add>, %210, %cst_137 [1] : vector<16x32xf32> to vector<16xf32>
    %216 = vector.shape_cast %215 : vector<16xf32> to vector<16x1xf32>
    %cst_138 = arith.constant 3.200000e+01 : f32
    %217 = vector.broadcast %cst_138 : f32 to vector<16x1xf32>
    %218 = arith.divf %216, %217 : vector<16x1xf32>
    %219 = vector.broadcast %218 : vector<16x1xf32> to vector<16x32xf32>
    %220 = arith.subf %210, %219 : vector<16x32xf32>
    %221 = arith.mulf %220, %220 : vector<16x32xf32>
    %cst_139 = arith.constant dense<0.000000e+00> : vector<16xf32>
    %222 = vector.multi_reduction <add>, %221, %cst_139 [1] : vector<16x32xf32> to vector<16xf32>
    %223 = vector.shape_cast %222 : vector<16xf32> to vector<16x1xf32>
    %cst_140 = arith.constant 3.200000e+01 : f32
    %224 = vector.broadcast %cst_140 : f32 to vector<16x1xf32>
    %225 = arith.divf %223, %224 : vector<16x1xf32>
    %226 = vector.broadcast %218 : vector<16x1xf32> to vector<16x32xf32>
    %227 = arith.subf %210, %226 : vector<16x32xf32>
    %cst_141 = arith.constant 9.99999996E-13 : f32
    %228 = vector.broadcast %cst_141 : f32 to vector<16x1xf32>
    %229 = arith.addf %225, %228 : vector<16x1xf32>
    %230 = math.rsqrt %229 : vector<16x1xf32>
    %231 = vector.broadcast %230 : vector<16x1xf32> to vector<16x32xf32>
    %232 = arith.mulf %227, %231 : vector<16x32xf32>
    %233 = vector.broadcast %212 : vector<1x32xf32> to vector<16x32xf32>
    %234 = arith.mulf %232, %233 : vector<16x32xf32>
    %235 = vector.broadcast %214 : vector<1x32xf32> to vector<16x32xf32>
    %236 = arith.addf %234, %235 : vector<16x32xf32>
    %237 = arith.truncf %236 : vector<16x32xf32> to vector<16x32xbf16>
    %c0_142 = arith.constant 0 : index
    %c0_143 = arith.constant 0 : index
    %c0_144 = arith.constant 0 : index
    %238 = vector.load %arg14[%c0_142, %c0_143, %c0_144] : memref<2x32x64xbf16, #tpu.memory_space<vmem>>, vector<1x32x64xbf16>
    %239 = vector.shape_cast %238 : vector<1x32x64xbf16> to vector<32x64xbf16>
    %cst_145 = arith.constant dense<0.000000e+00> : vector<16x64xf32>
    %240 = tpu.matmul %237, %239, %cst_145 {dimension_numbers = #tpu.dot_dimension_numbers<[1], [0], [0], [1], [0, 0, 1, 1], [], []>} : vector<16x32xbf16>, vector<32x64xbf16>, vector<16x64xf32> -> vector<16x64xf32>
    %c0_146 = arith.constant 0 : index
    %c0_147 = arith.constant 0 : index
    %c0_148 = arith.constant 0 : index
    %241 = vector.load %arg15[%c0_146, %c0_147, %c0_148] : memref<2x1x64xf32, #tpu.memory_space<vmem>>, vector<1x1x64xf32>
    %242 = vector.shape_cast %241 : vector<1x1x64xf32> to vector<1x64xf32>
    %243 = vector.broadcast %242 : vector<1x64xf32> to vector<16x64xf32>
    %244 = arith.addf %240, %243 : vector<16x64xf32>
    %245 = arith.mulf %244, %244 : vector<16x64xf32>
    %246 = arith.mulf %244, %245 : vector<16x64xf32>
    %cst_149 = arith.constant 4.471500e-02 : f32
    %247 = vector.broadcast %cst_149 : f32 to vector<16x64xf32>
    %248 = arith.mulf %247, %246 : vector<16x64xf32>
    %249 = arith.addf %244, %248 : vector<16x64xf32>
    %cst_150 = arith.constant 0.797884583 : f32
    %250 = vector.broadcast %cst_150 : f32 to vector<16x64xf32>
    %251 = arith.mulf %250, %249 : vector<16x64xf32>
    %252 = math.tanh %251 : vector<16x64xf32>
    %cst_151 = arith.constant 1.000000e+00 : f32
    %253 = vector.broadcast %cst_151 : f32 to vector<16x64xf32>
    %254 = arith.addf %253, %252 : vector<16x64xf32>
    %cst_152 = arith.constant 5.000000e-01 : f32
    %255 = vector.broadcast %cst_152 : f32 to vector<16x64xf32>
    %256 = arith.mulf %255, %254 : vector<16x64xf32>
    %257 = arith.mulf %244, %256 : vector<16x64xf32>
    %258 = arith.truncf %257 : vector<16x64xf32> to vector<16x64xbf16>
    %c0_153 = arith.constant 0 : index
    %c0_154 = arith.constant 0 : index
    %c0_155 = arith.constant 0 : index
    %259 = vector.load %arg16[%c0_153, %c0_154, %c0_155] : memref<2x64x32xbf16, #tpu.memory_space<vmem>>, vector<1x64x32xbf16>
    %260 = vector.shape_cast %259 : vector<1x64x32xbf16> to vector<64x32xbf16>
    %cst_156 = arith.constant dense<0.000000e+00> : vector<16x32xf32>
    %261 = tpu.matmul %258, %260, %cst_156 {dimension_numbers = #tpu.dot_dimension_numbers<[1], [0], [0], [1], [0, 0, 1, 1], [], []>} : vector<16x64xbf16>, vector<64x32xbf16>, vector<16x32xf32> -> vector<16x32xf32>
    %c0_157 = arith.constant 0 : index
    %c0_158 = arith.constant 0 : index
    %c0_159 = arith.constant 0 : index
    %262 = vector.load %arg17[%c0_157, %c0_158, %c0_159] : memref<2x1x32xf32, #tpu.memory_space<vmem>>, vector<1x1x32xf32>
    %263 = vector.shape_cast %262 : vector<1x1x32xf32> to vector<1x32xf32>
    %264 = vector.broadcast %263 : vector<1x32xf32> to vector<16x32xf32>
    %265 = arith.addf %261, %264 : vector<16x32xf32>
    %266 = arith.addf %265, %236 : vector<16x32xf32>
    %c0_160 = arith.constant 0 : index
    %c0_161 = arith.constant 0 : index
    %c0_162 = arith.constant 0 : index
    %267 = vector.load %arg18[%c0_160, %c0_161, %c0_162] : memref<2x1x32xf32, #tpu.memory_space<vmem>>, vector<1x1x32xf32>
    %268 = vector.shape_cast %267 : vector<1x1x32xf32> to vector<1x32xf32>
    %c0_163 = arith.constant 0 : index
    %c0_164 = arith.constant 0 : index
    %c0_165 = arith.constant 0 : index
    %269 = vector.load %arg19[%c0_163, %c0_164, %c0_165] : memref<2x1x32xf32, #tpu.memory_space<vmem>>, vector<1x1x32xf32>
    %270 = vector.shape_cast %269 : vector<1x1x32xf32> to vector<1x32xf32>
    %cst_166 = arith.constant dense<0.000000e+00> : vector<16xf32>
    %271 = vector.multi_reduction <add>, %266, %cst_166 [1] : vector<16x32xf32> to vector<16xf32>
    %272 = vector.shape_cast %271 : vector<16xf32> to vector<16x1xf32>
    %cst_167 = arith.constant 3.200000e+01 : f32
    %273 = vector.broadcast %cst_167 : f32 to vector<16x1xf32>
    %274 = arith.divf %272, %273 : vector<16x1xf32>
    %275 = vector.broadcast %274 : vector<16x1xf32> to vector<16x32xf32>
    %276 = arith.subf %266, %275 : vector<16x32xf32>
    %277 = arith.mulf %276, %276 : vector<16x32xf32>
    %cst_168 = arith.constant dense<0.000000e+00> : vector<16xf32>
    %278 = vector.multi_reduction <add>, %277, %cst_168 [1] : vector<16x32xf32> to vector<16xf32>
    %279 = vector.shape_cast %278 : vector<16xf32> to vector<16x1xf32>
    %cst_169 = arith.constant 3.200000e+01 : f32
    %280 = vector.broadcast %cst_169 : f32 to vector<16x1xf32>
    %281 = arith.divf %279, %280 : vector<16x1xf32>
    %282 = vector.broadcast %274 : vector<16x1xf32> to vector<16x32xf32>
    %283 = arith.subf %266, %282 : vector<16x32xf32>
    %cst_170 = arith.constant 9.99999996E-13 : f32
    %284 = vector.broadcast %cst_170 : f32 to vector<16x1xf32>
    %285 = arith.addf %281, %284 : vector<16x1xf32>
    %286 = math.rsqrt %285 : vector<16x1xf32>
    %287 = vector.broadcast %286 : vector<16x1xf32> to vector<16x32xf32>
    %288 = arith.mulf %283, %287 : vector<16x32xf32>
    %289 = vector.broadcast %268 : vector<1x32xf32> to vector<16x32xf32>
    %290 = arith.mulf %288, %289 : vector<16x32xf32>
    %291 = vector.broadcast %270 : vector<1x32xf32> to vector<16x32xf32>
    %292 = arith.addf %290, %291 : vector<16x32xf32>
    %293 = arith.truncf %292 : vector<16x32xf32> to vector<16x32xbf16>
    %c4 = arith.constant 4 : index
    %c0_171 = arith.constant 0 : index
    %c0_172 = arith.constant 0 : index
    %294 = vector.load %arg4[%c4, %c0_171, %c0_172] : memref<8x32x8xbf16, #tpu.memory_space<vmem>>, vector<1x32x8xbf16>
    %295 = vector.shape_cast %294 : vector<1x32x8xbf16> to vector<32x8xbf16>
    %cst_173 = arith.constant dense<0.000000e+00> : vector<16x8xf32>
    %296 = tpu.matmul %293, %295, %cst_173 {dimension_numbers = #tpu.dot_dimension_numbers<[1], [0], [0], [1], [0, 0, 1, 1], [], []>} : vector<16x32xbf16>, vector<32x8xbf16>, vector<16x8xf32> -> vector<16x8xf32>
    %c4_174 = arith.constant 4 : index
    %c0_175 = arith.constant 0 : index
    %c0_176 = arith.constant 0 : index
    %297 = vector.load %arg5[%c4_174, %c0_175, %c0_176] : memref<8x1x8xf32, #tpu.memory_space<vmem>>, vector<1x1x8xf32>
    %298 = vector.shape_cast %297 : vector<1x1x8xf32> to vector<1x8xf32>
    %299 = vector.broadcast %298 : vector<1x8xf32> to vector<16x8xf32>
    %300 = arith.addf %296, %299 : vector<16x8xf32>
    %c4_177 = arith.constant 4 : index
    %c0_178 = arith.constant 0 : index
    %c0_179 = arith.constant 0 : index
    %301 = vector.load %arg6[%c4_177, %c0_178, %c0_179] : memref<8x32x8xbf16, #tpu.memory_space<vmem>>, vector<1x32x8xbf16>
    %302 = vector.shape_cast %301 : vector<1x32x8xbf16> to vector<32x8xbf16>
    %cst_180 = arith.constant dense<0.000000e+00> : vector<16x8xf32>
    %303 = tpu.matmul %293, %302, %cst_180 {dimension_numbers = #tpu.dot_dimension_numbers<[1], [0], [0], [1], [0, 0, 1, 1], [], []>} : vector<16x32xbf16>, vector<32x8xbf16>, vector<16x8xf32> -> vector<16x8xf32>
    %c4_181 = arith.constant 4 : index
    %c0_182 = arith.constant 0 : index
    %c0_183 = arith.constant 0 : index
    %304 = vector.load %arg7[%c4_181, %c0_182, %c0_183] : memref<8x1x8xf32, #tpu.memory_space<vmem>>, vector<1x1x8xf32>
    %305 = vector.shape_cast %304 : vector<1x1x8xf32> to vector<1x8xf32>
    %306 = vector.broadcast %305 : vector<1x8xf32> to vector<16x8xf32>
    %307 = arith.addf %303, %306 : vector<16x8xf32>
    %c4_184 = arith.constant 4 : index
    %c0_185 = arith.constant 0 : index
    %c0_186 = arith.constant 0 : index
    %308 = vector.load %arg8[%c4_184, %c0_185, %c0_186] : memref<8x32x8xbf16, #tpu.memory_space<vmem>>, vector<1x32x8xbf16>
    %309 = vector.shape_cast %308 : vector<1x32x8xbf16> to vector<32x8xbf16>
    %cst_187 = arith.constant dense<0.000000e+00> : vector<16x8xf32>
    %310 = tpu.matmul %293, %309, %cst_187 {dimension_numbers = #tpu.dot_dimension_numbers<[1], [0], [0], [1], [0, 0, 1, 1], [], []>} : vector<16x32xbf16>, vector<32x8xbf16>, vector<16x8xf32> -> vector<16x8xf32>
    %c4_188 = arith.constant 4 : index
    %c0_189 = arith.constant 0 : index
    %c0_190 = arith.constant 0 : index
    %311 = vector.load %arg9[%c4_188, %c0_189, %c0_190] : memref<8x1x8xf32, #tpu.memory_space<vmem>>, vector<1x1x8xf32>
    %312 = vector.shape_cast %311 : vector<1x1x8xf32> to vector<1x8xf32>
    %313 = vector.broadcast %312 : vector<1x8xf32> to vector<16x8xf32>
    %314 = arith.addf %310, %313 : vector<16x8xf32>
    %315 = arith.truncf %300 : vector<16x8xf32> to vector<16x8xbf16>
    %316 = arith.truncf %307 : vector<16x8xf32> to vector<16x8xbf16>
    %cst_191 = arith.constant dense<0.000000e+00> : vector<16x16xf32>
    %317 = tpu.matmul %315, %316, %cst_191 {dimension_numbers = #tpu.dot_dimension_numbers<[1], [1], [0], [0], [0, 0, 1, 0], [], []>} : vector<16x8xbf16>, vector<16x8xbf16>, vector<16x16xf32> -> vector<16x16xf32>
    %cst_192 = arith.constant 0.353553385 : f32
    %318 = vector.broadcast %cst_192 : f32 to vector<16x16xf32>
    %319 = arith.mulf %317, %318 : vector<16x16xf32>
    %320 = arith.addf %319, %25 : vector<16x16xf32>
    %cst_193 = arith.constant dense<0xFF800000> : vector<16xf32>
    %321 = vector.multi_reduction <maximumf>, %320, %cst_193 [1] : vector<16x16xf32> to vector<16xf32>
    %322 = vector.shape_cast %321 : vector<16xf32> to vector<16x1xf32>
    %323 = vector.broadcast %322 : vector<16x1xf32> to vector<16x16xf32>
    %324 = arith.subf %320, %323 : vector<16x16xf32>
    %325 = math.exp %324 : vector<16x16xf32>
    %cst_194 = arith.constant dense<0.000000e+00> : vector<16xf32>
    %326 = vector.multi_reduction <add>, %325, %cst_194 [1] : vector<16x16xf32> to vector<16xf32>
    %327 = vector.shape_cast %326 : vector<16xf32> to vector<16x1xf32>
    %328 = tpu.reciprocal %327 {approx = true} : vector<16x1xf32> -> vector<16x1xf32>
    %329 = vector.broadcast %328 : vector<16x1xf32> to vector<16x16xf32>
    %330 = arith.mulf %325, %329 : vector<16x16xf32>
    %331 = arith.truncf %330 : vector<16x16xf32> to vector<16x16xbf16>
    %332 = arith.truncf %314 : vector<16x8xf32> to vector<16x8xbf16>
    %cst_195 = arith.constant dense<0.000000e+00> : vector<16x8xf32>
    %333 = tpu.matmul %331, %332, %cst_195 {dimension_numbers = #tpu.dot_dimension_numbers<[1], [0], [0], [1], [0, 0, 1, 1], [], []>} : vector<16x16xbf16>, vector<16x8xbf16>, vector<16x8xf32> -> vector<16x8xf32>
    %334 = arith.truncf %333 : vector<16x8xf32> to vector<16x8xbf16>
    %c4_196 = arith.constant 4 : index
    %c0_197 = arith.constant 0 : index
    %c0_198 = arith.constant 0 : index
    %335 = vector.load %arg10[%c4_196, %c0_197, %c0_198] : memref<8x8x32xbf16, #tpu.memory_space<vmem>>, vector<1x8x32xbf16>
    %336 = vector.shape_cast %335 : vector<1x8x32xbf16> to vector<8x32xbf16>
    %cst_199 = arith.constant dense<0.000000e+00> : vector<16x32xf32>
    %337 = tpu.matmul %334, %336, %cst_199 {dimension_numbers = #tpu.dot_dimension_numbers<[1], [0], [0], [1], [0, 0, 1, 1], [], []>} : vector<16x8xbf16>, vector<8x32xbf16>, vector<16x32xf32> -> vector<16x32xf32>
    %c5 = arith.constant 5 : index
    %c0_200 = arith.constant 0 : index
    %c0_201 = arith.constant 0 : index
    %338 = vector.load %arg4[%c5, %c0_200, %c0_201] : memref<8x32x8xbf16, #tpu.memory_space<vmem>>, vector<1x32x8xbf16>
    %339 = vector.shape_cast %338 : vector<1x32x8xbf16> to vector<32x8xbf16>
    %cst_202 = arith.constant dense<0.000000e+00> : vector<16x8xf32>
    %340 = tpu.matmul %293, %339, %cst_202 {dimension_numbers = #tpu.dot_dimension_numbers<[1], [0], [0], [1], [0, 0, 1, 1], [], []>} : vector<16x32xbf16>, vector<32x8xbf16>, vector<16x8xf32> -> vector<16x8xf32>
    %c5_203 = arith.constant 5 : index
    %c0_204 = arith.constant 0 : index
    %c0_205 = arith.constant 0 : index
    %341 = vector.load %arg5[%c5_203, %c0_204, %c0_205] : memref<8x1x8xf32, #tpu.memory_space<vmem>>, vector<1x1x8xf32>
    %342 = vector.shape_cast %341 : vector<1x1x8xf32> to vector<1x8xf32>
    %343 = vector.broadcast %342 : vector<1x8xf32> to vector<16x8xf32>
    %344 = arith.addf %340, %343 : vector<16x8xf32>
    %c5_206 = arith.constant 5 : index
    %c0_207 = arith.constant 0 : index
    %c0_208 = arith.constant 0 : index
    %345 = vector.load %arg6[%c5_206, %c0_207, %c0_208] : memref<8x32x8xbf16, #tpu.memory_space<vmem>>, vector<1x32x8xbf16>
    %346 = vector.shape_cast %345 : vector<1x32x8xbf16> to vector<32x8xbf16>
    %cst_209 = arith.constant dense<0.000000e+00> : vector<16x8xf32>
    %347 = tpu.matmul %293, %346, %cst_209 {dimension_numbers = #tpu.dot_dimension_numbers<[1], [0], [0], [1], [0, 0, 1, 1], [], []>} : vector<16x32xbf16>, vector<32x8xbf16>, vector<16x8xf32> -> vector<16x8xf32>
    %c5_210 = arith.constant 5 : index
    %c0_211 = arith.constant 0 : index
    %c0_212 = arith.constant 0 : index
    %348 = vector.load %arg7[%c5_210, %c0_211, %c0_212] : memref<8x1x8xf32, #tpu.memory_space<vmem>>, vector<1x1x8xf32>
    %349 = vector.shape_cast %348 : vector<1x1x8xf32> to vector<1x8xf32>
    %350 = vector.broadcast %349 : vector<1x8xf32> to vector<16x8xf32>
    %351 = arith.addf %347, %350 : vector<16x8xf32>
    %c5_213 = arith.constant 5 : index
    %c0_214 = arith.constant 0 : index
    %c0_215 = arith.constant 0 : index
    %352 = vector.load %arg8[%c5_213, %c0_214, %c0_215] : memref<8x32x8xbf16, #tpu.memory_space<vmem>>, vector<1x32x8xbf16>
    %353 = vector.shape_cast %352 : vector<1x32x8xbf16> to vector<32x8xbf16>
    %cst_216 = arith.constant dense<0.000000e+00> : vector<16x8xf32>
    %354 = tpu.matmul %293, %353, %cst_216 {dimension_numbers = #tpu.dot_dimension_numbers<[1], [0], [0], [1], [0, 0, 1, 1], [], []>} : vector<16x32xbf16>, vector<32x8xbf16>, vector<16x8xf32> -> vector<16x8xf32>
    %c5_217 = arith.constant 5 : index
    %c0_218 = arith.constant 0 : index
    %c0_219 = arith.constant 0 : index
    %355 = vector.load %arg9[%c5_217, %c0_218, %c0_219] : memref<8x1x8xf32, #tpu.memory_space<vmem>>, vector<1x1x8xf32>
    %356 = vector.shape_cast %355 : vector<1x1x8xf32> to vector<1x8xf32>
    %357 = vector.broadcast %356 : vector<1x8xf32> to vector<16x8xf32>
    %358 = arith.addf %354, %357 : vector<16x8xf32>
    %359 = arith.truncf %344 : vector<16x8xf32> to vector<16x8xbf16>
    %360 = arith.truncf %351 : vector<16x8xf32> to vector<16x8xbf16>
    %cst_220 = arith.constant dense<0.000000e+00> : vector<16x16xf32>
    %361 = tpu.matmul %359, %360, %cst_220 {dimension_numbers = #tpu.dot_dimension_numbers<[1], [1], [0], [0], [0, 0, 1, 0], [], []>} : vector<16x8xbf16>, vector<16x8xbf16>, vector<16x16xf32> -> vector<16x16xf32>
    %cst_221 = arith.constant 0.353553385 : f32
    %362 = vector.broadcast %cst_221 : f32 to vector<16x16xf32>
    %363 = arith.mulf %361, %362 : vector<16x16xf32>
    %364 = arith.addf %363, %25 : vector<16x16xf32>
    %cst_222 = arith.constant dense<0xFF800000> : vector<16xf32>
    %365 = vector.multi_reduction <maximumf>, %364, %cst_222 [1] : vector<16x16xf32> to vector<16xf32>
    %366 = vector.shape_cast %365 : vector<16xf32> to vector<16x1xf32>
    %367 = vector.broadcast %366 : vector<16x1xf32> to vector<16x16xf32>
    %368 = arith.subf %364, %367 : vector<16x16xf32>
    %369 = math.exp %368 : vector<16x16xf32>
    %cst_223 = arith.constant dense<0.000000e+00> : vector<16xf32>
    %370 = vector.multi_reduction <add>, %369, %cst_223 [1] : vector<16x16xf32> to vector<16xf32>
    %371 = vector.shape_cast %370 : vector<16xf32> to vector<16x1xf32>
    %372 = tpu.reciprocal %371 {approx = true} : vector<16x1xf32> -> vector<16x1xf32>
    %373 = vector.broadcast %372 : vector<16x1xf32> to vector<16x16xf32>
    %374 = arith.mulf %369, %373 : vector<16x16xf32>
    %375 = arith.truncf %374 : vector<16x16xf32> to vector<16x16xbf16>
    %376 = arith.truncf %358 : vector<16x8xf32> to vector<16x8xbf16>
    %cst_224 = arith.constant dense<0.000000e+00> : vector<16x8xf32>
    %377 = tpu.matmul %375, %376, %cst_224 {dimension_numbers = #tpu.dot_dimension_numbers<[1], [0], [0], [1], [0, 0, 1, 1], [], []>} : vector<16x16xbf16>, vector<16x8xbf16>, vector<16x8xf32> -> vector<16x8xf32>
    %378 = arith.truncf %377 : vector<16x8xf32> to vector<16x8xbf16>
    %c5_225 = arith.constant 5 : index
    %c0_226 = arith.constant 0 : index
    %c0_227 = arith.constant 0 : index
    %379 = vector.load %arg10[%c5_225, %c0_226, %c0_227] : memref<8x8x32xbf16, #tpu.memory_space<vmem>>, vector<1x8x32xbf16>
    %380 = vector.shape_cast %379 : vector<1x8x32xbf16> to vector<8x32xbf16>
    %cst_228 = arith.constant dense<0.000000e+00> : vector<16x32xf32>
    %381 = tpu.matmul %378, %380, %cst_228 {dimension_numbers = #tpu.dot_dimension_numbers<[1], [0], [0], [1], [0, 0, 1, 1], [], []>} : vector<16x8xbf16>, vector<8x32xbf16>, vector<16x32xf32> -> vector<16x32xf32>
    %382 = arith.addf %337, %381 : vector<16x32xf32>
    %c6 = arith.constant 6 : index
    %c0_229 = arith.constant 0 : index
    %c0_230 = arith.constant 0 : index
    %383 = vector.load %arg4[%c6, %c0_229, %c0_230] : memref<8x32x8xbf16, #tpu.memory_space<vmem>>, vector<1x32x8xbf16>
    %384 = vector.shape_cast %383 : vector<1x32x8xbf16> to vector<32x8xbf16>
    %cst_231 = arith.constant dense<0.000000e+00> : vector<16x8xf32>
    %385 = tpu.matmul %293, %384, %cst_231 {dimension_numbers = #tpu.dot_dimension_numbers<[1], [0], [0], [1], [0, 0, 1, 1], [], []>} : vector<16x32xbf16>, vector<32x8xbf16>, vector<16x8xf32> -> vector<16x8xf32>
    %c6_232 = arith.constant 6 : index
    %c0_233 = arith.constant 0 : index
    %c0_234 = arith.constant 0 : index
    %386 = vector.load %arg5[%c6_232, %c0_233, %c0_234] : memref<8x1x8xf32, #tpu.memory_space<vmem>>, vector<1x1x8xf32>
    %387 = vector.shape_cast %386 : vector<1x1x8xf32> to vector<1x8xf32>
    %388 = vector.broadcast %387 : vector<1x8xf32> to vector<16x8xf32>
    %389 = arith.addf %385, %388 : vector<16x8xf32>
    %c6_235 = arith.constant 6 : index
    %c0_236 = arith.constant 0 : index
    %c0_237 = arith.constant 0 : index
    %390 = vector.load %arg6[%c6_235, %c0_236, %c0_237] : memref<8x32x8xbf16, #tpu.memory_space<vmem>>, vector<1x32x8xbf16>
    %391 = vector.shape_cast %390 : vector<1x32x8xbf16> to vector<32x8xbf16>
    %cst_238 = arith.constant dense<0.000000e+00> : vector<16x8xf32>
    %392 = tpu.matmul %293, %391, %cst_238 {dimension_numbers = #tpu.dot_dimension_numbers<[1], [0], [0], [1], [0, 0, 1, 1], [], []>} : vector<16x32xbf16>, vector<32x8xbf16>, vector<16x8xf32> -> vector<16x8xf32>
    %c6_239 = arith.constant 6 : index
    %c0_240 = arith.constant 0 : index
    %c0_241 = arith.constant 0 : index
    %393 = vector.load %arg7[%c6_239, %c0_240, %c0_241] : memref<8x1x8xf32, #tpu.memory_space<vmem>>, vector<1x1x8xf32>
    %394 = vector.shape_cast %393 : vector<1x1x8xf32> to vector<1x8xf32>
    %395 = vector.broadcast %394 : vector<1x8xf32> to vector<16x8xf32>
    %396 = arith.addf %392, %395 : vector<16x8xf32>
    %c6_242 = arith.constant 6 : index
    %c0_243 = arith.constant 0 : index
    %c0_244 = arith.constant 0 : index
    %397 = vector.load %arg8[%c6_242, %c0_243, %c0_244] : memref<8x32x8xbf16, #tpu.memory_space<vmem>>, vector<1x32x8xbf16>
    %398 = vector.shape_cast %397 : vector<1x32x8xbf16> to vector<32x8xbf16>
    %cst_245 = arith.constant dense<0.000000e+00> : vector<16x8xf32>
    %399 = tpu.matmul %293, %398, %cst_245 {dimension_numbers = #tpu.dot_dimension_numbers<[1], [0], [0], [1], [0, 0, 1, 1], [], []>} : vector<16x32xbf16>, vector<32x8xbf16>, vector<16x8xf32> -> vector<16x8xf32>
    %c6_246 = arith.constant 6 : index
    %c0_247 = arith.constant 0 : index
    %c0_248 = arith.constant 0 : index
    %400 = vector.load %arg9[%c6_246, %c0_247, %c0_248] : memref<8x1x8xf32, #tpu.memory_space<vmem>>, vector<1x1x8xf32>
    %401 = vector.shape_cast %400 : vector<1x1x8xf32> to vector<1x8xf32>
    %402 = vector.broadcast %401 : vector<1x8xf32> to vector<16x8xf32>
    %403 = arith.addf %399, %402 : vector<16x8xf32>
    %404 = arith.truncf %389 : vector<16x8xf32> to vector<16x8xbf16>
    %405 = arith.truncf %396 : vector<16x8xf32> to vector<16x8xbf16>
    %cst_249 = arith.constant dense<0.000000e+00> : vector<16x16xf32>
    %406 = tpu.matmul %404, %405, %cst_249 {dimension_numbers = #tpu.dot_dimension_numbers<[1], [1], [0], [0], [0, 0, 1, 0], [], []>} : vector<16x8xbf16>, vector<16x8xbf16>, vector<16x16xf32> -> vector<16x16xf32>
    %cst_250 = arith.constant 0.353553385 : f32
    %407 = vector.broadcast %cst_250 : f32 to vector<16x16xf32>
    %408 = arith.mulf %406, %407 : vector<16x16xf32>
    %409 = arith.addf %408, %25 : vector<16x16xf32>
    %cst_251 = arith.constant dense<0xFF800000> : vector<16xf32>
    %410 = vector.multi_reduction <maximumf>, %409, %cst_251 [1] : vector<16x16xf32> to vector<16xf32>
    %411 = vector.shape_cast %410 : vector<16xf32> to vector<16x1xf32>
    %412 = vector.broadcast %411 : vector<16x1xf32> to vector<16x16xf32>
    %413 = arith.subf %409, %412 : vector<16x16xf32>
    %414 = math.exp %413 : vector<16x16xf32>
    %cst_252 = arith.constant dense<0.000000e+00> : vector<16xf32>
    %415 = vector.multi_reduction <add>, %414, %cst_252 [1] : vector<16x16xf32> to vector<16xf32>
    %416 = vector.shape_cast %415 : vector<16xf32> to vector<16x1xf32>
    %417 = tpu.reciprocal %416 {approx = true} : vector<16x1xf32> -> vector<16x1xf32>
    %418 = vector.broadcast %417 : vector<16x1xf32> to vector<16x16xf32>
    %419 = arith.mulf %414, %418 : vector<16x16xf32>
    %420 = arith.truncf %419 : vector<16x16xf32> to vector<16x16xbf16>
    %421 = arith.truncf %403 : vector<16x8xf32> to vector<16x8xbf16>
    %cst_253 = arith.constant dense<0.000000e+00> : vector<16x8xf32>
    %422 = tpu.matmul %420, %421, %cst_253 {dimension_numbers = #tpu.dot_dimension_numbers<[1], [0], [0], [1], [0, 0, 1, 1], [], []>} : vector<16x16xbf16>, vector<16x8xbf16>, vector<16x8xf32> -> vector<16x8xf32>
    %423 = arith.truncf %422 : vector<16x8xf32> to vector<16x8xbf16>
    %c6_254 = arith.constant 6 : index
    %c0_255 = arith.constant 0 : index
    %c0_256 = arith.constant 0 : index
    %424 = vector.load %arg10[%c6_254, %c0_255, %c0_256] : memref<8x8x32xbf16, #tpu.memory_space<vmem>>, vector<1x8x32xbf16>
    %425 = vector.shape_cast %424 : vector<1x8x32xbf16> to vector<8x32xbf16>
    %cst_257 = arith.constant dense<0.000000e+00> : vector<16x32xf32>
    %426 = tpu.matmul %423, %425, %cst_257 {dimension_numbers = #tpu.dot_dimension_numbers<[1], [0], [0], [1], [0, 0, 1, 1], [], []>} : vector<16x8xbf16>, vector<8x32xbf16>, vector<16x32xf32> -> vector<16x32xf32>
    %427 = arith.addf %382, %426 : vector<16x32xf32>
    %c7 = arith.constant 7 : index
    %c0_258 = arith.constant 0 : index
    %c0_259 = arith.constant 0 : index
    %428 = vector.load %arg4[%c7, %c0_258, %c0_259] : memref<8x32x8xbf16, #tpu.memory_space<vmem>>, vector<1x32x8xbf16>
    %429 = vector.shape_cast %428 : vector<1x32x8xbf16> to vector<32x8xbf16>
    %cst_260 = arith.constant dense<0.000000e+00> : vector<16x8xf32>
    %430 = tpu.matmul %293, %429, %cst_260 {dimension_numbers = #tpu.dot_dimension_numbers<[1], [0], [0], [1], [0, 0, 1, 1], [], []>} : vector<16x32xbf16>, vector<32x8xbf16>, vector<16x8xf32> -> vector<16x8xf32>
    %c7_261 = arith.constant 7 : index
    %c0_262 = arith.constant 0 : index
    %c0_263 = arith.constant 0 : index
    %431 = vector.load %arg5[%c7_261, %c0_262, %c0_263] : memref<8x1x8xf32, #tpu.memory_space<vmem>>, vector<1x1x8xf32>
    %432 = vector.shape_cast %431 : vector<1x1x8xf32> to vector<1x8xf32>
    %433 = vector.broadcast %432 : vector<1x8xf32> to vector<16x8xf32>
    %434 = arith.addf %430, %433 : vector<16x8xf32>
    %c7_264 = arith.constant 7 : index
    %c0_265 = arith.constant 0 : index
    %c0_266 = arith.constant 0 : index
    %435 = vector.load %arg6[%c7_264, %c0_265, %c0_266] : memref<8x32x8xbf16, #tpu.memory_space<vmem>>, vector<1x32x8xbf16>
    %436 = vector.shape_cast %435 : vector<1x32x8xbf16> to vector<32x8xbf16>
    %cst_267 = arith.constant dense<0.000000e+00> : vector<16x8xf32>
    %437 = tpu.matmul %293, %436, %cst_267 {dimension_numbers = #tpu.dot_dimension_numbers<[1], [0], [0], [1], [0, 0, 1, 1], [], []>} : vector<16x32xbf16>, vector<32x8xbf16>, vector<16x8xf32> -> vector<16x8xf32>
    %c7_268 = arith.constant 7 : index
    %c0_269 = arith.constant 0 : index
    %c0_270 = arith.constant 0 : index
    %438 = vector.load %arg7[%c7_268, %c0_269, %c0_270] : memref<8x1x8xf32, #tpu.memory_space<vmem>>, vector<1x1x8xf32>
    %439 = vector.shape_cast %438 : vector<1x1x8xf32> to vector<1x8xf32>
    %440 = vector.broadcast %439 : vector<1x8xf32> to vector<16x8xf32>
    %441 = arith.addf %437, %440 : vector<16x8xf32>
    %c7_271 = arith.constant 7 : index
    %c0_272 = arith.constant 0 : index
    %c0_273 = arith.constant 0 : index
    %442 = vector.load %arg8[%c7_271, %c0_272, %c0_273] : memref<8x32x8xbf16, #tpu.memory_space<vmem>>, vector<1x32x8xbf16>
    %443 = vector.shape_cast %442 : vector<1x32x8xbf16> to vector<32x8xbf16>
    %cst_274 = arith.constant dense<0.000000e+00> : vector<16x8xf32>
    %444 = tpu.matmul %293, %443, %cst_274 {dimension_numbers = #tpu.dot_dimension_numbers<[1], [0], [0], [1], [0, 0, 1, 1], [], []>} : vector<16x32xbf16>, vector<32x8xbf16>, vector<16x8xf32> -> vector<16x8xf32>
    %c7_275 = arith.constant 7 : index
    %c0_276 = arith.constant 0 : index
    %c0_277 = arith.constant 0 : index
    %445 = vector.load %arg9[%c7_275, %c0_276, %c0_277] : memref<8x1x8xf32, #tpu.memory_space<vmem>>, vector<1x1x8xf32>
    %446 = vector.shape_cast %445 : vector<1x1x8xf32> to vector<1x8xf32>
    %447 = vector.broadcast %446 : vector<1x8xf32> to vector<16x8xf32>
    %448 = arith.addf %444, %447 : vector<16x8xf32>
    %449 = arith.truncf %434 : vector<16x8xf32> to vector<16x8xbf16>
    %450 = arith.truncf %441 : vector<16x8xf32> to vector<16x8xbf16>
    %cst_278 = arith.constant dense<0.000000e+00> : vector<16x16xf32>
    %451 = tpu.matmul %449, %450, %cst_278 {dimension_numbers = #tpu.dot_dimension_numbers<[1], [1], [0], [0], [0, 0, 1, 0], [], []>} : vector<16x8xbf16>, vector<16x8xbf16>, vector<16x16xf32> -> vector<16x16xf32>
    %cst_279 = arith.constant 0.353553385 : f32
    %452 = vector.broadcast %cst_279 : f32 to vector<16x16xf32>
    %453 = arith.mulf %451, %452 : vector<16x16xf32>
    %454 = arith.addf %453, %25 : vector<16x16xf32>
    %cst_280 = arith.constant dense<0xFF800000> : vector<16xf32>
    %455 = vector.multi_reduction <maximumf>, %454, %cst_280 [1] : vector<16x16xf32> to vector<16xf32>
    %456 = vector.shape_cast %455 : vector<16xf32> to vector<16x1xf32>
    %457 = vector.broadcast %456 : vector<16x1xf32> to vector<16x16xf32>
    %458 = arith.subf %454, %457 : vector<16x16xf32>
    %459 = math.exp %458 : vector<16x16xf32>
    %cst_281 = arith.constant dense<0.000000e+00> : vector<16xf32>
    %460 = vector.multi_reduction <add>, %459, %cst_281 [1] : vector<16x16xf32> to vector<16xf32>
    %461 = vector.shape_cast %460 : vector<16xf32> to vector<16x1xf32>
    %462 = tpu.reciprocal %461 {approx = true} : vector<16x1xf32> -> vector<16x1xf32>
    %463 = vector.broadcast %462 : vector<16x1xf32> to vector<16x16xf32>
    %464 = arith.mulf %459, %463 : vector<16x16xf32>
    %465 = arith.truncf %464 : vector<16x16xf32> to vector<16x16xbf16>
    %466 = arith.truncf %448 : vector<16x8xf32> to vector<16x8xbf16>
    %cst_282 = arith.constant dense<0.000000e+00> : vector<16x8xf32>
    %467 = tpu.matmul %465, %466, %cst_282 {dimension_numbers = #tpu.dot_dimension_numbers<[1], [0], [0], [1], [0, 0, 1, 1], [], []>} : vector<16x16xbf16>, vector<16x8xbf16>, vector<16x8xf32> -> vector<16x8xf32>
    %468 = arith.truncf %467 : vector<16x8xf32> to vector<16x8xbf16>
    %c7_283 = arith.constant 7 : index
    %c0_284 = arith.constant 0 : index
    %c0_285 = arith.constant 0 : index
    %469 = vector.load %arg10[%c7_283, %c0_284, %c0_285] : memref<8x8x32xbf16, #tpu.memory_space<vmem>>, vector<1x8x32xbf16>
    %470 = vector.shape_cast %469 : vector<1x8x32xbf16> to vector<8x32xbf16>
    %cst_286 = arith.constant dense<0.000000e+00> : vector<16x32xf32>
    %471 = tpu.matmul %468, %470, %cst_286 {dimension_numbers = #tpu.dot_dimension_numbers<[1], [0], [0], [1], [0, 0, 1, 1], [], []>} : vector<16x8xbf16>, vector<8x32xbf16>, vector<16x32xf32> -> vector<16x32xf32>
    %472 = arith.addf %427, %471 : vector<16x32xf32>
    %c1_287 = arith.constant 1 : index
    %c0_288 = arith.constant 0 : index
    %c0_289 = arith.constant 0 : index
    %473 = vector.load %arg11[%c1_287, %c0_288, %c0_289] : memref<2x1x32xf32, #tpu.memory_space<vmem>>, vector<1x1x32xf32>
    %474 = vector.shape_cast %473 : vector<1x1x32xf32> to vector<1x32xf32>
    %475 = vector.broadcast %474 : vector<1x32xf32> to vector<16x32xf32>
    %476 = arith.addf %472, %475 : vector<16x32xf32>
    %477 = arith.addf %476, %292 : vector<16x32xf32>
    %c1_290 = arith.constant 1 : index
    %c0_291 = arith.constant 0 : index
    %c0_292 = arith.constant 0 : index
    %478 = vector.load %arg12[%c1_290, %c0_291, %c0_292] : memref<2x1x32xf32, #tpu.memory_space<vmem>>, vector<1x1x32xf32>
    %479 = vector.shape_cast %478 : vector<1x1x32xf32> to vector<1x32xf32>
    %c1_293 = arith.constant 1 : index
    %c0_294 = arith.constant 0 : index
    %c0_295 = arith.constant 0 : index
    %480 = vector.load %arg13[%c1_293, %c0_294, %c0_295] : memref<2x1x32xf32, #tpu.memory_space<vmem>>, vector<1x1x32xf32>
    %481 = vector.shape_cast %480 : vector<1x1x32xf32> to vector<1x32xf32>
    %cst_296 = arith.constant dense<0.000000e+00> : vector<16xf32>
    %482 = vector.multi_reduction <add>, %477, %cst_296 [1] : vector<16x32xf32> to vector<16xf32>
    %483 = vector.shape_cast %482 : vector<16xf32> to vector<16x1xf32>
    %cst_297 = arith.constant 3.200000e+01 : f32
    %484 = vector.broadcast %cst_297 : f32 to vector<16x1xf32>
    %485 = arith.divf %483, %484 : vector<16x1xf32>
    %486 = vector.broadcast %485 : vector<16x1xf32> to vector<16x32xf32>
    %487 = arith.subf %477, %486 : vector<16x32xf32>
    %488 = arith.mulf %487, %487 : vector<16x32xf32>
    %cst_298 = arith.constant dense<0.000000e+00> : vector<16xf32>
    %489 = vector.multi_reduction <add>, %488, %cst_298 [1] : vector<16x32xf32> to vector<16xf32>
    %490 = vector.shape_cast %489 : vector<16xf32> to vector<16x1xf32>
    %cst_299 = arith.constant 3.200000e+01 : f32
    %491 = vector.broadcast %cst_299 : f32 to vector<16x1xf32>
    %492 = arith.divf %490, %491 : vector<16x1xf32>
    %493 = vector.broadcast %485 : vector<16x1xf32> to vector<16x32xf32>
    %494 = arith.subf %477, %493 : vector<16x32xf32>
    %cst_300 = arith.constant 9.99999996E-13 : f32
    %495 = vector.broadcast %cst_300 : f32 to vector<16x1xf32>
    %496 = arith.addf %492, %495 : vector<16x1xf32>
    %497 = math.rsqrt %496 : vector<16x1xf32>
    %498 = vector.broadcast %497 : vector<16x1xf32> to vector<16x32xf32>
    %499 = arith.mulf %494, %498 : vector<16x32xf32>
    %500 = vector.broadcast %479 : vector<1x32xf32> to vector<16x32xf32>
    %501 = arith.mulf %499, %500 : vector<16x32xf32>
    %502 = vector.broadcast %481 : vector<1x32xf32> to vector<16x32xf32>
    %503 = arith.addf %501, %502 : vector<16x32xf32>
    %504 = arith.truncf %503 : vector<16x32xf32> to vector<16x32xbf16>
    %c1_301 = arith.constant 1 : index
    %c0_302 = arith.constant 0 : index
    %c0_303 = arith.constant 0 : index
    %505 = vector.load %arg14[%c1_301, %c0_302, %c0_303] : memref<2x32x64xbf16, #tpu.memory_space<vmem>>, vector<1x32x64xbf16>
    %506 = vector.shape_cast %505 : vector<1x32x64xbf16> to vector<32x64xbf16>
    %cst_304 = arith.constant dense<0.000000e+00> : vector<16x64xf32>
    %507 = tpu.matmul %504, %506, %cst_304 {dimension_numbers = #tpu.dot_dimension_numbers<[1], [0], [0], [1], [0, 0, 1, 1], [], []>} : vector<16x32xbf16>, vector<32x64xbf16>, vector<16x64xf32> -> vector<16x64xf32>
    %c1_305 = arith.constant 1 : index
    %c0_306 = arith.constant 0 : index
    %c0_307 = arith.constant 0 : index
    %508 = vector.load %arg15[%c1_305, %c0_306, %c0_307] : memref<2x1x64xf32, #tpu.memory_space<vmem>>, vector<1x1x64xf32>
    %509 = vector.shape_cast %508 : vector<1x1x64xf32> to vector<1x64xf32>
    %510 = vector.broadcast %509 : vector<1x64xf32> to vector<16x64xf32>
    %511 = arith.addf %507, %510 : vector<16x64xf32>
    %512 = arith.mulf %511, %511 : vector<16x64xf32>
    %513 = arith.mulf %511, %512 : vector<16x64xf32>
    %cst_308 = arith.constant 4.471500e-02 : f32
    %514 = vector.broadcast %cst_308 : f32 to vector<16x64xf32>
    %515 = arith.mulf %514, %513 : vector<16x64xf32>
    %516 = arith.addf %511, %515 : vector<16x64xf32>
    %cst_309 = arith.constant 0.797884583 : f32
    %517 = vector.broadcast %cst_309 : f32 to vector<16x64xf32>
    %518 = arith.mulf %517, %516 : vector<16x64xf32>
    %519 = math.tanh %518 : vector<16x64xf32>
    %cst_310 = arith.constant 1.000000e+00 : f32
    %520 = vector.broadcast %cst_310 : f32 to vector<16x64xf32>
    %521 = arith.addf %520, %519 : vector<16x64xf32>
    %cst_311 = arith.constant 5.000000e-01 : f32
    %522 = vector.broadcast %cst_311 : f32 to vector<16x64xf32>
    %523 = arith.mulf %522, %521 : vector<16x64xf32>
    %524 = arith.mulf %511, %523 : vector<16x64xf32>
    %525 = arith.truncf %524 : vector<16x64xf32> to vector<16x64xbf16>
    %c1_312 = arith.constant 1 : index
    %c0_313 = arith.constant 0 : index
    %c0_314 = arith.constant 0 : index
    %526 = vector.load %arg16[%c1_312, %c0_313, %c0_314] : memref<2x64x32xbf16, #tpu.memory_space<vmem>>, vector<1x64x32xbf16>
    %527 = vector.shape_cast %526 : vector<1x64x32xbf16> to vector<64x32xbf16>
    %cst_315 = arith.constant dense<0.000000e+00> : vector<16x32xf32>
    %528 = tpu.matmul %525, %527, %cst_315 {dimension_numbers = #tpu.dot_dimension_numbers<[1], [0], [0], [1], [0, 0, 1, 1], [], []>} : vector<16x64xbf16>, vector<64x32xbf16>, vector<16x32xf32> -> vector<16x32xf32>
    %c1_316 = arith.constant 1 : index
    %c0_317 = arith.constant 0 : index
    %c0_318 = arith.constant 0 : index
    %529 = vector.load %arg17[%c1_316, %c0_317, %c0_318] : memref<2x1x32xf32, #tpu.memory_space<vmem>>, vector<1x1x32xf32>
    %530 = vector.shape_cast %529 : vector<1x1x32xf32> to vector<1x32xf32>
    %531 = vector.broadcast %530 : vector<1x32xf32> to vector<16x32xf32>
    %532 = arith.addf %528, %531 : vector<16x32xf32>
    %533 = arith.addf %532, %503 : vector<16x32xf32>
    %c1_319 = arith.constant 1 : index
    %c0_320 = arith.constant 0 : index
    %c0_321 = arith.constant 0 : index
    %534 = vector.load %arg18[%c1_319, %c0_320, %c0_321] : memref<2x1x32xf32, #tpu.memory_space<vmem>>, vector<1x1x32xf32>
    %535 = vector.shape_cast %534 : vector<1x1x32xf32> to vector<1x32xf32>
    %c1_322 = arith.constant 1 : index
    %c0_323 = arith.constant 0 : index
    %c0_324 = arith.constant 0 : index
    %536 = vector.load %arg19[%c1_322, %c0_323, %c0_324] : memref<2x1x32xf32, #tpu.memory_space<vmem>>, vector<1x1x32xf32>
    %537 = vector.shape_cast %536 : vector<1x1x32xf32> to vector<1x32xf32>
    %cst_325 = arith.constant dense<0.000000e+00> : vector<16xf32>
    %538 = vector.multi_reduction <add>, %533, %cst_325 [1] : vector<16x32xf32> to vector<16xf32>
    %539 = vector.shape_cast %538 : vector<16xf32> to vector<16x1xf32>
    %cst_326 = arith.constant 3.200000e+01 : f32
    %540 = vector.broadcast %cst_326 : f32 to vector<16x1xf32>
    %541 = arith.divf %539, %540 : vector<16x1xf32>
    %542 = vector.broadcast %541 : vector<16x1xf32> to vector<16x32xf32>
    %543 = arith.subf %533, %542 : vector<16x32xf32>
    %544 = arith.mulf %543, %543 : vector<16x32xf32>
    %cst_327 = arith.constant dense<0.000000e+00> : vector<16xf32>
    %545 = vector.multi_reduction <add>, %544, %cst_327 [1] : vector<16x32xf32> to vector<16xf32>
    %546 = vector.shape_cast %545 : vector<16xf32> to vector<16x1xf32>
    %cst_328 = arith.constant 3.200000e+01 : f32
    %547 = vector.broadcast %cst_328 : f32 to vector<16x1xf32>
    %548 = arith.divf %546, %547 : vector<16x1xf32>
    %549 = vector.broadcast %541 : vector<16x1xf32> to vector<16x32xf32>
    %550 = arith.subf %533, %549 : vector<16x32xf32>
    %cst_329 = arith.constant 9.99999996E-13 : f32
    %551 = vector.broadcast %cst_329 : f32 to vector<16x1xf32>
    %552 = arith.addf %548, %551 : vector<16x1xf32>
    %553 = math.rsqrt %552 : vector<16x1xf32>
    %554 = vector.broadcast %553 : vector<16x1xf32> to vector<16x32xf32>
    %555 = arith.mulf %550, %554 : vector<16x32xf32>
    %556 = vector.broadcast %535 : vector<1x32xf32> to vector<16x32xf32>
    %557 = arith.mulf %555, %556 : vector<16x32xf32>
    %558 = vector.broadcast %537 : vector<1x32xf32> to vector<16x32xf32>
    %559 = arith.addf %557, %558 : vector<16x32xf32>
    %560 = arith.truncf %559 : vector<16x32xf32> to vector<16x32xbf16>
    %c0_330 = arith.constant 0 : index
    %c0_331 = arith.constant 0 : index
    %561 = vector.load %arg20[%c0_330, %c0_331] : memref<32x128xbf16, #tpu.memory_space<vmem>>, vector<32x128xbf16>
    %cst_332 = arith.constant dense<0.000000e+00> : vector<16x128xf32>
    %562 = tpu.matmul %560, %561, %cst_332 {dimension_numbers = #tpu.dot_dimension_numbers<[1], [0], [0], [1], [0, 0, 1, 1], [], []>} : vector<16x32xbf16>, vector<32x128xbf16>, vector<16x128xf32> -> vector<16x128xf32>
    %c0_333 = arith.constant 0 : index
    %c0_334 = arith.constant 0 : index
    %563 = vector.load %arg21[%c0_333, %c0_334] : memref<1x128xf32, #tpu.memory_space<vmem>>, vector<1x128xf32>
    %564 = vector.broadcast %563 : vector<1x128xf32> to vector<16x128xf32>
    %565 = arith.addf %562, %564 : vector<16x128xf32>
    %c0_335 = arith.constant 0 : index
    %c0_336 = arith.constant 0 : index
    %566 = vector.load %arg22[%c0_335, %c0_336] : memref<16x128xf32, #tpu.memory_space<vmem>>, vector<16x128xf32>
    tpu.vector_store %arg22[%c0_335, %c0_336], %565 {strides = array<i32>} : memref<16x128xf32, #tpu.memory_space<vmem>>, vector<16x128xf32>,
    return
  }
}

</mosaic_0001>

<llo_original>
// kernel: hierarchical_bert_forward.1
$region0: #{hierarchical_bert_forward.1}
  #allocation0 [shape = 'u32[]', space=smem, size = 0x4, offset = 0x4, fixed_abs, tag = 'smem constant byte address 0x4 - core index']
  #allocation1 [shape = 'u32[72,128]{1,0:T(1,128)}', space=vmem, size = 0x9000, scoped, tag = 'internal scratch']
  %s0 = inlined_call_operand.vmem [shape: f32[16,32], index: 0, kind: input, shape index: {}]
  %s1 = inlined_call_operand.vmem [shape: f32[16,16], index: 1, kind: input, shape index: {}]
  %s2 = inlined_call_operand.vmem [shape: f32[1,32], index: 2, kind: input, shape index: {}]
  %s3 = inlined_call_operand.vmem [shape: f32[1,32], index: 3, kind: input, shape index: {}]
  %s4 = inlined_call_operand.vmem [shape: bf16[8,32,8], index: 4, kind: input, shape index: {}]
  %s5 = inlined_call_operand.vmem [shape: f32[8,1,8], index: 5, kind: input, shape index: {}]
  %s6 = inlined_call_operand.vmem [shape: bf16[8,32,8], index: 6, kind: input, shape index: {}]
  %s7 = inlined_call_operand.vmem [shape: f32[8,1,8], index: 7, kind: input, shape index: {}]
  %s8 = inlined_call_operand.vmem [shape: bf16[8,32,8], index: 8, kind: input, shape index: {}]
  %s9 = inlined_call_operand.vmem [shape: f32[8,1,8], index: 9, kind: input, shape index: {}]
  %s10 = inlined_call_operand.vmem [shape: bf16[8,8,32], index: 10, kind: input, shape index: {}]
  %s11 = inlined_call_operand.vmem [shape: f32[2,1,32], index: 11, kind: input, shape index: {}]
  %s12 = inlined_call_operand.vmem [shape: f32[2,1,32], index: 12, kind: input, shape index: {}]
  %s13 = inlined_call_operand.vmem [shape: f32[2,1,32], index: 13, kind: input, shape index: {}]
  %s14 = inlined_call_operand.vmem [shape: bf16[2,32,64], index: 14, kind: input, shape index: {}]
  %s15 = inlined_call_operand.vmem [shape: f32[2,1,64], index: 15, kind: input, shape index: {}]
  %s16 = inlined_call_operand.vmem [shape: bf16[2,64,32], index: 16, kind: input, shape index: {}]
  %s17 = inlined_call_operand.vmem [shape: f32[2,1,32], index: 17, kind: input, shape index: {}]
  %s18 = inlined_call_operand.vmem [shape: f32[2,1,32], index: 18, kind: input, shape index: {}]
  %s19 = inlined_call_operand.vmem [shape: f32[2,1,32], index: 19, kind: input, shape index: {}]
  %s20 = inlined_call_operand.vmem [shape: bf16[32,128], index: 20, kind: input, shape index: {}]
  %s21 = inlined_call_operand.vmem [shape: f32[1,128], index: 21, kind: input, shape index: {}]
  %s22 = inlined_call_operand.vmem [shape: f32[16,128], index: 22, kind: output, shape index: {}]
  %s23 = sld [smem:[#allocation0]]
  $region98: #{hierarchical_bert_forward.1} parent=0
    _
  %s25 = ssub.s32 1, %s23
  %s26 = scalar_select 0, %s25, %s23
  // Predicated region
  $region2: #{hierarchical_bert_forward.1} parent=0 // pred_check
    _
  $region3: #{hierarchical_bert_forward.1} parent=0 // pred_check_branch
    %28 = sbr.rel (0) target = $region5
  $region4: #{hierarchical_bert_forward.1} parent=0 // pred_region
    _
  $region5: #{hierarchical_bert_forward.1} parent=0 // pred_fallthru
    _
  // Predicated region
  $region6: #{hierarchical_bert_forward.1} parent=0 // pred_check
    _
  $region7: #{hierarchical_bert_forward.1} parent=0 // pred_check_branch
    %30 = sbr.rel (0) target = $region9
  $region8: #{hierarchical_bert_forward.1} parent=0 // pred_region
    _
  $region9: #{hierarchical_bert_forward.1} parent=0 // pred_fallthru
    _
  // Predicated region
  $region10: #{hierarchical_bert_forward.1} parent=0 // pred_check
    _
  $region11: #{hierarchical_bert_forward.1} parent=0 // pred_check_branch
    %32 = sbr.rel (0) target = $region13
  $region12: #{hierarchical_bert_forward.1} parent=0 // pred_region
    _
  $region13: #{hierarchical_bert_forward.1} parent=0 // pred_fallthru
    _
  // Predicated region
  $region14: #{hierarchical_bert_forward.1} parent=0 // pred_check
    _
  $region15: #{hierarchical_bert_forward.1} parent=0 // pred_check_branch
    %34 = sbr.rel (0) target = $region17
  $region16: #{hierarchical_bert_forward.1} parent=0 // pred_region
    _
  $region17: #{hierarchical_bert_forward.1} parent=0 // pred_fallthru
    _
  // Predicated region
  $region18: #{hierarchical_bert_forward.1} parent=0 // pred_check
    _
  $region19: #{hierarchical_bert_forward.1} parent=0 // pred_check_branch
    %36 = sbr.rel (0) target = $region21
  $region20: #{hierarchical_bert_forward.1} parent=0 // pred_region
    _
  $region21: #{hierarchical_bert_forward.1} parent=0 // pred_fallthru
    _
  // Predicated region
  $region22: #{hierarchical_bert_forward.1} parent=0 // pred_check
    _
  $region23: #{hierarchical_bert_forward.1} parent=0 // pred_check_branch
    %38 = sbr.rel (0) target = $region25
  $region24: #{hierarchical_bert_forward.1} parent=0 // pred_region
    _
  $region25: #{hierarchical_bert_forward.1} parent=0 // pred_fallthru
    _
  // Predicated region
  $region26: #{hierarchical_bert_forward.1} parent=0 // pred_check
    _
  $region27: #{hierarchical_bert_forward.1} parent=0 // pred_check_branch
    %40 = sbr.rel (0) target = $region29
  $region28: #{hierarchical_bert_forward.1} parent=0 // pred_region
    _
  $region29: #{hierarchical_bert_forward.1} parent=0 // pred_fallthru
    _
  // Predicated region
  $region30: #{hierarchical_bert_forward.1} parent=0 // pred_check
    _
  $region31: #{hierarchical_bert_forward.1} parent=0 // pred_check_branch
    %42 = sbr.rel (0) target = $region33
  $region32: #{hierarchical_bert_forward.1} parent=0 // pred_region
    _
  $region33: #{hierarchical_bert_forward.1} parent=0 // pred_fallthru
    _
  // Predicated region
  $region34: #{hierarchical_bert_forward.1} parent=0 // pred_check
    _
  $region35: #{hierarchical_bert_forward.1} parent=0 // pred_check_branch
    %44 = sbr.rel (0) target = $region37
  $region36: #{hierarchical_bert_forward.1} parent=0 // pred_region
    _
  $region37: #{hierarchical_bert_forward.1} parent=0 // pred_fallthru
    _
  // Predicated region
  $region38: #{hierarchical_bert_forward.1} parent=0 // pred_check
    _
  $region39: #{hierarchical_bert_forward.1} parent=0 // pred_check_branch
    %46 = sbr.rel (0) target = $region41
  $region40: #{hierarchical_bert_forward.1} parent=0 // pred_region
    _
  $region41: #{hierarchical_bert_forward.1} parent=0 // pred_fallthru
    _
  // Predicated region
  $region42: #{hierarchical_bert_forward.1} parent=0 // pred_check
    _
  $region43: #{hierarchical_bert_forward.1} parent=0 // pred_check_branch
    %48 = sbr.rel (0) target = $region45
  $region44: #{hierarchical_bert_forward.1} parent=0 // pred_region
    _
  $region45: #{hierarchical_bert_forward.1} parent=0 // pred_fallthru
    _
  // Predicated region
  $region46: #{hierarchical_bert_forward.1} parent=0 // pred_check
    _
  $region47: #{hierarchical_bert_forward.1} parent=0 // pred_check_branch
    %50 = sbr.rel (0) target = $region49
  $region48: #{hierarchical_bert_forward.1} parent=0 // pred_region
    _
  $region49: #{hierarchical_bert_forward.1} parent=0 // pred_fallthru
    _
  // Predicated region
  $region50: #{hierarchical_bert_forward.1} parent=0 // pred_check
    _
  $region51: #{hierarchical_bert_forward.1} parent=0 // pred_check_branch
    %52 = sbr.rel (0) target = $region53
  $region52: #{hierarchical_bert_forward.1} parent=0 // pred_region
    _
  $region53: #{hierarchical_bert_forward.1} parent=0 // pred_fallthru
    _
  // Predicated region
  $region54: #{hierarchical_bert_forward.1} parent=0 // pred_check
    _
  $region55: #{hierarchical_bert_forward.1} parent=0 // pred_check_branch
    %54 = sbr.rel (0) target = $region57
  $region56: #{hierarchical_bert_forward.1} parent=0 // pred_region
    _
  $region57: #{hierarchical_bert_forward.1} parent=0 // pred_fallthru
    _
  // Predicated region
  $region58: #{hierarchical_bert_forward.1} parent=0 // pred_check
    _
  $region59: #{hierarchical_bert_forward.1} parent=0 // pred_check_branch
    %56 = sbr.rel (0) target = $region61
  $region60: #{hierarchical_bert_forward.1} parent=0 // pred_region
    _
  $region61: #{hierarchical_bert_forward.1} parent=0 // pred_fallthru
    _
  // Predicated region
  $region62: #{hierarchical_bert_forward.1} parent=0 // pred_check
    _
  $region63: #{hierarchical_bert_forward.1} parent=0 // pred_check_branch
    %58 = sbr.rel (0) target = $region65
  $region64: #{hierarchical_bert_forward.1} parent=0 // pred_region
    _
  $region65: #{hierarchical_bert_forward.1} parent=0 // pred_fallthru
    _
  // Predicated region
  $region66: #{hierarchical_bert_forward.1} parent=0 // pred_check
    _
  $region67: #{hierarchical_bert_forward.1} parent=0 // pred_check_branch
    %60 = sbr.rel (0) target = $region69
  $region68: #{hierarchical_bert_forward.1} parent=0 // pred_region
    _
  $region69: #{hierarchical_bert_forward.1} parent=0 // pred_fallthru
    _
  // Predicated region
  $region70: #{hierarchical_bert_forward.1} parent=0 // pred_check
    _
  $region71: #{hierarchical_bert_forward.1} parent=0 // pred_check_branch
    %62 = sbr.rel (0) target = $region73
  $region72: #{hierarchical_bert_forward.1} parent=0 // pred_region
    _
  $region73: #{hierarchical_bert_forward.1} parent=0 // pred_fallthru
    _
  // Predicated region
  $region74: #{hierarchical_bert_forward.1} parent=0 // pred_check
    _
  $region75: #{hierarchical_bert_forward.1} parent=0 // pred_check_branch
    %64 = sbr.rel (0) target = $region77
  $region76: #{hierarchical_bert_forward.1} parent=0 // pred_region
    _
  $region77: #{hierarchical_bert_forward.1} parent=0 // pred_fallthru
    _
  // Predicated region
  $region78: #{hierarchical_bert_forward.1} parent=0 // pred_check
    _
  $region79: #{hierarchical_bert_forward.1} parent=0 // pred_check_branch
    %66 = sbr.rel (0) target = $region81
  $region80: #{hierarchical_bert_forward.1} parent=0 // pred_region
    _
  $region81: #{hierarchical_bert_forward.1} parent=0 // pred_fallthru
    _
  // Predicated region
  $region82: #{hierarchical_bert_forward.1} parent=0 // pred_check
    _
  $region83: #{hierarchical_bert_forward.1} parent=0 // pred_check_branch
    %68 = sbr.rel (0) target = $region85
  $region84: #{hierarchical_bert_forward.1} parent=0 // pred_region
    _
  $region85: #{hierarchical_bert_forward.1} parent=0 // pred_fallthru
    _
  // Predicated region
  $region86: #{hierarchical_bert_forward.1} parent=0 // pred_check
    _
  $region87: #{hierarchical_bert_forward.1} parent=0 // pred_check_branch
    %70 = sbr.rel (0) target = $region89
  $region88: #{hierarchical_bert_forward.1} parent=0 // pred_region
    _
  $region89: #{hierarchical_bert_forward.1} parent=0 // pred_fallthru
    _
  %v72 = vld [vmem:[%s0] sm:$0xff]
  %v73 = vld [vmem:[%s0 + $0x8] sm:$0xff]
  %v74 = vld [vmem:[%s2] sm:$0x1]
  %v75 = vld [vmem:[%s3] sm:$0x1]
  %vm76 = vcmask 261120
  %v77 = vsel %vm76, %v72, 0.0
  %78 = vadd.xlane.f32.xlu0 %v77
  %v79 = vpop.xlane.xlu0 %78
  %v80 = vsel %vm76, %v73, 0.0
  %81 = vadd.xlane.f32.xlu0 %v80
  %v82 = vpop.xlane.xlu0 %81
  %v83 = vrcp.pop 32.0
  %v84 = vmul.f32 32.0, %v83
  %v85 = vsub.f32 1.0, %v84
  %v86 = vmul.f32 %v83, %v85
  %v87 = vadd.f32 %v83, %v86
  %vm88 = vweird.f32 %v83
  %v89 = vsel %vm88, %v83, %v87
  %v90 = vmul.f32 %v79, %v89
  %v91 = vmul.f32 %v82, %v89
  %v92 = vsub.f32 %v72, %v90
  %v93 = vsub.f32 %v73, %v91
  %v94 = vmul.f32 %v92, %v92
  %v95 = vmul.f32 %v93, %v93
  %v96 = vsel %vm76, %v94, 0.0
  %97 = vadd.xlane.f32.xlu0 %v96
  %v98 = vpop.xlane.xlu0 %97
  %v99 = vsel %vm76, %v95, 0.0
  %100 = vadd.xlane.f32.xlu0 %v99
  %v101 = vpop.xlane.xlu0 %100
  %v102 = vmul.f32 %v98, %v89
  %v103 = vmul.f32 %v101, %v89
  %v104 = vadd.f32 %v102, 1e-12
  %v105 = vadd.f32 %v103, 1e-12
  %v106 = vrsqrt.pop %v104
  %v107 = vmul.f32 %v106, %v104
  %v108 = vmul.f32 %v107, %v106
  %v109 = vmul.f32 0.5, %v108
  %v110 = vsub.f32 1.5, %v109
  %v111 = vmul.f32 %v106, %v110
  %vm112 = vweird.f32 %v104
  %vm113 = vweird.f32 %v106
  %vm114 = vmor %vm112, %vm113
  %v115 = vsel %vm114, %v106, %v111
  %v116 = vrsqrt.pop %v105
  %v117 = vmul.f32 %v116, %v105
  %v118 = vmul.f32 %v117, %v116
  %v119 = vmul.f32 0.5, %v118
  %v120 = vsub.f32 1.5, %v119
  %v121 = vmul.f32 %v116, %v120
  %vm122 = vweird.f32 %v105
  %vm123 = vweird.f32 %v116
  %vm124 = vmor %vm122, %vm123
  %v125 = vsel %vm124, %v116, %v121
  %v126 = vmul.f32 %v92, %v115
  %v127 = vmul.f32 %v93, %v125
  %v129 = vperm.slane %v74, 0
  %v131 = vmul.f32 %v126, %v129
  %v132 = vmul.f32 %v127, %v129
  %v134 = vperm.slane %v75, 0
  %v136 = vadd.f32 %v131, %v134
  %v137 = vadd.f32 %v132, %v134
  %v138 = vld [vmem:[%s1] sm:$0xff]
  %v139 = vld [vmem:[%s1 + $0x8] sm:$0xff]
  %v140 = vpack.c.bf16 %v137, %v136
  %v141 = vld [vmem:[%s4] sm:$0xf]
  %v142 = vld [vmem:[%s4 + $0x4] sm:$0xf]
  %v143 = vld [vmem:[%s4 + $0x8] sm:$0xf]
  %v144 = vld [vmem:[%s4 + $0xc] sm:$0xf]
  %v145 = vld [vmem:[%s5] sm:$0x1]
  %v147 = vperm.slane %v145, 0
  %v153 = vunpack.c.l.b16 %v141
  %v154 = vunpack.c.l.b16 %v142
  %v155 = vunpack.c.l.b16 %v143
  %v156 = vunpack.c.l.b16 %v144
  %v157 = vpack.c.b16 %v154, %v153
  %v158 = vpack.c.b16 %v156, %v155
  %v162 = vsel %vm76, %v140, 0
  %164 = vmatpush.bf16.msra.mxu0 0
  %165 = vmatpush.bf16.msra.mxu0 0
  %166 = vmatpush.bf16.msra.mxu0 0
  %167 = vmatpush.bf16.msra.mxu0 0
  %168 = vmatpush.bf16.msra.mxu0 0
  %169 = vmatpush.bf16.msra.mxu0 0
  %170 = vmatpush.bf16.msra.mxu0 %v158
  %171 = vmatpush.bf16.msra.mxu0 %v157
  %172 = vmatmul.bf16.gmra.mxu0 %v162
  %v173 = vpop.f32.mrf.mxu0
  %v174 = vadd.f32 %v147, %v173
  %v175 = vpop.f32.mrf.mxu0
  %v176 = vadd.f32 %v147, %v175
  %177 = vdwg.mxu0
  %v178 = vld [vmem:[%s6] sm:$0xf]
  %v179 = vld [vmem:[%s6 + $0x4] sm:$0xf]
  %v180 = vld [vmem:[%s6 + $0x8] sm:$0xf]
  %v181 = vld [vmem:[%s6 + $0xc] sm:$0xf]
  %v182 = vld [vmem:[%s7] sm:$0x1]
  %v184 = vperm.slane %v182, 0
  %v190 = vunpack.c.l.b16 %v178
  %v191 = vunpack.c.l.b16 %v179
  %v192 = vunpack.c.l.b16 %v180
  %v193 = vunpack.c.l.b16 %v181
  %v194 = vpack.c.b16 %v191, %v190
  %v195 = vpack.c.b16 %v193, %v192
  %198 = vmatpush.bf16.msra.mxu0 0
  %199 = vmatpush.bf16.msra.mxu0 0
  %200 = vmatpush.bf16.msra.mxu0 0
  %201 = vmatpush.bf16.msra.mxu0 0
  %202 = vmatpush.bf16.msra.mxu0 0
  %203 = vmatpush.bf16.msra.mxu0 0
  %204 = vmatpush.bf16.msra.mxu0 %v195
  %205 = vmatpush.bf16.msra.mxu0 %v194
  %206 = vmatmul.bf16.gmra.mxu0 %v162
  %v207 = vpop.f32.mrf.mxu0
  %v208 = vadd.f32 %v184, %v207
  %v209 = vpop.f32.mrf.mxu0
  %v210 = vadd.f32 %v184, %v209
  %211 = vdwg.mxu0
  %v212 = vld [vmem:[%s8] sm:$0xf]
  %v213 = vld [vmem:[%s8 + $0x4] sm:$0xf]
  %v214 = vld [vmem:[%s8 + $0x8] sm:$0xf]
  %v215 = vld [vmem:[%s8 + $0xc] sm:$0xf]
  %v216 = vld [vmem:[%s9] sm:$0x1]
  %v218 = vperm.slane %v216, 0
  %v224 = vunpack.c.l.b16 %v212
  %v225 = vunpack.c.l.b16 %v213
  %v226 = vunpack.c.l.b16 %v214
  %v227 = vunpack.c.l.b16 %v215
  %v228 = vpack.c.b16 %v225, %v224
  %v229 = vpack.c.b16 %v227, %v226
  %232 = vmatpush.bf16.msra.mxu0 0
  %233 = vmatpush.bf16.msra.mxu0 0
  %234 = vmatpush.bf16.msra.mxu0 0
  %235 = vmatpush.bf16.msra.mxu0 0
  %236 = vmatpush.bf16.msra.mxu0 0
  %237 = vmatpush.bf16.msra.mxu0 0
  %238 = vmatpush.bf16.msra.mxu0 %v229
  %239 = vmatpush.bf16.msra.mxu0 %v228
  %240 = vmatmul.bf16.gmra.mxu0 %v162
  %v241 = vpop.f32.mrf.mxu0
  %v242 = vadd.f32 %v218, %v241
  %v243 = vpop.f32.mrf.mxu0
  %v244 = vadd.f32 %v218, %v243
  %245 = vdwg.mxu0
  %v246 = vpack.c.bf16 %v176, %v174
  %v247 = vpack.c.bf16 %v210, %v208
  %vm248 = vcmask 64512
  %v250 = vsel %vm248, %v246, 0
  %v253 = vsel %vm248, %v247, 0
  %255 = vmatpush.bf16.xpose.msra.mxu0 0
  %256 = vmatpush.bf16.xpose.msra.mxu0 0
  %257 = vmatpush.bf16.xpose.msra.mxu0 0
  %258 = vmatpush.bf16.xpose.msra.mxu0 0
  %259 = vmatpush.bf16.xpose.msra.mxu0 0
  %260 = vmatpush.bf16.xpose.msra.mxu0 0
  %261 = vmatpush.bf16.xpose.msra.mxu0 0
  %262 = vmatpush.bf16.xpose.msra.mxu0 %v253
  %263 = vmatmul.bf16.gmra.mxu0 %v250
  %v264 = vpop.f32.mrf.mxu0
  %v265 = vadd.f32 0.0, %v264
  %v266 = vpop.f32.mrf.mxu0
  %v267 = vadd.f32 0.0, %v266
  %268 = vdwg.mxu0
  %v269 = vmul.f32 %v265, 0.35355338
  %v270 = vmul.f32 %v267, 0.35355338
  %v271 = vadd.f32 %v269, %v138
  %v272 = vadd.f32 %v270, %v139
  %vm273 = vcmask 130048
  %v274 = vsel %vm273, %v271, -inf
  %275 = vmax.xlane.f32.xlu0 %v274
  %v276 = vpop.xlane.xlu0 %275
  %v277 = vsel %vm273, %v272, -inf
  %278 = vmax.xlane.f32.xlu0 %v277
  %v279 = vpop.xlane.xlu0 %278
  %v280 = vsub.f32 %v271, %v276
  %v281 = vsub.f32 %v272, %v279
  %v282 = vmul.f32 %v280, 1.442695
  %v283 = vpow.pop %v282
  %v284 = vmul.f32 %v281, 1.442695
  %v285 = vpow.pop %v284
  %v286 = vsel %vm273, %v283, 0.0
  %287 = vadd.xlane.f32.xlu0 %v286
  %v288 = vpop.xlane.xlu0 %287
  %v289 = vsel %vm273, %v285, 0.0
  %290 = vadd.xlane.f32.xlu0 %v289
  %v291 = vpop.xlane.xlu0 %290
  %v292 = vrcp.pop %v288
  %v293 = vrcp.pop %v291
  %v294 = vmul.f32 %v283, %v292
  %v295 = vmul.f32 %v285, %v293
  %v296 = vpack.c.bf16 %v295, %v294
  %v297 = vpack.c.bf16 %v244, %v242
  %v299 = vsel %vm273, %v296, 0
  %301 = vmatpush.bf16.msra.mxu0 0
  %302 = vmatpush.bf16.msra.mxu0 0
  %303 = vmatpush.bf16.msra.mxu0 0
  %304 = vmatpush.bf16.msra.mxu0 0
  %305 = vmatpush.bf16.msra.mxu0 0
  %306 = vmatpush.bf16.msra.mxu0 0
  %307 = vmatpush.bf16.msra.mxu0 0
  %308 = vmatpush.bf16.msra.mxu0 %v297
  %309 = vmatmul.bf16.gmra.mxu0 %v299
  %v310 = vpop.f32.mrf.mxu0
  %v311 = vadd.f32 0.0, %v310
  %v312 = vpop.f32.mrf.mxu0
  %v313 = vadd.f32 0.0, %v312
  %314 = vdwg.mxu0
  %v315 = vpack.c.bf16 %v313, %v311
  %v316 = vld [vmem:[%s10] sm:$0xf]
  %s317 = scalar_lea.vmem %s4, 16
  %v318 = vld [vmem:[%s317] sm:$0xf]
  %v319 = vld [vmem:[%s317 + $0x4] sm:$0xf]
  %v320 = vld [vmem:[%s317 + $0x8] sm:$0xf]
  %v321 = vld [vmem:[%s317 + $0xc] sm:$0xf]
  %s322 = scalar_lea.vmem %s5, 1
  %v323 = vld [vmem:[%s322] sm:$0x1]
  %v325 = vperm.slane %v323, 0
  %v331 = vunpack.c.l.b16 %v318
  %v332 = vunpack.c.l.b16 %v319
  %v333 = vunpack.c.l.b16 %v320
  %v334 = vunpack.c.l.b16 %v321
  %v335 = vpack.c.b16 %v332, %v331
  %v336 = vpack.c.b16 %v334, %v333
  %339 = vmatpush.bf16.msra.mxu0 0
  %340 = vmatpush.bf16.msra.mxu0 0
  %341 = vmatpush.bf16.msra.mxu0 0
  %342 = vmatpush.bf16.msra.mxu0 0
  %343 = vmatpush.bf16.msra.mxu0 0
  %344 = vmatpush.bf16.msra.mxu0 0
  %345 = vmatpush.bf16.msra.mxu0 %v336
  %346 = vmatpush.bf16.msra.mxu0 %v335
  %347 = vmatmul.bf16.gmra.mxu0 %v162
  %v348 = vpop.f32.mrf.mxu0
  %v349 = vadd.f32 %v325, %v348
  %v350 = vpop.f32.mrf.mxu0
  %v351 = vadd.f32 %v325, %v350
  %352 = vdwg.mxu0
  %s353 = scalar_lea.vmem %s6, 16
  %v354 = vld [vmem:[%s353] sm:$0xf]
  %v355 = vld [vmem:[%s353 + $0x4] sm:$0xf]
  %v356 = vld [vmem:[%s353 + $0x8] sm:$0xf]
  %v357 = vld [vmem:[%s353 + $0xc] sm:$0xf]
  %s358 = scalar_lea.vmem %s7, 1
  %v359 = vld [vmem:[%s358] sm:$0x1]
  %v361 = vperm.slane %v359, 0
  %v367 = vunpack.c.l.b16 %v354
  %v368 = vunpack.c.l.b16 %v355
  %v369 = vunpack.c.l.b16 %v356
  %v370 = vunpack.c.l.b16 %v357
  %v371 = vpack.c.b16 %v368, %v367
  %v372 = vpack.c.b16 %v370, %v369
  %375 = vmatpush.bf16.msra.mxu0 0
  %376 = vmatpush.bf16.msra.mxu0 0
  %377 = vmatpush.bf16.msra.mxu0 0
  %378 = vmatpush.bf16.msra.mxu0 0
  %379 = vmatpush.bf16.msra.mxu0 0
  %380 = vmatpush.bf16.msra.mxu0 0
  %381 = vmatpush.bf16.msra.mxu0 %v372
  %382 = vmatpush.bf16.msra.mxu0 %v371
  %383 = vmatmul.bf16.gmra.mxu0 %v162
  %v384 = vpop.f32.mrf.mxu0
  %v385 = vadd.f32 %v361, %v384
  %v386 = vpop.f32.mrf.mxu0
  %v387 = vadd.f32 %v361, %v386
  %388 = vdwg.mxu0
  %s389 = scalar_lea.vmem %s8, 16
  %v390 = vld [vmem:[%s389] sm:$0xf]
  %v391 = vld [vmem:[%s389 + $0x4] sm:$0xf]
  %v392 = vld [vmem:[%s389 + $0x8] sm:$0xf]
  %v393 = vld [vmem:[%s389 + $0xc] sm:$0xf]
  %s394 = scalar_lea.vmem %s9, 1
  %v395 = vld [vmem:[%s394] sm:$0x1]
  %v397 = vperm.slane %v395, 0
  %v403 = vunpack.c.l.b16 %v390
  %v404 = vunpack.c.l.b16 %v391
  %v405 = vunpack.c.l.b16 %v392
  %v406 = vunpack.c.l.b16 %v393
  %v407 = vpack.c.b16 %v404, %v403
  %v408 = vpack.c.b16 %v406, %v405
  %411 = vmatpush.bf16.msra.mxu0 0
  %412 = vmatpush.bf16.msra.mxu0 0
  %413 = vmatpush.bf16.msra.mxu0 0
  %414 = vmatpush.bf16.msra.mxu0 0
  %415 = vmatpush.bf16.msra.mxu0 0
  %416 = vmatpush.bf16.msra.mxu0 0
  %417 = vmatpush.bf16.msra.mxu0 %v408
  %418 = vmatpush.bf16.msra.mxu0 %v407
  %419 = vmatmul.bf16.gmra.mxu0 %v162
  %v420 = vpop.f32.mrf.mxu0
  %v421 = vadd.f32 %v397, %v420
  %v422 = vpop.f32.mrf.mxu0
  %v423 = vadd.f32 %v397, %v422
  %424 = vdwg.mxu0
  %v425 = vpack.c.bf16 %v351, %v349
  %v426 = vpack.c.bf16 %v387, %v385
  %v428 = vsel %vm248, %v425, 0
  %v431 = vsel %vm248, %v426, 0
  %433 = vmatpush.bf16.xpose.msra.mxu0 0
  %434 = vmatpush.bf16.xpose.msra.mxu0 0
  %435 = vmatpush.bf16.xpose.msra.mxu0 0
  %436 = vmatpush.bf16.xpose.msra.mxu0 0
  %437 = vmatpush.bf16.xpose.msra.mxu0 0
  %438 = vmatpush.bf16.xpose.msra.mxu0 0
  %439 = vmatpush.bf16.xpose.msra.mxu0 0
  %440 = vmatpush.bf16.xpose.msra.mxu0 %v431
  %441 = vmatmul.bf16.gmra.mxu0 %v428
  %v442 = vpop.f32.mrf.mxu0
  %v443 = vadd.f32 0.0, %v442
  %v444 = vpop.f32.mrf.mxu0
  %v445 = vadd.f32 0.0, %v444
  %446 = vdwg.mxu0
  %v447 = vmul.f32 %v443, 0.35355338
  %v448 = vmul.f32 %v445, 0.35355338
  %v449 = vadd.f32 %v447, %v138
  %v450 = vadd.f32 %v448, %v139
  %v451 = vsel %vm273, %v449, -inf
  %452 = vmax.xlane.f32.xlu0 %v451
  %v453 = vpop.xlane.xlu0 %452
  %v454 = vsel %vm273, %v450, -inf
  %455 = vmax.xlane.f32.xlu0 %v454
  %v456 = vpop.xlane.xlu0 %455
  %v457 = vsub.f32 %v449, %v453
  %v458 = vsub.f32 %v450, %v456
  %v459 = vmul.f32 %v457, 1.442695
  %v460 = vpow.pop %v459
  %v461 = vmul.f32 %v458, 1.442695
  %v462 = vpow.pop %v461
  %v463 = vsel %vm273, %v460, 0.0
  %464 = vadd.xlane.f32.xlu0 %v463
  %v465 = vpop.xlane.xlu0 %464
  %v466 = vsel %vm273, %v462, 0.0
  %467 = vadd.xlane.f32.xlu0 %v466
  %v468 = vpop.xlane.xlu0 %467
  %v469 = vrcp.pop %v465
  %v470 = vrcp.pop %v468
  %v471 = vmul.f32 %v460, %v469
  %v472 = vmul.f32 %v462, %v470
  %v473 = vpack.c.bf16 %v472, %v471
  %v474 = vpack.c.bf16 %v423, %v421
  %v476 = vsel %vm273, %v473, 0
  %478 = vmatpush.bf16.msra.mxu0 0
  %479 = vmatpush.bf16.msra.mxu0 0
  %480 = vmatpush.bf16.msra.mxu0 0
  %481 = vmatpush.bf16.msra.mxu0 0
  %482 = vmatpush.bf16.msra.mxu0 0
  %483 = vmatpush.bf16.msra.mxu0 0
  %484 = vmatpush.bf16.msra.mxu0 0
  %485 = vmatpush.bf16.msra.mxu0 %v474
  %486 = vmatmul.bf16.gmra.mxu0 %v476
  %v487 = vpop.f32.mrf.mxu0
  %v488 = vadd.f32 0.0, %v487
  %v489 = vpop.f32.mrf.mxu0
  %v490 = vadd.f32 0.0, %v489
  %491 = vdwg.mxu0
  %v492 = vpack.c.bf16 %v490, %v488
  %s493 = scalar_lea.vmem %s10, 4
  %v494 = vld [vmem:[%s493] sm:$0xf]
  %v496 = vsel %vm248, %v492, 0
  %vm498 = vcmask 1043456
  %v500 = vsel %vm498, %v494, 0
  %502 = vmatpush.bf16.msra.mxu0 0
  %503 = vmatpush.bf16.msra.mxu0 0
  %504 = vmatpush.bf16.msra.mxu0 0
  %505 = vmatpush.bf16.msra.mxu0 0
  %506 = vmatpush.bf16.msra.mxu0 0
  %507 = vmatpush.bf16.msra.mxu0 0
  %508 = vmatpush.bf16.msra.mxu0 0
  %509 = vmatpush.bf16.msra.mxu0 %v500
  %510 = vmatmul.bf16.gmra.mxu0 %v496
  %v511 = vpop.f32.mrf.mxu0
  %v512 = vadd.f32 0.0, %v511
  %v513 = vpop.f32.mrf.mxu0
  %v514 = vadd.f32 0.0, %v513
  %515 = vdwg.mxu0
  %v517 = vsel %vm248, %v315, 0
  %v520 = vsel %vm498, %v316, 0
  %522 = vmatpush.bf16.msra.mxu0 0
  %523 = vmatpush.bf16.msra.mxu0 0
  %524 = vmatpush.bf16.msra.mxu0 0
  %525 = vmatpush.bf16.msra.mxu0 0
  %526 = vmatpush.bf16.msra.mxu0 0
  %527 = vmatpush.bf16.msra.mxu0 0
  %528 = vmatpush.bf16.msra.mxu0 0
  %529 = vmatpush.bf16.msra.mxu0 %v520
  %530 = vmatmul.bf16.gmra.mxu0 %v517
  %v531 = vpop.f32.mrf.mxu0
  %v532 = vadd.f32 %v512, %v531
  %v533 = vpop.f32.mrf.mxu0
  %v534 = vadd.f32 %v514, %v533
  %535 = vdwg.mxu0
  %s536 = scalar_lea.vmem %s4, 32
  %v537 = vld [vmem:[%s536] sm:$0xf]
  %v538 = vld [vmem:[%s536 + $0x4] sm:$0xf]
  %v539 = vld [vmem:[%s536 + $0x8] sm:$0xf]
  %v540 = vld [vmem:[%s536 + $0xc] sm:$0xf]
  %s541 = scalar_lea.vmem %s5, 2
  %v542 = vld [vmem:[%s541] sm:$0x1]
  %v544 = vperm.slane %v542, 0
  %v550 = vunpack.c.l.b16 %v537
  %v551 = vunpack.c.l.b16 %v538
  %v552 = vunpack.c.l.b16 %v539
  %v553 = vunpack.c.l.b16 %v540
  %v554 = vpack.c.b16 %v551, %v550
  %v555 = vpack.c.b16 %v553, %v552
  %558 = vmatpush.bf16.msra.mxu0 0
  %559 = vmatpush.bf16.msra.mxu0 0
  %560 = vmatpush.bf16.msra.mxu0 0
  %561 = vmatpush.bf16.msra.mxu0 0
  %562 = vmatpush.bf16.msra.mxu0 0
  %563 = vmatpush.bf16.msra.mxu0 0
  %564 = vmatpush.bf16.msra.mxu0 %v555
  %565 = vmatpush.bf16.msra.mxu0 %v554
  %566 = vmatmul.bf16.gmra.mxu0 %v162
  %v567 = vpop.f32.mrf.mxu0
  %v568 = vadd.f32 %v544, %v567
  %v569 = vpop.f32.mrf.mxu0
  %v570 = vadd.f32 %v544, %v569
  %571 = vdwg.mxu0
  %s572 = scalar_lea.vmem %s6, 32
  %v573 = vld [vmem:[%s572] sm:$0xf]
  %v574 = vld [vmem:[%s572 + $0x4] sm:$0xf]
  %v575 = vld [vmem:[%s572 + $0x8] sm:$0xf]
  %v576 = vld [vmem:[%s572 + $0xc] sm:$0xf]
  %s577 = scalar_lea.vmem %s7, 2
  %v578 = vld [vmem:[%s577] sm:$0x1]
  %v580 = vperm.slane %v578, 0
  %v586 = vunpack.c.l.b16 %v573
  %v587 = vunpack.c.l.b16 %v574
  %v588 = vunpack.c.l.b16 %v575
  %v589 = vunpack.c.l.b16 %v576
  %v590 = vpack.c.b16 %v587, %v586
  %v591 = vpack.c.b16 %v589, %v588
  %594 = vmatpush.bf16.msra.mxu0 0
  %595 = vmatpush.bf16.msra.mxu0 0
  %596 = vmatpush.bf16.msra.mxu0 0
  %597 = vmatpush.bf16.msra.mxu0 0
  %598 = vmatpush.bf16.msra.mxu0 0
  %599 = vmatpush.bf16.msra.mxu0 0
  %600 = vmatpush.bf16.msra.mxu0 %v591
  %601 = vmatpush.bf16.msra.mxu0 %v590
  %602 = vmatmul.bf16.gmra.mxu0 %v162
  %v603 = vpop.f32.mrf.mxu0
  %v604 = vadd.f32 %v580, %v603
  %v605 = vpop.f32.mrf.mxu0
  %v606 = vadd.f32 %v580, %v605
  %607 = vdwg.mxu0
  %s608 = scalar_lea.vmem %s8, 32
  %v609 = vld [vmem:[%s608] sm:$0xf]
  %v610 = vld [vmem:[%s608 + $0x4] sm:$0xf]
  %v611 = vld [vmem:[%s608 + $0x8] sm:$0xf]
  %v612 = vld [vmem:[%s608 + $0xc] sm:$0xf]
  %s613 = scalar_lea.vmem %s9, 2
  %v614 = vld [vmem:[%s613] sm:$0x1]
  %v616 = vperm.slane %v614, 0
  %v622 = vunpack.c.l.b16 %v609
  %v623 = vunpack.c.l.b16 %v610
  %v624 = vunpack.c.l.b16 %v611
  %v625 = vunpack.c.l.b16 %v612
  %v626 = vpack.c.b16 %v623, %v622
  %v627 = vpack.c.b16 %v625, %v624
  %630 = vmatpush.bf16.msra.mxu0 0
  %631 = vmatpush.bf16.msra.mxu0 0
  %632 = vmatpush.bf16.msra.mxu0 0
  %633 = vmatpush.bf16.msra.mxu0 0
  %634 = vmatpush.bf16.msra.mxu0 0
  %635 = vmatpush.bf16.msra.mxu0 0
  %636 = vmatpush.bf16.msra.mxu0 %v627
  %637 = vmatpush.bf16.msra.mxu0 %v626
  %638 = vmatmul.bf16.gmra.mxu0 %v162
  %v639 = vpop.f32.mrf.mxu0
  %v640 = vadd.f32 %v616, %v639
  %v641 = vpop.f32.mrf.mxu0
  %v642 = vadd.f32 %v616, %v641
  %643 = vdwg.mxu0
  %v644 = vpack.c.bf16 %v570, %v568
  %v645 = vpack.c.bf16 %v606, %v604
  %v647 = vsel %vm248, %v644, 0
  %v650 = vsel %vm248, %v645, 0
  %652 = vmatpush.bf16.xpose.msra.mxu0 0
  %653 = vmatpush.bf16.xpose.msra.mxu0 0
  %654 = vmatpush.bf16.xpose.msra.mxu0 0
  %655 = vmatpush.bf16.xpose.msra.mxu0 0
  %656 = vmatpush.bf16.xpose.msra.mxu0 0
  %657 = vmatpush.bf16.xpose.msra.mxu0 0
  %658 = vmatpush.bf16.xpose.msra.mxu0 0
  %659 = vmatpush.bf16.xpose.msra.mxu0 %v650
  %660 = vmatmul.bf16.gmra.mxu0 %v647
  %v661 = vpop.f32.mrf.mxu0
  %v662 = vadd.f32 0.0, %v661
  %v663 = vpop.f32.mrf.mxu0
  %v664 = vadd.f32 0.0, %v663
  %665 = vdwg.mxu0
  %v666 = vmul.f32 %v662, 0.35355338
  %v667 = vmul.f32 %v664, 0.35355338
  %v668 = vadd.f32 %v666, %v138
  %v669 = vadd.f32 %v667, %v139
  %v670 = vsel %vm273, %v668, -inf
  %671 = vmax.xlane.f32.xlu0 %v670
  %v672 = vpop.xlane.xlu0 %671
  %v673 = vsel %vm273, %v669, -inf
  %674 = vmax.xlane.f32.xlu0 %v673
  %v675 = vpop.xlane.xlu0 %674
  %v676 = vsub.f32 %v668, %v672
  %v677 = vsub.f32 %v669, %v675
  %v678 = vmul.f32 %v676, 1.442695
  %v679 = vpow.pop %v678
  %v680 = vmul.f32 %v677, 1.442695
  %v681 = vpow.pop %v680
  %v682 = vsel %vm273, %v679, 0.0
  %683 = vadd.xlane.f32.xlu0 %v682
  %v684 = vpop.xlane.xlu0 %683
  %v685 = vsel %vm273, %v681, 0.0
  %686 = vadd.xlane.f32.xlu0 %v685
  %v687 = vpop.xlane.xlu0 %686
  %v688 = vrcp.pop %v684
  %v689 = vrcp.pop %v687
  %v690 = vmul.f32 %v679, %v688
  %v691 = vmul.f32 %v681, %v689
  %v692 = vpack.c.bf16 %v691, %v690
  %v693 = vpack.c.bf16 %v642, %v640
  %v695 = vsel %vm273, %v692, 0
  %697 = vmatpush.bf16.msra.mxu0 0
  %698 = vmatpush.bf16.msra.mxu0 0
  %699 = vmatpush.bf16.msra.mxu0 0
  %700 = vmatpush.bf16.msra.mxu0 0
  %701 = vmatpush.bf16.msra.mxu0 0
  %702 = vmatpush.bf16.msra.mxu0 0
  %703 = vmatpush.bf16.msra.mxu0 0
  %704 = vmatpush.bf16.msra.mxu0 %v693
  %705 = vmatmul.bf16.gmra.mxu0 %v695
  %v706 = vpop.f32.mrf.mxu0
  %v707 = vadd.f32 0.0, %v706
  %v708 = vpop.f32.mrf.mxu0
  %v709 = vadd.f32 0.0, %v708
  %710 = vdwg.mxu0
  %v711 = vpack.c.bf16 %v709, %v707
  %s712 = scalar_lea.vmem %s10, 8
  %v713 = vld [vmem:[%s712] sm:$0xf]
  %v715 = vsel %vm248, %v711, 0
  %v718 = vsel %vm498, %v713, 0
  %720 = vmatpush.bf16.msra.mxu0 0
  %721 = vmatpush.bf16.msra.mxu0 0
  %722 = vmatpush.bf16.msra.mxu0 0
  %723 = vmatpush.bf16.msra.mxu0 0
  %724 = vmatpush.bf16.msra.mxu0 0
  %725 = vmatpush.bf16.msra.mxu0 0
  %726 = vmatpush.bf16.msra.mxu0 0
  %727 = vmatpush.bf16.msra.mxu0 %v718
  %728 = vmatmul.bf16.gmra.mxu0 %v715
  %v729 = vpop.f32.mrf.mxu0
  %v730 = vadd.f32 0.0, %v729
  %v731 = vpop.f32.mrf.mxu0
  %v732 = vadd.f32 0.0, %v731
  %733 = vdwg.mxu0
  %v734 = vadd.f32 %v532, %v730
  %v735 = vadd.f32 %v534, %v732
  %s736 = scalar_lea.vmem %s4, 48
  %v737 = vld [vmem:[%s736] sm:$0xf]
  %v738 = vld [vmem:[%s736 + $0x4] sm:$0xf]
  %v739 = vld [vmem:[%s736 + $0x8] sm:$0xf]
  %v740 = vld [vmem:[%s736 + $0xc] sm:$0xf]
  %s741 = scalar_lea.vmem %s5, 3
  %v742 = vld [vmem:[%s741] sm:$0x1]
  %v744 = vperm.slane %v742, 0
  %v750 = vunpack.c.l.b16 %v737
  %v751 = vunpack.c.l.b16 %v738
  %v752 = vunpack.c.l.b16 %v739
  %v753 = vunpack.c.l.b16 %v740
  %v754 = vpack.c.b16 %v751, %v750
  %v755 = vpack.c.b16 %v753, %v752
  %758 = vmatpush.bf16.msra.mxu0 0
  %759 = vmatpush.bf16.msra.mxu0 0
  %760 = vmatpush.bf16.msra.mxu0 0
  %761 = vmatpush.bf16.msra.mxu0 0
  %762 = vmatpush.bf16.msra.mxu0 0
  %763 = vmatpush.bf16.msra.mxu0 0
  %764 = vmatpush.bf16.msra.mxu0 %v755
  %765 = vmatpush.bf16.msra.mxu0 %v754
  %766 = vmatmul.bf16.gmra.mxu0 %v162
  %v767 = vpop.f32.mrf.mxu0
  %v768 = vadd.f32 %v744, %v767
  %v769 = vpop.f32.mrf.mxu0
  %v770 = vadd.f32 %v744, %v769
  %771 = vdwg.mxu0
  %s772 = scalar_lea.vmem %s6, 48
  %v773 = vld [vmem:[%s772] sm:$0xf]
  %v774 = vld [vmem:[%s772 + $0x4] sm:$0xf]
  %v775 = vld [vmem:[%s772 + $0x8] sm:$0xf]
  %v776 = vld [vmem:[%s772 + $0xc] sm:$0xf]
  %s777 = scalar_lea.vmem %s7, 3
  %v778 = vld [vmem:[%s777] sm:$0x1]
  %v780 = vperm.slane %v778, 0
  %v786 = vunpack.c.l.b16 %v773
  %v787 = vunpack.c.l.b16 %v774
  %v788 = vunpack.c.l.b16 %v775
  %v789 = vunpack.c.l.b16 %v776
  %v790 = vpack.c.b16 %v787, %v786
  %v791 = vpack.c.b16 %v789, %v788
  %794 = vmatpush.bf16.msra.mxu0 0
  %795 = vmatpush.bf16.msra.mxu0 0
  %796 = vmatpush.bf16.msra.mxu0 0
  %797 = vmatpush.bf16.msra.mxu0 0
  %798 = vmatpush.bf16.msra.mxu0 0
  %799 = vmatpush.bf16.msra.mxu0 0
  %800 = vmatpush.bf16.msra.mxu0 %v791
  %801 = vmatpush.bf16.msra.mxu0 %v790
  %802 = vmatmul.bf16.gmra.mxu0 %v162
  %v803 = vpop.f32.mrf.mxu0
  %v804 = vadd.f32 %v780, %v803
  %v805 = vpop.f32.mrf.mxu0
  %v806 = vadd.f32 %v780, %v805
  %807 = vdwg.mxu0
  %s808 = scalar_lea.vmem %s8, 48
  %v809 = vld [vmem:[%s808] sm:$0xf]
  %v810 = vld [vmem:[%s808 + $0x4] sm:$0xf]
  %v811 = vld [vmem:[%s808 + $0x8] sm:$0xf]
  %v812 = vld [vmem:[%s808 + $0xc] sm:$0xf]
  %s813 = scalar_lea.vmem %s9, 3
  %v814 = vld [vmem:[%s813] sm:$0x1]
  %v816 = vperm.slane %v814, 0
  %v822 = vunpack.c.l.b16 %v809
  %v823 = vunpack.c.l.b16 %v810
  %v824 = vunpack.c.l.b16 %v811
  %v825 = vunpack.c.l.b16 %v812
  %v826 = vpack.c.b16 %v823, %v822
  %v827 = vpack.c.b16 %v825, %v824
  %830 = vmatpush.bf16.msra.mxu0 0
  %831 = vmatpush.bf16.msra.mxu0 0
  %832 = vmatpush.bf16.msra.mxu0 0
  %833 = vmatpush.bf16.msra.mxu0 0
  %834 = vmatpush.bf16.msra.mxu0 0
  %835 = vmatpush.bf16.msra.mxu0 0
  %836 = vmatpush.bf16.msra.mxu0 %v827
  %837 = vmatpush.bf16.msra.mxu0 %v826
  %838 = vmatmul.bf16.gmra.mxu0 %v162
  %v839 = vpop.f32.mrf.mxu0
  %v840 = vadd.f32 %v816, %v839
  %v841 = vpop.f32.mrf.mxu0
  %v842 = vadd.f32 %v816, %v841
  %843 = vdwg.mxu0
  %v844 = vpack.c.bf16 %v770, %v768
  %v845 = vpack.c.bf16 %v806, %v804
  %v847 = vsel %vm248, %v844, 0
  %v850 = vsel %vm248, %v845, 0
  %852 = vmatpush.bf16.xpose.msra.mxu0 0
  %853 = vmatpush.bf16.xpose.msra.mxu0 0
  %854 = vmatpush.bf16.xpose.msra.mxu0 0
  %855 = vmatpush.bf16.xpose.msra.mxu0 0
  %856 = vmatpush.bf16.xpose.msra.mxu0 0
  %857 = vmatpush.bf16.xpose.msra.mxu0 0
  %858 = vmatpush.bf16.xpose.msra.mxu0 0
  %859 = vmatpush.bf16.xpose.msra.mxu0 %v850
  %860 = vmatmul.bf16.gmra.mxu0 %v847
  %v861 = vpop.f32.mrf.mxu0
  %v862 = vadd.f32 0.0, %v861
  %v863 = vpop.f32.mrf.mxu0
  %v864 = vadd.f32 0.0, %v863
  %865 = vdwg.mxu0
  %v866 = vmul.f32 %v862, 0.35355338
  %v867 = vmul.f32 %v864, 0.35355338
  %v868 = vadd.f32 %v866, %v138
  %v869 = vadd.f32 %v867, %v139
  %v870 = vsel %vm273, %v868, -inf
  %871 = vmax.xlane.f32.xlu0 %v870
  %v872 = vpop.xlane.xlu0 %871
  %v873 = vsel %vm273, %v869, -inf
  %874 = vmax.xlane.f32.xlu0 %v873
  %v875 = vpop.xlane.xlu0 %874
  %v876 = vsub.f32 %v868, %v872
  %v877 = vsub.f32 %v869, %v875
  %v878 = vmul.f32 %v876, 1.442695
  %v879 = vpow.pop %v878
  %v880 = vmul.f32 %v877, 1.442695
  %v881 = vpow.pop %v880
  %v882 = vsel %vm273, %v879, 0.0
  %883 = vadd.xlane.f32.xlu0 %v882
  %v884 = vpop.xlane.xlu0 %883
  %v885 = vsel %vm273, %v881, 0.0
  %886 = vadd.xlane.f32.xlu0 %v885
  %v887 = vpop.xlane.xlu0 %886
  %v888 = vrcp.pop %v884
  %v889 = vrcp.pop %v887
  %v890 = vmul.f32 %v879, %v888
  %v891 = vmul.f32 %v881, %v889
  %v892 = vpack.c.bf16 %v891, %v890
  %v893 = vpack.c.bf16 %v842, %v840
  %v895 = vsel %vm273, %v892, 0
  %897 = vmatpush.bf16.msra.mxu0 0
  %898 = vmatpush.bf16.msra.mxu0 0
  %899 = vmatpush.bf16.msra.mxu0 0
  %900 = vmatpush.bf16.msra.mxu0 0
  %901 = vmatpush.bf16.msra.mxu0 0
  %902 = vmatpush.bf16.msra.mxu0 0
  %903 = vmatpush.bf16.msra.mxu0 0
  %904 = vmatpush.bf16.msra.mxu0 %v893
  %905 = vmatmul.bf16.gmra.mxu0 %v895
  %v906 = vpop.f32.mrf.mxu0
  %v907 = vadd.f32 0.0, %v906
  %v908 = vpop.f32.mrf.mxu0
  %v909 = vadd.f32 0.0, %v908
  %910 = vdwg.mxu0
  %v911 = vpack.c.bf16 %v909, %v907
  %s912 = scalar_lea.vmem %s10, 12
  %v913 = vld [vmem:[%s912] sm:$0xf]
  %v915 = vsel %vm248, %v911, 0
  %v918 = vsel %vm498, %v913, 0
  %920 = vmatpush.bf16.msra.mxu0 0
  %921 = vmatpush.bf16.msra.mxu0 0
  %922 = vmatpush.bf16.msra.mxu0 0
  %923 = vmatpush.bf16.msra.mxu0 0
  %924 = vmatpush.bf16.msra.mxu0 0
  %925 = vmatpush.bf16.msra.mxu0 0
  %926 = vmatpush.bf16.msra.mxu0 0
  %927 = vmatpush.bf16.msra.mxu0 %v918
  %928 = vmatmul.bf16.gmra.mxu0 %v915
  %v929 = vpop.f32.mrf.mxu0
  %v930 = vadd.f32 0.0, %v929
  %v931 = vpop.f32.mrf.mxu0
  %v932 = vadd.f32 0.0, %v931
  %933 = vdwg.mxu0
  %v934 = vadd.f32 %v734, %v930
  %v935 = vadd.f32 %v735, %v932
  %v936 = vld [vmem:[%s11] sm:$0x1]
  %v938 = vperm.slane %v936, 0
  %v940 = vadd.f32 %v934, %v938
  %v941 = vadd.f32 %v935, %v938
  %v942 = vadd.f32 %v940, %v136
  %v943 = vadd.f32 %v941, %v137
  %v944 = vld [vmem:[%s12] sm:$0x1]
  %v945 = vld [vmem:[%s13] sm:$0x1]
  %v946 = vsel %vm76, %v942, 0.0
  %947 = vadd.xlane.f32.xlu0 %v946
  %v948 = vpop.xlane.xlu0 %947
  %v949 = vsel %vm76, %v943, 0.0
  %950 = vadd.xlane.f32.xlu0 %v949
  %v951 = vpop.xlane.xlu0 %950
  %v952 = vmul.f32 %v948, %v89
  %v953 = vmul.f32 %v951, %v89
  %v954 = vsub.f32 %v942, %v952
  %v955 = vsub.f32 %v943, %v953
  %v956 = vmul.f32 %v954, %v954
  %v957 = vmul.f32 %v955, %v955
  %v958 = vsel %vm76, %v956, 0.0
  %959 = vadd.xlane.f32.xlu0 %v958
  %v960 = vpop.xlane.xlu0 %959
  %v961 = vsel %vm76, %v957, 0.0
  %962 = vadd.xlane.f32.xlu0 %v961
  %v963 = vpop.xlane.xlu0 %962
  %v964 = vmul.f32 %v960, %v89
  %v965 = vmul.f32 %v963, %v89
  %v966 = vadd.f32 %v964, 1e-12
  %v967 = vadd.f32 %v965, 1e-12
  %v968 = vrsqrt.pop %v966
  %v969 = vmul.f32 %v968, %v966
  %v970 = vmul.f32 %v969, %v968
  %v971 = vmul.f32 0.5, %v970
  %v972 = vsub.f32 1.5, %v971
  %v973 = vmul.f32 %v968, %v972
  %vm974 = vweird.f32 %v966
  %vm975 = vweird.f32 %v968
  %vm976 = vmor %vm974, %vm975
  %v977 = vsel %vm976, %v968, %v973
  %v978 = vrsqrt.pop %v967
  %v979 = vmul.f32 %v978, %v967
  %v980 = vmul.f32 %v979, %v978
  %v981 = vmul.f32 0.5, %v980
  %v982 = vsub.f32 1.5, %v981
  %v983 = vmul.f32 %v978, %v982
  %vm984 = vweird.f32 %v967
  %vm985 = vweird.f32 %v978
  %vm986 = vmor %vm984, %vm985
  %v987 = vsel %vm986, %v978, %v983
  %v988 = vmul.f32 %v954, %v977
  %v989 = vmul.f32 %v955, %v987
  %v991 = vperm.slane %v944, 0
  %v993 = vmul.f32 %v988, %v991
  %v994 = vmul.f32 %v989, %v991
  %v996 = vperm.slane %v945, 0
  %v998 = vadd.f32 %v993, %v996
  %v999 = vadd.f32 %v994, %v996
  %v1000 = vpack.c.bf16 %v999, %v998
  %v1001 = vld [vmem:[%s14] sm:$0xf]
  %v1002 = vld [vmem:[%s14 + $0x4] sm:$0xf]
  %v1003 = vld [vmem:[%s14 + $0x8] sm:$0xf]
  %v1004 = vld [vmem:[%s14 + $0xc] sm:$0xf]
  %v1005 = vld [vmem:[%s15] sm:$0x1]
  %v1007 = vperm.slane %v1005, 0
  %v1013 = vunpack.c.l.b16 %v1001
  %v1014 = vunpack.c.l.b16 %v1002
  %v1015 = vunpack.c.l.b16 %v1003
  %v1016 = vunpack.c.l.b16 %v1004
  %v1017 = vpack.c.b16 %v1014, %v1013
  %v1018 = vpack.c.b16 %v1016, %v1015
  %v1022 = vsel %vm76, %v1000, 0
  %1024 = vmatpush.bf16.msra.mxu0 0
  %1025 = vmatpush.bf16.msra.mxu0 0
  %1026 = vmatpush.bf16.msra.mxu0 0
  %1027 = vmatpush.bf16.msra.mxu0 0
  %1028 = vmatpush.bf16.msra.mxu0 0
  %1029 = vmatpush.bf16.msra.mxu0 0
  %1030 = vmatpush.bf16.msra.mxu0 %v1018
  %1031 = vmatpush.bf16.msra.mxu0 %v1017
  %1032 = vmatmul.bf16.gmra.mxu0 %v1022
  %v1033 = vpop.f32.mrf.mxu0
  %v1034 = vadd.f32 %v1007, %v1033
  %v1035 = vpop.f32.mrf.mxu0
  %v1036 = vadd.f32 %v1007, %v1035
  %1037 = vdwg.mxu0
  %v1038 = vmul.f32 %v1034, %v1034
  %v1039 = vmul.f32 %v1036, %v1036
  %v1040 = vmul.f32 %v1034, %v1038
  %v1041 = vmul.f32 %v1036, %v1039
  %v1042 = vmul.f32 %v1040, 0.044715
  %v1043 = vmul.f32 %v1041, 0.044715
  %v1044 = vadd.f32 %v1034, %v1042
  %v1045 = vadd.f32 %v1036, %v1043
  %v1046 = vmul.f32 %v1044, 0.7978846
  %v1047 = vmul.f32 %v1045, 0.7978846
  %v1048 = vtanh.pop %v1046
  %v1049 = vtanh.pop %v1047
  %v1050 = vadd.f32 %v1048, 1.0
  %v1051 = vadd.f32 %v1049, 1.0
  %v1052 = vmul.f32 %v1050, 0.5
  %v1053 = vmul.f32 %v1051, 0.5
  %v1054 = vmul.f32 %v1034, %v1052
  %v1055 = vmul.f32 %v1036, %v1053
  %v1056 = vpack.c.bf16 %v1055, %v1054
  %v1057 = vld [vmem:[%s16] sm:$0xf]
  %v1058 = vld [vmem:[%s16 + $0x4] sm:$0xf]
  %v1059 = vld [vmem:[%s16 + $0x8] sm:$0xf]
  %v1060 = vld [vmem:[%s16 + $0xc] sm:$0xf]
  %v1061 = vld [vmem:[%s16 + $0x10] sm:$0xf]
  %v1062 = vld [vmem:[%s16 + $0x14] sm:$0xf]
  %v1063 = vld [vmem:[%s16 + $0x18] sm:$0xf]
  %v1064 = vld [vmem:[%s16 + $0x1c] sm:$0xf]
  %v1065 = vld [vmem:[%s17] sm:$0x1]
  %v1067 = vperm.slane %v1065, 0
  %v1077 = vunpack.c.l.b16 %v1057
  %v1078 = vunpack.c.l.b16 %v1058
  %v1079 = vunpack.c.l.b16 %v1059
  %v1080 = vunpack.c.l.b16 %v1060
  %v1081 = vunpack.c.l.b16 %v1061
  %v1082 = vunpack.c.l.b16 %v1062
  %v1083 = vunpack.c.l.b16 %v1063
  %v1084 = vunpack.c.l.b16 %v1064
  %v1085 = vpack.c.b16 %v1078, %v1077
  %v1086 = vpack.c.b16 %v1080, %v1079
  %v1087 = vpack.c.b16 %v1082, %v1081
  %v1088 = vpack.c.b16 %v1084, %v1083
  %vm1093 = vcmask 523264
  %v1095 = vsel %vm1093, %v1056, 0
  %1097 = vmatpush.bf16.msra.mxu0 0
  %1098 = vmatpush.bf16.msra.mxu0 0
  %1099 = vmatpush.bf16.msra.mxu0 0
  %1100 = vmatpush.bf16.msra.mxu0 0
  %1101 = vmatpush.bf16.msra.mxu0 %v1088
  %1102 = vmatpush.bf16.msra.mxu0 %v1087
  %1103 = vmatpush.bf16.msra.mxu0 %v1086
  %1104 = vmatpush.bf16.msra.mxu0 %v1085
  %1105 = vmatmul.bf16.gmra.mxu0 %v1095
  %v1106 = vpop.f32.mrf.mxu0
  %v1107 = vadd.f32 %v1067, %v1106
  %v1108 = vpop.f32.mrf.mxu0
  %v1109 = vadd.f32 %v1067, %v1108
  %1110 = vdwg.mxu0
  %v1111 = vadd.f32 %v1107, %v998
  %v1112 = vadd.f32 %v1109, %v999
  %v1113 = vld [vmem:[%s18] sm:$0x1]
  %v1114 = vld [vmem:[%s19] sm:$0x1]
  %v1115 = vsel %vm76, %v1111, 0.0
  %1116 = vadd.xlane.f32.xlu0 %v1115
  %v1117 = vpop.xlane.xlu0 %1116
  %v1118 = vsel %vm76, %v1112, 0.0
  %1119 = vadd.xlane.f32.xlu0 %v1118
  %v1120 = vpop.xlane.xlu0 %1119
  %v1121 = vmul.f32 %v1117, %v89
  %v1122 = vmul.f32 %v1120, %v89
  %v1123 = vsub.f32 %v1111, %v1121
  %v1124 = vsub.f32 %v1112, %v1122
  %v1125 = vmul.f32 %v1123, %v1123
  %v1126 = vmul.f32 %v1124, %v1124
  %v1127 = vsel %vm76, %v1125, 0.0
  %1128 = vadd.xlane.f32.xlu0 %v1127
  %v1129 = vpop.xlane.xlu0 %1128
  %v1130 = vsel %vm76, %v1126, 0.0
  %1131 = vadd.xlane.f32.xlu0 %v1130
  %v1132 = vpop.xlane.xlu0 %1131
  %v1133 = vmul.f32 %v1129, %v89
  %v1134 = vmul.f32 %v1132, %v89
  %v1135 = vadd.f32 %v1133, 1e-12
  %v1136 = vadd.f32 %v1134, 1e-12
  %v1137 = vrsqrt.pop %v1135
  %v1138 = vmul.f32 %v1137, %v1135
  %v1139 = vmul.f32 %v1138, %v1137
  %v1140 = vmul.f32 0.5, %v1139
  %v1141 = vsub.f32 1.5, %v1140
  %v1142 = vmul.f32 %v1137, %v1141
  %vm1143 = vweird.f32 %v1135
  %vm1144 = vweird.f32 %v1137
  %vm1145 = vmor %vm1143, %vm1144
  %v1146 = vsel %vm1145, %v1137, %v1142
  %v1147 = vrsqrt.pop %v1136
  %v1148 = vmul.f32 %v1147, %v1136
  %v1149 = vmul.f32 %v1148, %v1147
  %v1150 = vmul.f32 0.5, %v1149
  %v1151 = vsub.f32 1.5, %v1150
  %v1152 = vmul.f32 %v1147, %v1151
  %vm1153 = vweird.f32 %v1136
  %vm1154 = vweird.f32 %v1147
  %vm1155 = vmor %vm1153, %vm1154
  %v1156 = vsel %vm1155, %v1147, %v1152
  %v1157 = vmul.f32 %v1123, %v1146
  %v1158 = vmul.f32 %v1124, %v1156
  %v1160 = vperm.slane %v1113, 0
  %v1162 = vmul.f32 %v1157, %v1160
  %v1163 = vmul.f32 %v1158, %v1160
  %v1165 = vperm.slane %v1114, 0
  %v1167 = vadd.f32 %v1162, %v1165
  %v1168 = vadd.f32 %v1163, %v1165
  %v1169 = vpack.c.bf16 %v1168, %v1167
  %s1170 = scalar_lea.vmem %s4, 64
  %v1171 = vld [vmem:[%s1170] sm:$0xf]
  %v1172 = vld [vmem:[%s1170 + $0x4] sm:$0xf]
  %v1173 = vld [vmem:[%s1170 + $0x8] sm:$0xf]
  %v1174 = vld [vmem:[%s1170 + $0xc] sm:$0xf]
  %s1175 = scalar_lea.vmem %s5, 4
  %v1176 = vld [vmem:[%s1175] sm:$0x1]
  %v1178 = vperm.slane %v1176, 0
  %v1184 = vunpack.c.l.b16 %v1171
  %v1185 = vunpack.c.l.b16 %v1172
  %v1186 = vunpack.c.l.b16 %v1173
  %v1187 = vunpack.c.l.b16 %v1174
  %v1188 = vpack.c.b16 %v1185, %v1184
  %v1189 = vpack.c.b16 %v1187, %v1186
  %v1193 = vsel %vm76, %v1169, 0
  %1195 = vmatpush.bf16.msra.mxu0 0
  %1196 = vmatpush.bf16.msra.mxu0 0
  %1197 = vmatpush.bf16.msra.mxu0 0
  %1198 = vmatpush.bf16.msra.mxu0 0
  %1199 = vmatpush.bf16.msra.mxu0 0
  %1200 = vmatpush.bf16.msra.mxu0 0
  %1201 = vmatpush.bf16.msra.mxu0 %v1189
  %1202 = vmatpush.bf16.msra.mxu0 %v1188
  %1203 = vmatmul.bf16.gmra.mxu0 %v1193
  %v1204 = vpop.f32.mrf.mxu0
  %v1205 = vadd.f32 %v1178, %v1204
  %v1206 = vpop.f32.mrf.mxu0
  %v1207 = vadd.f32 %v1178, %v1206
  %1208 = vdwg.mxu0
  %s1209 = scalar_lea.vmem %s6, 64
  %v1210 = vld [vmem:[%s1209] sm:$0xf]
  %v1211 = vld [vmem:[%s1209 + $0x4] sm:$0xf]
  %v1212 = vld [vmem:[%s1209 + $0x8] sm:$0xf]
  %v1213 = vld [vmem:[%s1209 + $0xc] sm:$0xf]
  %s1214 = scalar_lea.vmem %s7, 4
  %v1215 = vld [vmem:[%s1214] sm:$0x1]
  %v1217 = vperm.slane %v1215, 0
  %v1223 = vunpack.c.l.b16 %v1210
  %v1224 = vunpack.c.l.b16 %v1211
  %v1225 = vunpack.c.l.b16 %v1212
  %v1226 = vunpack.c.l.b16 %v1213
  %v1227 = vpack.c.b16 %v1224, %v1223
  %v1228 = vpack.c.b16 %v1226, %v1225
  %1231 = vmatpush.bf16.msra.mxu0 0
  %1232 = vmatpush.bf16.msra.mxu0 0
  %1233 = vmatpush.bf16.msra.mxu0 0
  %1234 = vmatpush.bf16.msra.mxu0 0
  %1235 = vmatpush.bf16.msra.mxu0 0
  %1236 = vmatpush.bf16.msra.mxu0 0
  %1237 = vmatpush.bf16.msra.mxu0 %v1228
  %1238 = vmatpush.bf16.msra.mxu0 %v1227
  %1239 = vmatmul.bf16.gmra.mxu0 %v1193
  %v1240 = vpop.f32.mrf.mxu0
  %v1241 = vadd.f32 %v1217, %v1240
  %v1242 = vpop.f32.mrf.mxu0
  %v1243 = vadd.f32 %v1217, %v1242
  %1244 = vdwg.mxu0
  %s1245 = scalar_lea.vmem %s8, 64
  %v1246 = vld [vmem:[%s1245] sm:$0xf]
  %v1247 = vld [vmem:[%s1245 + $0x4] sm:$0xf]
  %v1248 = vld [vmem:[%s1245 + $0x8] sm:$0xf]
  %v1249 = vld [vmem:[%s1245 + $0xc] sm:$0xf]
  %s1250 = scalar_lea.vmem %s9, 4
  %v1251 = vld [vmem:[%s1250] sm:$0x1]
  %v1253 = vperm.slane %v1251, 0
  %v1259 = vunpack.c.l.b16 %v1246
  %v1260 = vunpack.c.l.b16 %v1247
  %v1261 = vunpack.c.l.b16 %v1248
  %v1262 = vunpack.c.l.b16 %v1249
  %v1263 = vpack.c.b16 %v1260, %v1259
  %v1264 = vpack.c.b16 %v1262, %v1261
  %1267 = vmatpush.bf16.msra.mxu0 0
  %1268 = vmatpush.bf16.msra.mxu0 0
  %1269 = vmatpush.bf16.msra.mxu0 0
  %1270 = vmatpush.bf16.msra.mxu0 0
  %1271 = vmatpush.bf16.msra.mxu0 0
  %1272 = vmatpush.bf16.msra.mxu0 0
  %1273 = vmatpush.bf16.msra.mxu0 %v1264
  %1274 = vmatpush.bf16.msra.mxu0 %v1263
  %1275 = vmatmul.bf16.gmra.mxu0 %v1193
  %v1276 = vpop.f32.mrf.mxu0
  %v1277 = vadd.f32 %v1253, %v1276
  %v1278 = vpop.f32.mrf.mxu0
  %v1279 = vadd.f32 %v1253, %v1278
  %1280 = vdwg.mxu0
  %v1281 = vpack.c.bf16 %v1207, %v1205
  %v1282 = vpack.c.bf16 %v1243, %v1241
  %v1284 = vsel %vm248, %v1281, 0
  %v1287 = vsel %vm248, %v1282, 0
  %1289 = vmatpush.bf16.xpose.msra.mxu0 0
  %1290 = vmatpush.bf16.xpose.msra.mxu0 0
  %1291 = vmatpush.bf16.xpose.msra.mxu0 0
  %1292 = vmatpush.bf16.xpose.msra.mxu0 0
  %1293 = vmatpush.bf16.xpose.msra.mxu0 0
  %1294 = vmatpush.bf16.xpose.msra.mxu0 0
  %1295 = vmatpush.bf16.xpose.msra.mxu0 0
  %1296 = vmatpush.bf16.xpose.msra.mxu0 %v1287
  %1297 = vmatmul.bf16.gmra.mxu0 %v1284
  %v1298 = vpop.f32.mrf.mxu0
  %v1299 = vadd.f32 0.0, %v1298
  %v1300 = vpop.f32.mrf.mxu0
  %v1301 = vadd.f32 0.0, %v1300
  %1302 = vdwg.mxu0
  %v1303 = vmul.f32 %v1299, 0.35355338
  %v1304 = vmul.f32 %v1301, 0.35355338
  %v1305 = vadd.f32 %v1303, %v138
  %v1306 = vadd.f32 %v1304, %v139
  %v1307 = vsel %vm273, %v1305, -inf
  %1308 = vmax.xlane.f32.xlu0 %v1307
  %v1309 = vpop.xlane.xlu0 %1308
  %v1310 = vsel %vm273, %v1306, -inf
  %1311 = vmax.xlane.f32.xlu0 %v1310
  %v1312 = vpop.xlane.xlu0 %1311
  %v1313 = vsub.f32 %v1305, %v1309
  %v1314 = vsub.f32 %v1306, %v1312
  %v1315 = vmul.f32 %v1313, 1.442695
  %v1316 = vpow.pop %v1315
  %v1317 = vmul.f32 %v1314, 1.442695
  %v1318 = vpow.pop %v1317
  %v1319 = vsel %vm273, %v1316, 0.0
  %1320 = vadd.xlane.f32.xlu0 %v1319
  %v1321 = vpop.xlane.xlu0 %1320
  %v1322 = vsel %vm273, %v1318, 0.0
  %1323 = vadd.xlane.f32.xlu0 %v1322
  %v1324 = vpop.xlane.xlu0 %1323
  %v1325 = vrcp.pop %v1321
  %v1326 = vrcp.pop %v1324
  %v1327 = vmul.f32 %v1316, %v1325
  %v1328 = vmul.f32 %v1318, %v1326
  %v1329 = vpack.c.bf16 %v1328, %v1327
  %v1330 = vpack.c.bf16 %v1279, %v1277
  %v1332 = vsel %vm273, %v1329, 0
  %1334 = vmatpush.bf16.msra.mxu0 0
  %1335 = vmatpush.bf16.msra.mxu0 0
  %1336 = vmatpush.bf16.msra.mxu0 0
  %1337 = vmatpush.bf16.msra.mxu0 0
  %1338 = vmatpush.bf16.msra.mxu0 0
  %1339 = vmatpush.bf16.msra.mxu0 0
  %1340 = vmatpush.bf16.msra.mxu0 0
  %1341 = vmatpush.bf16.msra.mxu0 %v1330
  %1342 = vmatmul.bf16.gmra.mxu0 %v1332
  %v1343 = vpop.f32.mrf.mxu0
  %v1344 = vadd.f32 0.0, %v1343
  %v1345 = vpop.f32.mrf.mxu0
  %v1346 = vadd.f32 0.0, %v1345
  %1347 = vdwg.mxu0
  %v1348 = vpack.c.bf16 %v1346, %v1344
  %s1349 = scalar_lea.vmem %s10, 16
  %v1350 = vld [vmem:[%s1349] sm:$0xf]
  %s1351 = scalar_lea.vmem %s4, 80
  %v1352 = vld [vmem:[%s1351] sm:$0xf]
  %v1353 = vld [vmem:[%s1351 + $0x4] sm:$0xf]
  %v1354 = vld [vmem:[%s1351 + $0x8] sm:$0xf]
  %v1355 = vld [vmem:[%s1351 + $0xc] sm:$0xf]
  %s1356 = scalar_lea.vmem %s5, 5
  %v1357 = vld [vmem:[%s1356] sm:$0x1]
  %v1359 = vperm.slane %v1357, 0
  %v1365 = vunpack.c.l.b16 %v1352
  %v1366 = vunpack.c.l.b16 %v1353
  %v1367 = vunpack.c.l.b16 %v1354
  %v1368 = vunpack.c.l.b16 %v1355
  %v1369 = vpack.c.b16 %v1366, %v1365
  %v1370 = vpack.c.b16 %v1368, %v1367
  %1373 = vmatpush.bf16.msra.mxu0 0
  %1374 = vmatpush.bf16.msra.mxu0 0
  %1375 = vmatpush.bf16.msra.mxu0 0
  %1376 = vmatpush.bf16.msra.mxu0 0
  %1377 = vmatpush.bf16.msra.mxu0 0
  %1378 = vmatpush.bf16.msra.mxu0 0
  %1379 = vmatpush.bf16.msra.mxu0 %v1370
  %1380 = vmatpush.bf16.msra.mxu0 %v1369
  %1381 = vmatmul.bf16.gmra.mxu0 %v1193
  %v1382 = vpop.f32.mrf.mxu0
  %v1383 = vadd.f32 %v1359, %v1382
  %v1384 = vpop.f32.mrf.mxu0
  %v1385 = vadd.f32 %v1359, %v1384
  %1386 = vdwg.mxu0
  %s1387 = scalar_lea.vmem %s6, 80
  %v1388 = vld [vmem:[%s1387] sm:$0xf]
  %v1389 = vld [vmem:[%s1387 + $0x4] sm:$0xf]
  %v1390 = vld [vmem:[%s1387 + $0x8] sm:$0xf]
  %v1391 = vld [vmem:[%s1387 + $0xc] sm:$0xf]
  %s1392 = scalar_lea.vmem %s7, 5
  %v1393 = vld [vmem:[%s1392] sm:$0x1]
  %v1395 = vperm.slane %v1393, 0
  %v1401 = vunpack.c.l.b16 %v1388
  %v1402 = vunpack.c.l.b16 %v1389
  %v1403 = vunpack.c.l.b16 %v1390
  %v1404 = vunpack.c.l.b16 %v1391
  %v1405 = vpack.c.b16 %v1402, %v1401
  %v1406 = vpack.c.b16 %v1404, %v1403
  %1409 = vmatpush.bf16.msra.mxu0 0
  %1410 = vmatpush.bf16.msra.mxu0 0
  %1411 = vmatpush.bf16.msra.mxu0 0
  %1412 = vmatpush.bf16.msra.mxu0 0
  %1413 = vmatpush.bf16.msra.mxu0 0
  %1414 = vmatpush.bf16.msra.mxu0 0
  %1415 = vmatpush.bf16.msra.mxu0 %v1406
  %1416 = vmatpush.bf16.msra.mxu0 %v1405
  %1417 = vmatmul.bf16.gmra.mxu0 %v1193
  %v1418 = vpop.f32.mrf.mxu0
  %v1419 = vadd.f32 %v1395, %v1418
  %v1420 = vpop.f32.mrf.mxu0
  %v1421 = vadd.f32 %v1395, %v1420
  %1422 = vdwg.mxu0
  %s1423 = scalar_lea.vmem %s8, 80
  %v1424 = vld [vmem:[%s1423] sm:$0xf]
  %v1425 = vld [vmem:[%s1423 + $0x4] sm:$0xf]
  %v1426 = vld [vmem:[%s1423 + $0x8] sm:$0xf]
  %v1427 = vld [vmem:[%s1423 + $0xc] sm:$0xf]
  %s1428 = scalar_lea.vmem %s9, 5
  %v1429 = vld [vmem:[%s1428] sm:$0x1]
  %v1431 = vperm.slane %v1429, 0
  %v1437 = vunpack.c.l.b16 %v1424
  %v1438 = vunpack.c.l.b16 %v1425
  %v1439 = vunpack.c.l.b16 %v1426
  %v1440 = vunpack.c.l.b16 %v1427
  %v1441 = vpack.c.b16 %v1438, %v1437
  %v1442 = vpack.c.b16 %v1440, %v1439
  %1445 = vmatpush.bf16.msra.mxu0 0
  %1446 = vmatpush.bf16.msra.mxu0 0
  %1447 = vmatpush.bf16.msra.mxu0 0
  %1448 = vmatpush.bf16.msra.mxu0 0
  %1449 = vmatpush.bf16.msra.mxu0 0
  %1450 = vmatpush.bf16.msra.mxu0 0
  %1451 = vmatpush.bf16.msra.mxu0 %v1442
  %1452 = vmatpush.bf16.msra.mxu0 %v1441
  %1453 = vmatmul.bf16.gmra.mxu0 %v1193
  %v1454 = vpop.f32.mrf.mxu0
  %v1455 = vadd.f32 %v1431, %v1454
  %v1456 = vpop.f32.mrf.mxu0
  %v1457 = vadd.f32 %v1431, %v1456
  %1458 = vdwg.mxu0
  %v1459 = vpack.c.bf16 %v1385, %v1383
  %v1460 = vpack.c.bf16 %v1421, %v1419
  %v1462 = vsel %vm248, %v1459, 0
  %v1465 = vsel %vm248, %v1460, 0
  %1467 = vmatpush.bf16.xpose.msra.mxu0 0
  %1468 = vmatpush.bf16.xpose.msra.mxu0 0
  %1469 = vmatpush.bf16.xpose.msra.mxu0 0
  %1470 = vmatpush.bf16.xpose.msra.mxu0 0
  %1471 = vmatpush.bf16.xpose.msra.mxu0 0
  %1472 = vmatpush.bf16.xpose.msra.mxu0 0
  %1473 = vmatpush.bf16.xpose.msra.mxu0 0
  %1474 = vmatpush.bf16.xpose.msra.mxu0 %v1465
  %1475 = vmatmul.bf16.gmra.mxu0 %v1462
  %v1476 = vpop.f32.mrf.mxu0
  %v1477 = vadd.f32 0.0, %v1476
  %v1478 = vpop.f32.mrf.mxu0
  %v1479 = vadd.f32 0.0, %v1478
  %1480 = vdwg.mxu0
  %v1481 = vmul.f32 %v1477, 0.35355338
  %v1482 = vmul.f32 %v1479, 0.35355338
  %v1483 = vadd.f32 %v1481, %v138
  %v1484 = vadd.f32 %v1482, %v139
  %v1485 = vsel %vm273, %v1483, -inf
  %1486 = vmax.xlane.f32.xlu0 %v1485
  %v1487 = vpop.xlane.xlu0 %1486
  %v1488 = vsel %vm273, %v1484, -inf
  %1489 = vmax.xlane.f32.xlu0 %v1488
  %v1490 = vpop.xlane.xlu0 %1489
  %v1491 = vsub.f32 %v1483, %v1487
  %v1492 = vsub.f32 %v1484, %v1490
  %v1493 = vmul.f32 %v1491, 1.442695
  %v1494 = vpow.pop %v1493
  %v1495 = vmul.f32 %v1492, 1.442695
  %v1496 = vpow.pop %v1495
  %v1497 = vsel %vm273, %v1494, 0.0
  %1498 = vadd.xlane.f32.xlu0 %v1497
  %v1499 = vpop.xlane.xlu0 %1498
  %v1500 = vsel %vm273, %v1496, 0.0
  %1501 = vadd.xlane.f32.xlu0 %v1500
  %v1502 = vpop.xlane.xlu0 %1501
  %v1503 = vrcp.pop %v1499
  %v1504 = vrcp.pop %v1502
  %v1505 = vmul.f32 %v1494, %v1503
  %v1506 = vmul.f32 %v1496, %v1504
  %v1507 = vpack.c.bf16 %v1506, %v1505
  %v1508 = vpack.c.bf16 %v1457, %v1455
  %v1510 = vsel %vm273, %v1507, 0
  %1512 = vmatpush.bf16.msra.mxu0 0
  %1513 = vmatpush.bf16.msra.mxu0 0
  %1514 = vmatpush.bf16.msra.mxu0 0
  %1515 = vmatpush.bf16.msra.mxu0 0
  %1516 = vmatpush.bf16.msra.mxu0 0
  %1517 = vmatpush.bf16.msra.mxu0 0
  %1518 = vmatpush.bf16.msra.mxu0 0
  %1519 = vmatpush.bf16.msra.mxu0 %v1508
  %1520 = vmatmul.bf16.gmra.mxu0 %v1510
  %v1521 = vpop.f32.mrf.mxu0
  %v1522 = vadd.f32 0.0, %v1521
  %v1523 = vpop.f32.mrf.mxu0
  %v1524 = vadd.f32 0.0, %v1523
  %1525 = vdwg.mxu0
  %v1526 = vpack.c.bf16 %v1524, %v1522
  %s1527 = scalar_lea.vmem %s10, 20
  %v1528 = vld [vmem:[%s1527] sm:$0xf]
  %v1530 = vsel %vm248, %v1526, 0
  %v1533 = vsel %vm498, %v1528, 0
  %1535 = vmatpush.bf16.msra.mxu0 0
  %1536 = vmatpush.bf16.msra.mxu0 0
  %1537 = vmatpush.bf16.msra.mxu0 0
  %1538 = vmatpush.bf16.msra.mxu0 0
  %1539 = vmatpush.bf16.msra.mxu0 0
  %1540 = vmatpush.bf16.msra.mxu0 0
  %1541 = vmatpush.bf16.msra.mxu0 0
  %1542 = vmatpush.bf16.msra.mxu0 %v1533
  %1543 = vmatmul.bf16.gmra.mxu0 %v1530
  %v1544 = vpop.f32.mrf.mxu0
  %v1545 = vadd.f32 0.0, %v1544
  %v1546 = vpop.f32.mrf.mxu0
  %v1547 = vadd.f32 0.0, %v1546
  %1548 = vdwg.mxu0
  %v1550 = vsel %vm248, %v1348, 0
  %v1553 = vsel %vm498, %v1350, 0
  %1555 = vmatpush.bf16.msra.mxu0 0
  %1556 = vmatpush.bf16.msra.mxu0 0
  %1557 = vmatpush.bf16.msra.mxu0 0
  %1558 = vmatpush.bf16.msra.mxu0 0
  %1559 = vmatpush.bf16.msra.mxu0 0
  %1560 = vmatpush.bf16.msra.mxu0 0
  %1561 = vmatpush.bf16.msra.mxu0 0
  %1562 = vmatpush.bf16.msra.mxu0 %v1553
  %1563 = vmatmul.bf16.gmra.mxu0 %v1550
  %v1564 = vpop.f32.mrf.mxu0
  %v1565 = vadd.f32 %v1545, %v1564
  %v1566 = vpop.f32.mrf.mxu0
  %v1567 = vadd.f32 %v1547, %v1566
  %1568 = vdwg.mxu0
  %s1569 = scalar_lea.vmem %s4, 96
  %v1570 = vld [vmem:[%s1569] sm:$0xf]
  %v1571 = vld [vmem:[%s1569 + $0x4] sm:$0xf]
  %v1572 = vld [vmem:[%s1569 + $0x8] sm:$0xf]
  %v1573 = vld [vmem:[%s1569 + $0xc] sm:$0xf]
  %s1574 = scalar_lea.vmem %s5, 6
  %v1575 = vld [vmem:[%s1574] sm:$0x1]
  %v1577 = vperm.slane %v1575, 0
  %v1583 = vunpack.c.l.b16 %v1570
  %v1584 = vunpack.c.l.b16 %v1571
  %v1585 = vunpack.c.l.b16 %v1572
  %v1586 = vunpack.c.l.b16 %v1573
  %v1587 = vpack.c.b16 %v1584, %v1583
  %v1588 = vpack.c.b16 %v1586, %v1585
  %1591 = vmatpush.bf16.msra.mxu0 0
  %1592 = vmatpush.bf16.msra.mxu0 0
  %1593 = vmatpush.bf16.msra.mxu0 0
  %1594 = vmatpush.bf16.msra.mxu0 0
  %1595 = vmatpush.bf16.msra.mxu0 0
  %1596 = vmatpush.bf16.msra.mxu0 0
  %1597 = vmatpush.bf16.msra.mxu0 %v1588
  %1598 = vmatpush.bf16.msra.mxu0 %v1587
  %1599 = vmatmul.bf16.gmra.mxu0 %v1193
  %v1600 = vpop.f32.mrf.mxu0
  %v1601 = vadd.f32 %v1577, %v1600
  %v1602 = vpop.f32.mrf.mxu0
  %v1603 = vadd.f32 %v1577, %v1602
  %1604 = vdwg.mxu0
  %s1605 = scalar_lea.vmem %s6, 96
  %v1606 = vld [vmem:[%s1605] sm:$0xf]
  %v1607 = vld [vmem:[%s1605 + $0x4] sm:$0xf]
  %v1608 = vld [vmem:[%s1605 + $0x8] sm:$0xf]
  %v1609 = vld [vmem:[%s1605 + $0xc] sm:$0xf]
  %s1610 = scalar_lea.vmem %s7, 6
  %v1611 = vld [vmem:[%s1610] sm:$0x1]
  %v1613 = vperm.slane %v1611, 0
  %v1619 = vunpack.c.l.b16 %v1606
  %v1620 = vunpack.c.l.b16 %v1607
  %v1621 = vunpack.c.l.b16 %v1608
  %v1622 = vunpack.c.l.b16 %v1609
  %v1623 = vpack.c.b16 %v1620, %v1619
  %v1624 = vpack.c.b16 %v1622, %v1621
  %1627 = vmatpush.bf16.msra.mxu0 0
  %1628 = vmatpush.bf16.msra.mxu0 0
  %1629 = vmatpush.bf16.msra.mxu0 0
  %1630 = vmatpush.bf16.msra.mxu0 0
  %1631 = vmatpush.bf16.msra.mxu0 0
  %1632 = vmatpush.bf16.msra.mxu0 0
  %1633 = vmatpush.bf16.msra.mxu0 %v1624
  %1634 = vmatpush.bf16.msra.mxu0 %v1623
  %1635 = vmatmul.bf16.gmra.mxu0 %v1193
  %v1636 = vpop.f32.mrf.mxu0
  %v1637 = vadd.f32 %v1613, %v1636
  %v1638 = vpop.f32.mrf.mxu0
  %v1639 = vadd.f32 %v1613, %v1638
  %1640 = vdwg.mxu0
  %s1641 = scalar_lea.vmem %s8, 96
  %v1642 = vld [vmem:[%s1641] sm:$0xf]
  %v1643 = vld [vmem:[%s1641 + $0x4] sm:$0xf]
  %v1644 = vld [vmem:[%s1641 + $0x8] sm:$0xf]
  %v1645 = vld [vmem:[%s1641 + $0xc] sm:$0xf]
  %s1646 = scalar_lea.vmem %s9, 6
  %v1647 = vld [vmem:[%s1646] sm:$0x1]
  %v1649 = vperm.slane %v1647, 0
  %v1655 = vunpack.c.l.b16 %v1642
  %v1656 = vunpack.c.l.b16 %v1643
  %v1657 = vunpack.c.l.b16 %v1644
  %v1658 = vunpack.c.l.b16 %v1645
  %v1659 = vpack.c.b16 %v1656, %v1655
  %v1660 = vpack.c.b16 %v1658, %v1657
  %1663 = vmatpush.bf16.msra.mxu0 0
  %1664 = vmatpush.bf16.msra.mxu0 0
  %1665 = vmatpush.bf16.msra.mxu0 0
  %1666 = vmatpush.bf16.msra.mxu0 0
  %1667 = vmatpush.bf16.msra.mxu0 0
  %1668 = vmatpush.bf16.msra.mxu0 0
  %1669 = vmatpush.bf16.msra.mxu0 %v1660
  %1670 = vmatpush.bf16.msra.mxu0 %v1659
  %1671 = vmatmul.bf16.gmra.mxu0 %v1193
  %v1672 = vpop.f32.mrf.mxu0
  %v1673 = vadd.f32 %v1649, %v1672
  %v1674 = vpop.f32.mrf.mxu0
  %v1675 = vadd.f32 %v1649, %v1674
  %1676 = vdwg.mxu0
  %v1677 = vpack.c.bf16 %v1603, %v1601
  %v1678 = vpack.c.bf16 %v1639, %v1637
  %v1680 = vsel %vm248, %v1677, 0
  %v1683 = vsel %vm248, %v1678, 0
  %1685 = vmatpush.bf16.xpose.msra.mxu0 0
  %1686 = vmatpush.bf16.xpose.msra.mxu0 0
  %1687 = vmatpush.bf16.xpose.msra.mxu0 0
  %1688 = vmatpush.bf16.xpose.msra.mxu0 0
  %1689 = vmatpush.bf16.xpose.msra.mxu0 0
  %1690 = vmatpush.bf16.xpose.msra.mxu0 0
  %1691 = vmatpush.bf16.xpose.msra.mxu0 0
  %1692 = vmatpush.bf16.xpose.msra.mxu0 %v1683
  %1693 = vmatmul.bf16.gmra.mxu0 %v1680
  %v1694 = vpop.f32.mrf.mxu0
  %v1695 = vadd.f32 0.0, %v1694
  %v1696 = vpop.f32.mrf.mxu0
  %v1697 = vadd.f32 0.0, %v1696
  %1698 = vdwg.mxu0
  %v1699 = vmul.f32 %v1695, 0.35355338
  %v1700 = vmul.f32 %v1697, 0.35355338
  %v1701 = vadd.f32 %v1699, %v138
  %v1702 = vadd.f32 %v1700, %v139
  %v1703 = vsel %vm273, %v1701, -inf
  %1704 = vmax.xlane.f32.xlu0 %v1703
  %v1705 = vpop.xlane.xlu0 %1704
  %v1706 = vsel %vm273, %v1702, -inf
  %1707 = vmax.xlane.f32.xlu0 %v1706
  %v1708 = vpop.xlane.xlu0 %1707
  %v1709 = vsub.f32 %v1701, %v1705
  %v1710 = vsub.f32 %v1702, %v1708
  %v1711 = vmul.f32 %v1709, 1.442695
  %v1712 = vpow.pop %v1711
  %v1713 = vmul.f32 %v1710, 1.442695
  %v1714 = vpow.pop %v1713
  %v1715 = vsel %vm273, %v1712, 0.0
  %1716 = vadd.xlane.f32.xlu0 %v1715
  %v1717 = vpop.xlane.xlu0 %1716
  %v1718 = vsel %vm273, %v1714, 0.0
  %1719 = vadd.xlane.f32.xlu0 %v1718
  %v1720 = vpop.xlane.xlu0 %1719
  %v1721 = vrcp.pop %v1717
  %v1722 = vrcp.pop %v1720
  %v1723 = vmul.f32 %v1712, %v1721
  %v1724 = vmul.f32 %v1714, %v1722
  %v1725 = vpack.c.bf16 %v1724, %v1723
  %v1726 = vpack.c.bf16 %v1675, %v1673
  %v1728 = vsel %vm273, %v1725, 0
  %1730 = vmatpush.bf16.msra.mxu0 0
  %1731 = vmatpush.bf16.msra.mxu0 0
  %1732 = vmatpush.bf16.msra.mxu0 0
  %1733 = vmatpush.bf16.msra.mxu0 0
  %1734 = vmatpush.bf16.msra.mxu0 0
  %1735 = vmatpush.bf16.msra.mxu0 0
  %1736 = vmatpush.bf16.msra.mxu0 0
  %1737 = vmatpush.bf16.msra.mxu0 %v1726
  %1738 = vmatmul.bf16.gmra.mxu0 %v1728
  %v1739 = vpop.f32.mrf.mxu0
  %v1740 = vadd.f32 0.0, %v1739
  %v1741 = vpop.f32.mrf.mxu0
  %v1742 = vadd.f32 0.0, %v1741
  %1743 = vdwg.mxu0
  %v1744 = vpack.c.bf16 %v1742, %v1740
  %s1745 = scalar_lea.vmem %s10, 24
  %v1746 = vld [vmem:[%s1745] sm:$0xf]
  %v1748 = vsel %vm248, %v1744, 0
  %v1751 = vsel %vm498, %v1746, 0
  %1753 = vmatpush.bf16.msra.mxu0 0
  %1754 = vmatpush.bf16.msra.mxu0 0
  %1755 = vmatpush.bf16.msra.mxu0 0
  %1756 = vmatpush.bf16.msra.mxu0 0
  %1757 = vmatpush.bf16.msra.mxu0 0
  %1758 = vmatpush.bf16.msra.mxu0 0
  %1759 = vmatpush.bf16.msra.mxu0 0
  %1760 = vmatpush.bf16.msra.mxu0 %v1751
  %1761 = vmatmul.bf16.gmra.mxu0 %v1748
  %v1762 = vpop.f32.mrf.mxu0
  %v1763 = vadd.f32 0.0, %v1762
  %v1764 = vpop.f32.mrf.mxu0
  %v1765 = vadd.f32 0.0, %v1764
  %1766 = vdwg.mxu0
  %v1767 = vadd.f32 %v1565, %v1763
  %v1768 = vadd.f32 %v1567, %v1765
  %s1769 = scalar_lea.vmem %s4, 112
  %v1770 = vld [vmem:[%s1769] sm:$0xf]
  %v1771 = vld [vmem:[%s1769 + $0x4] sm:$0xf]
  %v1772 = vld [vmem:[%s1769 + $0x8] sm:$0xf]
  %v1773 = vld [vmem:[%s1769 + $0xc] sm:$0xf]
  %s1774 = scalar_lea.vmem %s5, 7
  %v1775 = vld [vmem:[%s1774] sm:$0x1]
  %v1777 = vperm.slane %v1775, 0
  %v1783 = vunpack.c.l.b16 %v1770
  %v1784 = vunpack.c.l.b16 %v1771
  %v1785 = vunpack.c.l.b16 %v1772
  %v1786 = vunpack.c.l.b16 %v1773
  %v1787 = vpack.c.b16 %v1784, %v1783
  %v1788 = vpack.c.b16 %v1786, %v1785
  %1791 = vmatpush.bf16.msra.mxu0 0
  %1792 = vmatpush.bf16.msra.mxu0 0
  %1793 = vmatpush.bf16.msra.mxu0 0
  %1794 = vmatpush.bf16.msra.mxu0 0
  %1795 = vmatpush.bf16.msra.mxu0 0
  %1796 = vmatpush.bf16.msra.mxu0 0
  %1797 = vmatpush.bf16.msra.mxu0 %v1788
  %1798 = vmatpush.bf16.msra.mxu0 %v1787
  %1799 = vmatmul.bf16.gmra.mxu0 %v1193
  %v1800 = vpop.f32.mrf.mxu0
  %v1801 = vadd.f32 %v1777, %v1800
  %v1802 = vpop.f32.mrf.mxu0
  %v1803 = vadd.f32 %v1777, %v1802
  %1804 = vdwg.mxu0
  %s1805 = scalar_lea.vmem %s6, 112
  %v1806 = vld [vmem:[%s1805] sm:$0xf]
  %v1807 = vld [vmem:[%s1805 + $0x4] sm:$0xf]
  %v1808 = vld [vmem:[%s1805 + $0x8] sm:$0xf]
  %v1809 = vld [vmem:[%s1805 + $0xc] sm:$0xf]
  %s1810 = scalar_lea.vmem %s7, 7
  %v1811 = vld [vmem:[%s1810] sm:$0x1]
  %v1813 = vperm.slane %v1811, 0
  %v1819 = vunpack.c.l.b16 %v1806
  %v1820 = vunpack.c.l.b16 %v1807
  %v1821 = vunpack.c.l.b16 %v1808
  %v1822 = vunpack.c.l.b16 %v1809
  %v1823 = vpack.c.b16 %v1820, %v1819
  %v1824 = vpack.c.b16 %v1822, %v1821
  %1827 = vmatpush.bf16.msra.mxu0 0
  %1828 = vmatpush.bf16.msra.mxu0 0
  %1829 = vmatpush.bf16.msra.mxu0 0
  %1830 = vmatpush.bf16.msra.mxu0 0
  %1831 = vmatpush.bf16.msra.mxu0 0
  %1832 = vmatpush.bf16.msra.mxu0 0
  %1833 = vmatpush.bf16.msra.mxu0 %v1824
  %1834 = vmatpush.bf16.msra.mxu0 %v1823
  %1835 = vmatmul.bf16.gmra.mxu0 %v1193
  %v1836 = vpop.f32.mrf.mxu0
  %v1837 = vadd.f32 %v1813, %v1836
  %v1838 = vpop.f32.mrf.mxu0
  %v1839 = vadd.f32 %v1813, %v1838
  %1840 = vdwg.mxu0
  %s1841 = scalar_lea.vmem %s8, 112
  %v1842 = vld [vmem:[%s1841] sm:$0xf]
  %v1843 = vld [vmem:[%s1841 + $0x4] sm:$0xf]
  %v1844 = vld [vmem:[%s1841 + $0x8] sm:$0xf]
  %v1845 = vld [vmem:[%s1841 + $0xc] sm:$0xf]
  %s1846 = scalar_lea.vmem %s9, 7
  %v1847 = vld [vmem:[%s1846] sm:$0x1]
  %v1849 = vperm.slane %v1847, 0
  %v1855 = vunpack.c.l.b16 %v1842
  %v1856 = vunpack.c.l.b16 %v1843
  %v1857 = vunpack.c.l.b16 %v1844
  %v1858 = vunpack.c.l.b16 %v1845
  %v1859 = vpack.c.b16 %v1856, %v1855
  %v1860 = vpack.c.b16 %v1858, %v1857
  %1863 = vmatpush.bf16.msra.mxu0 0
  %1864 = vmatpush.bf16.msra.mxu0 0
  %1865 = vmatpush.bf16.msra.mxu0 0
  %1866 = vmatpush.bf16.msra.mxu0 0
  %1867 = vmatpush.bf16.msra.mxu0 0
  %1868 = vmatpush.bf16.msra.mxu0 0
  %1869 = vmatpush.bf16.msra.mxu0 %v1860
  %1870 = vmatpush.bf16.msra.mxu0 %v1859
  %1871 = vmatmul.bf16.gmra.mxu0 %v1193
  %v1872 = vpop.f32.mrf.mxu0
  %v1873 = vadd.f32 %v1849, %v1872
  %v1874 = vpop.f32.mrf.mxu0
  %v1875 = vadd.f32 %v1849, %v1874
  %1876 = vdwg.mxu0
  %v1877 = vpack.c.bf16 %v1803, %v1801
  %v1878 = vpack.c.bf16 %v1839, %v1837
  %v1880 = vsel %vm248, %v1877, 0
  %v1883 = vsel %vm248, %v1878, 0
  %1885 = vmatpush.bf16.xpose.msra.mxu0 0
  %1886 = vmatpush.bf16.xpose.msra.mxu0 0
  %1887 = vmatpush.bf16.xpose.msra.mxu0 0
  %1888 = vmatpush.bf16.xpose.msra.mxu0 0
  %1889 = vmatpush.bf16.xpose.msra.mxu0 0
  %1890 = vmatpush.bf16.xpose.msra.mxu0 0
  %1891 = vmatpush.bf16.xpose.msra.mxu0 0
  %1892 = vmatpush.bf16.xpose.msra.mxu0 %v1883
  %1893 = vmatmul.bf16.gmra.mxu0 %v1880
  %v1894 = vpop.f32.mrf.mxu0
  %v1895 = vadd.f32 0.0, %v1894
  %v1896 = vpop.f32.mrf.mxu0
  %v1897 = vadd.f32 0.0, %v1896
  %1898 = vdwg.mxu0
  %v1899 = vmul.f32 %v1895, 0.35355338
  %v1900 = vmul.f32 %v1897, 0.35355338
  %v1901 = vadd.f32 %v1899, %v138
  %v1902 = vadd.f32 %v1900, %v139
  %v1903 = vsel %vm273, %v1901, -inf
  %1904 = vmax.xlane.f32.xlu0 %v1903
  %v1905 = vpop.xlane.xlu0 %1904
  %v1906 = vsel %vm273, %v1902, -inf
  %1907 = vmax.xlane.f32.xlu0 %v1906
  %v1908 = vpop.xlane.xlu0 %1907
  %v1909 = vsub.f32 %v1901, %v1905
  %v1910 = vsub.f32 %v1902, %v1908
  %v1911 = vmul.f32 %v1909, 1.442695
  %v1912 = vpow.pop %v1911
  %v1913 = vmul.f32 %v1910, 1.442695
  %v1914 = vpow.pop %v1913
  %v1915 = vsel %vm273, %v1912, 0.0
  %1916 = vadd.xlane.f32.xlu0 %v1915
  %v1917 = vpop.xlane.xlu0 %1916
  %v1918 = vsel %vm273, %v1914, 0.0
  %1919 = vadd.xlane.f32.xlu0 %v1918
  %v1920 = vpop.xlane.xlu0 %1919
  %v1921 = vrcp.pop %v1917
  %v1922 = vrcp.pop %v1920
  %v1923 = vmul.f32 %v1912, %v1921
  %v1924 = vmul.f32 %v1914, %v1922
  %v1925 = vpack.c.bf16 %v1924, %v1923
  %v1926 = vpack.c.bf16 %v1875, %v1873
  %v1928 = vsel %vm273, %v1925, 0
  %1930 = vmatpush.bf16.msra.mxu0 0
  %1931 = vmatpush.bf16.msra.mxu0 0
  %1932 = vmatpush.bf16.msra.mxu0 0
  %1933 = vmatpush.bf16.msra.mxu0 0
  %1934 = vmatpush.bf16.msra.mxu0 0
  %1935 = vmatpush.bf16.msra.mxu0 0
  %1936 = vmatpush.bf16.msra.mxu0 0
  %1937 = vmatpush.bf16.msra.mxu0 %v1926
  %1938 = vmatmul.bf16.gmra.mxu0 %v1928
  %v1939 = vpop.f32.mrf.mxu0
  %v1940 = vadd.f32 0.0, %v1939
  %v1941 = vpop.f32.mrf.mxu0
  %v1942 = vadd.f32 0.0, %v1941
  %1943 = vdwg.mxu0
  %v1944 = vpack.c.bf16 %v1942, %v1940
  %s1945 = scalar_lea.vmem %s10, 28
  %v1946 = vld [vmem:[%s1945] sm:$0xf]
  %v1948 = vsel %vm248, %v1944, 0
  %v1951 = vsel %vm498, %v1946, 0
  %1953 = vmatpush.bf16.msra.mxu0 0
  %1954 = vmatpush.bf16.msra.mxu0 0
  %1955 = vmatpush.bf16.msra.mxu0 0
  %1956 = vmatpush.bf16.msra.mxu0 0
  %1957 = vmatpush.bf16.msra.mxu0 0
  %1958 = vmatpush.bf16.msra.mxu0 0
  %1959 = vmatpush.bf16.msra.mxu0 0
  %1960 = vmatpush.bf16.msra.mxu0 %v1951
  %1961 = vmatmul.bf16.gmra.mxu0 %v1948
  %v1962 = vpop.f32.mrf.mxu0
  %v1963 = vadd.f32 0.0, %v1962
  %v1964 = vpop.f32.mrf.mxu0
  %v1965 = vadd.f32 0.0, %v1964
  %1966 = vdwg.mxu0
  %v1967 = vadd.f32 %v1767, %v1963
  %v1968 = vadd.f32 %v1768, %v1965
  %s1969 = scalar_lea.vmem %s11, 1
  %v1970 = vld [vmem:[%s1969] sm:$0x1]
  %v1972 = vperm.slane %v1970, 0
  %v1974 = vadd.f32 %v1967, %v1972
  %v1975 = vadd.f32 %v1968, %v1972
  %v1976 = vadd.f32 %v1974, %v1167
  %v1977 = vadd.f32 %v1975, %v1168
  %s1978 = scalar_lea.vmem %s12, 1
  %v1979 = vld [vmem:[%s1978] sm:$0x1]
  %s1980 = scalar_lea.vmem %s13, 1
  %v1981 = vld [vmem:[%s1980] sm:$0x1]
  %v1982 = vsel %vm76, %v1976, 0.0
  %1983 = vadd.xlane.f32.xlu0 %v1982
  %v1984 = vpop.xlane.xlu0 %1983
  %v1985 = vsel %vm76, %v1977, 0.0
  %1986 = vadd.xlane.f32.xlu0 %v1985
  %v1987 = vpop.xlane.xlu0 %1986
  %v1988 = vmul.f32 %v1984, %v89
  %v1989 = vmul.f32 %v1987, %v89
  %v1990 = vsub.f32 %v1976, %v1988
  %v1991 = vsub.f32 %v1977, %v1989
  %v1992 = vmul.f32 %v1990, %v1990
  %v1993 = vmul.f32 %v1991, %v1991
  %v1994 = vsel %vm76, %v1992, 0.0
  %1995 = vadd.xlane.f32.xlu0 %v1994
  %v1996 = vpop.xlane.xlu0 %1995
  %v1997 = vsel %vm76, %v1993, 0.0
  %1998 = vadd.xlane.f32.xlu0 %v1997
  %v1999 = vpop.xlane.xlu0 %1998
  %v2000 = vmul.f32 %v1996, %v89
  %v2001 = vmul.f32 %v1999, %v89
  %v2002 = vadd.f32 %v2000, 1e-12
  %v2003 = vadd.f32 %v2001, 1e-12
  %v2004 = vrsqrt.pop %v2002
  %v2005 = vmul.f32 %v2004, %v2002
  %v2006 = vmul.f32 %v2005, %v2004
  %v2007 = vmul.f32 0.5, %v2006
  %v2008 = vsub.f32 1.5, %v2007
  %v2009 = vmul.f32 %v2004, %v2008
  %vm2010 = vweird.f32 %v2002
  %vm2011 = vweird.f32 %v2004
  %vm2012 = vmor %vm2010, %vm2011
  %v2013 = vsel %vm2012, %v2004, %v2009
  %v2014 = vrsqrt.pop %v2003
  %v2015 = vmul.f32 %v2014, %v2003
  %v2016 = vmul.f32 %v2015, %v2014
  %v2017 = vmul.f32 0.5, %v2016
  %v2018 = vsub.f32 1.5, %v2017
  %v2019 = vmul.f32 %v2014, %v2018
  %vm2020 = vweird.f32 %v2003
  %vm2021 = vweird.f32 %v2014
  %vm2022 = vmor %vm2020, %vm2021
  %v2023 = vsel %vm2022, %v2014, %v2019
  %v2024 = vmul.f32 %v1990, %v2013
  %v2025 = vmul.f32 %v1991, %v2023
  %v2027 = vperm.slane %v1979, 0
  %v2029 = vmul.f32 %v2024, %v2027
  %v2030 = vmul.f32 %v2025, %v2027
  %v2032 = vperm.slane %v1981, 0
  %v2034 = vadd.f32 %v2029, %v2032
  %v2035 = vadd.f32 %v2030, %v2032
  %v2036 = vpack.c.bf16 %v2035, %v2034
  %s2037 = scalar_lea.vmem %s14, 16
  %v2038 = vld [vmem:[%s2037] sm:$0xf]
  %v2039 = vld [vmem:[%s2037 + $0x4] sm:$0xf]
  %v2040 = vld [vmem:[%s2037 + $0x8] sm:$0xf]
  %v2041 = vld [vmem:[%s2037 + $0xc] sm:$0xf]
  %s2042 = scalar_lea.vmem %s15, 1
  %v2043 = vld [vmem:[%s2042] sm:$0x1]
  %v2045 = vperm.slane %v2043, 0
  %v2051 = vunpack.c.l.b16 %v2038
  %v2052 = vunpack.c.l.b16 %v2039
  %v2053 = vunpack.c.l.b16 %v2040
  %v2054 = vunpack.c.l.b16 %v2041
  %v2055 = vpack.c.b16 %v2052, %v2051
  %v2056 = vpack.c.b16 %v2054, %v2053
  %v2060 = vsel %vm76, %v2036, 0
  %2062 = vmatpush.bf16.msra.mxu0 0
  %2063 = vmatpush.bf16.msra.mxu0 0
  %2064 = vmatpush.bf16.msra.mxu0 0
  %2065 = vmatpush.bf16.msra.mxu0 0
  %2066 = vmatpush.bf16.msra.mxu0 0
  %2067 = vmatpush.bf16.msra.mxu0 0
  %2068 = vmatpush.bf16.msra.mxu0 %v2056
  %2069 = vmatpush.bf16.msra.mxu0 %v2055
  %2070 = vmatmul.bf16.gmra.mxu0 %v2060
  %v2071 = vpop.f32.mrf.mxu0
  %v2072 = vadd.f32 %v2045, %v2071
  %v2073 = vpop.f32.mrf.mxu0
  %v2074 = vadd.f32 %v2045, %v2073
  %2075 = vdwg.mxu0
  %v2076 = vmul.f32 %v2072, %v2072
  %v2077 = vmul.f32 %v2074, %v2074
  %v2078 = vmul.f32 %v2072, %v2076
  %v2079 = vmul.f32 %v2074, %v2077
  %v2080 = vmul.f32 %v2078, 0.044715
  %v2081 = vmul.f32 %v2079, 0.044715
  %v2082 = vadd.f32 %v2072, %v2080
  %v2083 = vadd.f32 %v2074, %v2081
  %v2084 = vmul.f32 %v2082, 0.7978846
  %v2085 = vmul.f32 %v2083, 0.7978846
  %v2086 = vtanh.pop %v2084
  %v2087 = vtanh.pop %v2085
  %v2088 = vadd.f32 %v2086, 1.0
  %v2089 = vadd.f32 %v2087, 1.0
  %v2090 = vmul.f32 %v2088, 0.5
  %v2091 = vmul.f32 %v2089, 0.5
  %v2092 = vmul.f32 %v2072, %v2090
  %v2093 = vmul.f32 %v2074, %v2091
  %v2094 = vpack.c.bf16 %v2093, %v2092
  %s2095 = scalar_lea.vmem %s16, 32
  %v2096 = vld [vmem:[%s2095] sm:$0xf]
  %v2097 = vld [vmem:[%s2095 + $0x4] sm:$0xf]
  %v2098 = vld [vmem:[%s2095 + $0x8] sm:$0xf]
  %v2099 = vld [vmem:[%s2095 + $0xc] sm:$0xf]
  %v2100 = vld [vmem:[%s2095 + $0x10] sm:$0xf]
  %v2101 = vld [vmem:[%s2095 + $0x14] sm:$0xf]
  %v2102 = vld [vmem:[%s2095 + $0x18] sm:$0xf]
  %v2103 = vld [vmem:[%s2095 + $0x1c] sm:$0xf]
  %s2104 = scalar_lea.vmem %s17, 1
  %v2105 = vld [vmem:[%s2104] sm:$0x1]
  %v2107 = vperm.slane %v2105, 0
  %v2117 = vunpack.c.l.b16 %v2096
  %v2118 = vunpack.c.l.b16 %v2097
  %v2119 = vunpack.c.l.b16 %v2098
  %v2120 = vunpack.c.l.b16 %v2099
  %v2121 = vunpack.c.l.b16 %v2100
  %v2122 = vunpack.c.l.b16 %v2101
  %v2123 = vunpack.c.l.b16 %v2102
  %v2124 = vunpack.c.l.b16 %v2103
  %v2125 = vpack.c.b16 %v2118, %v2117
  %v2126 = vpack.c.b16 %v2120, %v2119
  %v2127 = vpack.c.b16 %v2122, %v2121
  %v2128 = vpack.c.b16 %v2124, %v2123
  %v2134 = vsel %vm1093, %v2094, 0
  %2136 = vmatpush.bf16.msra.mxu0 0
  %2137 = vmatpush.bf16.msra.mxu0 0
  %2138 = vmatpush.bf16.msra.mxu0 0
  %2139 = vmatpush.bf16.msra.mxu0 0
  %2140 = vmatpush.bf16.msra.mxu0 %v2128
  %2141 = vmatpush.bf16.msra.mxu0 %v2127
  %2142 = vmatpush.bf16.msra.mxu0 %v2126
  %2143 = vmatpush.bf16.msra.mxu0 %v2125
  %2144 = vmatmul.bf16.gmra.mxu0 %v2134
  %v2145 = vpop.f32.mrf.mxu0
  %v2146 = vadd.f32 %v2107, %v2145
  %v2147 = vpop.f32.mrf.mxu0
  %v2148 = vadd.f32 %v2107, %v2147
  %2149 = vdwg.mxu0
  %v2150 = vadd.f32 %v2146, %v2034
  %v2151 = vadd.f32 %v2148, %v2035
  %s2152 = scalar_lea.vmem %s18, 1
  %v2153 = vld [vmem:[%s2152] sm:$0x1]
  %s2154 = scalar_lea.vmem %s19, 1
  %v2155 = vld [vmem:[%s2154] sm:$0x1]
  %v2156 = vsel %vm76, %v2150, 0.0
  %2157 = vadd.xlane.f32.xlu0 %v2156
  %v2158 = vpop.xlane.xlu0 %2157
  %v2159 = vsel %vm76, %v2151, 0.0
  %2160 = vadd.xlane.f32.xlu0 %v2159
  %v2161 = vpop.xlane.xlu0 %2160
  %v2162 = vmul.f32 %v2158, %v89
  %v2163 = vmul.f32 %v2161, %v89
  %v2164 = vsub.f32 %v2150, %v2162
  %v2165 = vsub.f32 %v2151, %v2163
  %v2166 = vmul.f32 %v2164, %v2164
  %v2167 = vmul.f32 %v2165, %v2165
  %v2168 = vsel %vm76, %v2166, 0.0
  %2169 = vadd.xlane.f32.xlu0 %v2168
  %v2170 = vpop.xlane.xlu0 %2169
  %v2171 = vsel %vm76, %v2167, 0.0
  %2172 = vadd.xlane.f32.xlu0 %v2171
  %v2173 = vpop.xlane.xlu0 %2172
  %v2174 = vmul.f32 %v2170, %v89
  %v2175 = vmul.f32 %v2173, %v89
  %v2176 = vadd.f32 %v2174, 1e-12
  %v2177 = vadd.f32 %v2175, 1e-12
  %v2178 = vrsqrt.pop %v2176
  %v2179 = vmul.f32 %v2178, %v2176
  %v2180 = vmul.f32 %v2179, %v2178
  %v2181 = vmul.f32 0.5, %v2180
  %v2182 = vsub.f32 1.5, %v2181
  %v2183 = vmul.f32 %v2178, %v2182
  %vm2184 = vweird.f32 %v2176
  %vm2185 = vweird.f32 %v2178
  %vm2186 = vmor %vm2184, %vm2185
  %v2187 = vsel %vm2186, %v2178, %v2183
  %v2188 = vrsqrt.pop %v2177
  %v2189 = vmul.f32 %v2188, %v2177
  %v2190 = vmul.f32 %v2189, %v2188
  %v2191 = vmul.f32 0.5, %v2190
  %v2192 = vsub.f32 1.5, %v2191
  %v2193 = vmul.f32 %v2188, %v2192
  %vm2194 = vweird.f32 %v2177
  %vm2195 = vweird.f32 %v2188
  %vm2196 = vmor %vm2194, %vm2195
  %v2197 = vsel %vm2196, %v2188, %v2193
  %v2198 = vmul.f32 %v2164, %v2187
  %v2199 = vmul.f32 %v2165, %v2197
  %v2201 = vperm.slane %v2153, 0
  %v2203 = vmul.f32 %v2198, %v2201
  %v2204 = vmul.f32 %v2199, %v2201
  %v2206 = vperm.slane %v2155, 0
  %v2208 = vadd.f32 %v2203, %v2206
  %v2209 = vadd.f32 %v2204, %v2206
  %v2210 = vpack.c.bf16 %v2209, %v2208
  %v2211 = vld [vmem:[%s20] sm:$0xf]
  %v2212 = vld [vmem:[%s20 + $0x4] sm:$0xf]
  %v2213 = vld [vmem:[%s20 + $0x8] sm:$0xf]
  %v2214 = vld [vmem:[%s20 + $0xc] sm:$0xf]
  %v2215 = vld [vmem:[%s21] sm:$0x1]
  %v2217 = vperm.slane %v2215, 0
  %v2223 = vunpack.c.l.b16 %v2211
  %v2224 = vunpack.c.l.b16 %v2212
  %v2225 = vunpack.c.l.b16 %v2213
  %v2226 = vunpack.c.l.b16 %v2214
  %v2227 = vpack.c.b16 %v2224, %v2223
  %v2228 = vpack.c.b16 %v2226, %v2225
  %v2232 = vsel %vm76, %v2210, 0
  %2234 = vmatpush.bf16.msra.mxu0 0
  %2235 = vmatpush.bf16.msra.mxu0 0
  %2236 = vmatpush.bf16.msra.mxu0 0
  %2237 = vmatpush.bf16.msra.mxu0 0
  %2238 = vmatpush.bf16.msra.mxu0 0
  %2239 = vmatpush.bf16.msra.mxu0 0
  %2240 = vmatpush.bf16.msra.mxu0 %v2228
  %2241 = vmatpush.bf16.msra.mxu0 %v2227
  %2242 = vmatmul.bf16.gmra.mxu0 %v2232
  %v2243 = vpop.f32.mrf.mxu0
  %v2244 = vadd.f32 %v2217, %v2243
  %v2245 = vpop.f32.mrf.mxu0
  %v2246 = vadd.f32 %v2217, %v2245
  %2247 = vdwg.mxu0
  %2248 = vst [vmem:[%s22] sm:$0xff] %v2244
  %2249 = vst [vmem:[%s22 + $0x8] sm:$0xff] %v2246
  // Predicated region
  $region90: #{hierarchical_bert_forward.1} parent=0 // pred_check
    _
  $region91: #{hierarchical_bert_forward.1} parent=0 // pred_check_branch
    %2251 = sbr.rel (0) target = $region93
  $region92: #{hierarchical_bert_forward.1} parent=0 // pred_region
    _
  $region93: #{hierarchical_bert_forward.1} parent=0 // pred_fallthru
    _
  // Predicated region
  $region94: #{hierarchical_bert_forward.1} parent=0 // pred_check
    _
  $region95: #{hierarchical_bert_forward.1} parent=0 // pred_check_branch
    %2253 = sbr.rel (0) target = $region97
  $region96: #{hierarchical_bert_forward.1} parent=0 // pred_region
    _
  $region97: #{hierarchical_bert_forward.1} parent=0 // pred_fallthru
    _

</llo_original>
